<compile_context>
chip_gen: v5e
topology: v5e:2x2
jax: 0.10.0
libtpu: 0.0.40
codegen_flags: <defaults>
</compile_context>

<pallas_src>
import functools

import jax
import jax.numpy as jnp
from jax import lax
from jax.experimental import pallas as pl
from jax.experimental.pallas import tpu as pltpu

IN_FEATURES = 2      # (z, t) input to the PINN
N_HIDDEN = 32        # n_hidden_neurons
OUT_FEATURES = 1     # pressure head h
TB = 8192            # batch points per grid step (multiple of SUB)
SUB = 512            # lanes processed per inner-loop chunk (multiple of 128)


def _pressure_head_kernel(xt_ref, p_ref, bp_ref, o_ref):
    """One grid step = TB collocation points, processed in SUB-lane chunks.

    xt_ref: (2, TB//SUB, SUB)  input tile; [0]=z row, [1]=t row
    p_ref : (4, H, SUB)        resident lane-prebroadcast params:
                               [0.5*W1[:,0], 0.5*W1[:,1], 0.5*b1, 0.5*Wp]
    bp_ref: (1, SUB)           resident  bp + 0.5*sum(Wp)
    o_ref : (TB//SUB, SUB)     lane-dense output tile
    """
    n_sub = o_ref.shape[0]   # static chunk count (TB // SUB)

    def chunk(c, carry):
        # Resident lane-dense parameter slabs -> plain vector loads (vld has
        # slack); no per-step lane/sublane broadcasts of (H,1) operands.
        w0 = p_ref[0]                              # (H, SUB)
        w1 = p_ref[1]                              # (H, SUB)
        b1 = p_ref[2]                              # (H, SUB)
        wp = p_ref[3]                              # (H, SUB)
        z = xt_ref[0, pl.ds(c, 1), :]              # (1, SUB)
        t = xt_ref[1, pl.ds(c, 1), :]              # (1, SUB)
        # sigmoid(a) = 0.5*tanh(0.5*a) + 0.5, with every 0.5 folded into the
        # prepared params: 2 FMAs + tanh (EUP) + 1 FMA + sublane reduce per
        # point.  Degenerate K=2 / N=1 matmuls deliberately stay off the MXU.
        pre = w0 * z + w1 * t + b1                 # (H, SUB) on the VPU
        th = jnp.tanh(pre)                         # EUP transcendental
        y = jnp.sum(th * wp, axis=0, keepdims=True) + bp_ref[...]   # (1, SUB)
        o_ref[pl.ds(c, 1), :] = y.astype(o_ref.dtype)
        return carry

    # Unrolled inner loop: each live intermediate is (H, SUB) = 16 vregs,
    # never a whole (H, TB) slab.
    lax.fori_loop(0, n_sub, chunk, 0, unroll=True)


def prepare_params(w1, b1, wp, bp, *, sub=SUB):
    """One-time host-side layout of PyTorch-style params into kernel layout.

    w1: (H, 2) hidden1.weight   b1: (H,) hidden1.bias
    wp: (1, H) predict.weight   bp: (1,) predict.bias

    Returns (pslab, bp_slab):
      pslab   (4, H, sub) f32 : 0.5-scaled [W1[:,0], W1[:,1], b1, Wp], each
                                lane-prebroadcast so the kernel uses them as
                                plain elementwise operands (no broadcasts).
      bp_slab (1, sub)    f32 : bp + 0.5*sum(Wp)   (sigmoid->tanh folding).
    """
    w1 = jnp.asarray(w1, jnp.float32)
    b1 = jnp.asarray(b1, jnp.float32).reshape(-1)
    wp = jnp.asarray(wp, jnp.float32).reshape(-1)
    bp = jnp.asarray(bp, jnp.float32).reshape(())
    n_hidden = w1.shape[0]
    cols = 0.5 * jnp.stack([w1[:, 0], w1[:, 1], b1, wp], axis=0)       # (4, H)
    pslab = jnp.asarray(
        jnp.broadcast_to(cols[:, :, None], (4, n_hidden, sub)), jnp.float32)
    bp_slab = jnp.full((1, sub), bp + 0.5 * jnp.sum(wp), jnp.float32)
    return pslab, bp_slab


@functools.partial(jax.jit, static_argnames=("tb", "core_parallel"))
def pressure_head_forward_t(xt, kernel_params, tb=TB, core_parallel=False):
    """Feature-major fast path.

    xt: (2, N) float32 collocation points (row 0 = z, row 1 = t).  Generating
    and storing points in this layout upstream removes the wrapper transpose
    pass entirely; keep N a multiple of `tb` to also skip the pad copy.

    Returns (N, 1) float32, matching PyTorch PressureHeadNet.forward.
    On v7x pass core_parallel=True so both TensorCores share the batch axis.
    """
    pslab, bp_slab = kernel_params
    _, n_hidden, sub = pslab.shape
    in_f, n = xt.shape
    assert in_f == IN_FEATURES, in_f
    assert tb % sub == 0 and sub % 128 == 0

    xt = xt.astype(jnp.float32)
    n_tiles = pl.cdiv(n, tb)
    n_pad = n_tiles * tb
    if n_pad != n:
        xt = jnp.pad(xt, ((0, 0), (0, n_pad - n)))     # only when N % tb != 0
    # Free row-major reshape: chunk axis second-minor, lanes stay dense.
    xt3 = xt.reshape(IN_FEATURES, n_pad // sub, sub)
    n_sub = tb // sub

    dim_sem = (pltpu.CORE_PARALLEL,) if core_parallel else ("parallel",)

    out2d = pl.pallas_call(
        _pressure_head_kernel,
        out_shape=jax.ShapeDtypeStruct((n_pad // sub, sub), jnp.float32),
        grid_spec=pltpu.PrefetchScalarGridSpec(
            num_scalar_prefetch=0,
            grid=(n_tiles,),
            in_specs=[
                pl.BlockSpec((IN_FEATURES, n_sub, sub), lambda i: (0, i, 0)),
                pl.BlockSpec((4, n_hidden, sub), lambda i: (0, 0, 0)),  # resident
                pl.BlockSpec((1, sub), lambda i: (0, 0)),               # resident
            ],
            out_specs=pl.BlockSpec((n_sub, sub), lambda i: (i, 0)),
        ),
        compiler_params=pltpu.CompilerParams(dimension_semantics=dim_sem),
    )(xt3, pslab, bp_slab)

    # Drop padded tail points, return PyTorch-shaped (N, 1).
    return out2d.reshape(n_pad)[:n].reshape(n, 1)


def pressure_head_forward(x, kernel_params, tb=TB, core_parallel=False):
    """PyTorch-layout convenience entry: x (N, 2) -> (N, 1).

    Does one explicit transpose; prefer pressure_head_forward_t with
    feature-major (2, N) inputs inside the training loop.
    """
    return pressure_head_forward_t(jnp.transpose(jnp.asarray(x)), kernel_params,
                                   tb=tb, core_parallel=core_parallel)


def _xavier_normal(key, fan_out, fan_in):
    # torch.nn.init.xavier_normal_ on a (fan_out, fan_in) weight.
    std = (2.0 / (fan_in + fan_out)) ** 0.5
    return jax.random.normal(key, (fan_out, fan_in), jnp.float32) * std


def init_params(key, n_hidden):
    """PyTorch-layout params: W (out, in), biases 1-D."""
    k1, k2, k3, k4 = jax.random.split(key, 4)
    w1 = _xavier_normal(k1, n_hidden, IN_FEATURES)       # hidden1.weight (H, 2)
    wp = _xavier_normal(k2, OUT_FEATURES, n_hidden)      # predict.weight (1, H)
    # PyTorch Linear default bias init: U(-1/sqrt(fan_in), 1/sqrt(fan_in)).
    b1 = jax.random.uniform(k3, (n_hidden,), jnp.float32,
                            -1.0 / (IN_FEATURES ** 0.5), 1.0 / (IN_FEATURES ** 0.5))
    bp = jax.random.uniform(k4, (OUT_FEATURES,), jnp.float32,
                            -1.0 / (n_hidden ** 0.5), 1.0 / (n_hidden ** 0.5))
    return w1, b1, wp, bp


def reference_forward(x, w1, b1, wp, bp):
    h = jax.nn.sigmoid(jnp.dot(x, w1.T, precision="highest") + b1)
    return jnp.dot(h, wp.T, precision="highest") + bp


if __name__ == "__main__":
    key = jax.random.PRNGKey(0)
    k_params, k_x, k_x2 = jax.random.split(key, 3)

    w1, b1, wp, bp = init_params(k_params, N_HIDDEN)
    kparams = prepare_params(w1, b1, wp, bp)   # one-time layout, outside hot loop

    # Collocation points generated feature-major (2, N): no transpose pass.
    n = 1000                                   # non-multiple of TB -> pad path
    xt = jax.random.normal(k_x, (IN_FEATURES, n), jnp.float32)

    out = jax.block_until_ready(pressure_head_forward_t(xt, kparams))
    ref = reference_forward(xt.T, w1, b1, wp, bp)
    assert out.shape == (n, 1), out.shape
    assert jnp.allclose(out, ref, atol=2e-5, rtol=2e-5), \
        float(jnp.max(jnp.abs(out - ref)))

    # Multi-tile grid path (n > TB), still small.
    n2 = 2 * TB + 37
    xt2 = jax.random.normal(k_x2, (IN_FEATURES, n2), jnp.float32)
    out2 = jax.block_until_ready(pressure_head_forward_t(xt2, kparams))
    ref2 = reference_forward(xt2.T, w1, b1, wp, bp)
    assert out2.shape == (n2, 1), out2.shape
    assert jnp.allclose(out2, ref2, atol=2e-5, rtol=2e-5), \
        float(jnp.max(jnp.abs(out2 - ref2)))

    # PyTorch-layout (N, 2) compatibility entry point.
    out3 = jax.block_until_ready(pressure_head_forward(xt.T, kparams))
    assert jnp.allclose(out3, ref, atol=2e-5, rtol=2e-5)

    print("KERNEL_OK")
</pallas_src>

<mosaic_0001>
module attributes {stable_mosaic.version = 11 : i64} {
  func.func @_pressure_head_kernel(%arg0: i32, %arg1: memref<2x16x512xf32, #tpu.memory_space<vmem>>, %arg2: memref<4x32x512xf32, #tpu.memory_space<vmem>>, %arg3: memref<1x512xf32, #tpu.memory_space<vmem>>, %arg4: memref<16x512xf32, #tpu.memory_space<vmem>>) attributes {dimension_semantics = [#tpu.dimension_semantics<parallel>], iteration_bounds = array<i64: 1>, scalar_prefetch = 0 : i64, scratch_operands = 0 : i64, tpu.core_type = #tpu.core_type<tc>, window_params = [{transform_indices = @transform_0, window_bounds = array<i64: 2, 16, 512>}, {pipeline_mode = #tpu.pipeline_mode<synchronous>, transform_indices = @transform_1, window_bounds = array<i64: 4, 32, 512>}, {pipeline_mode = #tpu.pipeline_mode<synchronous>, transform_indices = @transform_2, window_bounds = array<i64: 1, 512>}, {transform_indices = @transform_3, window_bounds = array<i64: 16, 512>}]} {
    %c0_i32 = arith.constant 0 : i32
    %c0 = arith.constant 0 : index
    %c0_0 = arith.constant 0 : index
    %c0_1 = arith.constant 0 : index
    %0 = vector.load %arg2[%c0, %c0_0, %c0_1] : memref<4x32x512xf32, #tpu.memory_space<vmem>>, vector<1x32x512xf32>
    %1 = vector.shape_cast %0 : vector<1x32x512xf32> to vector<32x512xf32>
    %c1 = arith.constant 1 : index
    %c0_2 = arith.constant 0 : index
    %c0_3 = arith.constant 0 : index
    %2 = vector.load %arg2[%c1, %c0_2, %c0_3] : memref<4x32x512xf32, #tpu.memory_space<vmem>>, vector<1x32x512xf32>
    %3 = vector.shape_cast %2 : vector<1x32x512xf32> to vector<32x512xf32>
    %c2 = arith.constant 2 : index
    %c0_4 = arith.constant 0 : index
    %c0_5 = arith.constant 0 : index
    %4 = vector.load %arg2[%c2, %c0_4, %c0_5] : memref<4x32x512xf32, #tpu.memory_space<vmem>>, vector<1x32x512xf32>
    %5 = vector.shape_cast %4 : vector<1x32x512xf32> to vector<32x512xf32>
    %c3 = arith.constant 3 : index
    %c0_6 = arith.constant 0 : index
    %c0_7 = arith.constant 0 : index
    %6 = vector.load %arg2[%c3, %c0_6, %c0_7] : memref<4x32x512xf32, #tpu.memory_space<vmem>>, vector<1x32x512xf32>
    %7 = vector.shape_cast %6 : vector<1x32x512xf32> to vector<32x512xf32>
    %c0_8 = arith.constant 0 : index
    %8 = arith.index_cast %c0_i32 : i32 to index
    %c0_9 = arith.constant 0 : index
    %9 = vector.load %arg1[%c0_8, %8, %c0_9] : memref<2x16x512xf32, #tpu.memory_space<vmem>>, vector<1x1x512xf32>
    %10 = vector.shape_cast %9 : vector<1x1x512xf32> to vector<1x512xf32>
    %c1_10 = arith.constant 1 : index
    %11 = arith.index_cast %c0_i32 : i32 to index
    %c0_11 = arith.constant 0 : index
    %12 = vector.load %arg1[%c1_10, %11, %c0_11] : memref<2x16x512xf32, #tpu.memory_space<vmem>>, vector<1x1x512xf32>
    %13 = vector.shape_cast %12 : vector<1x1x512xf32> to vector<1x512xf32>
    %14 = vector.broadcast %10 : vector<1x512xf32> to vector<32x512xf32>
    %15 = arith.mulf %1, %14 : vector<32x512xf32>
    %16 = vector.broadcast %13 : vector<1x512xf32> to vector<32x512xf32>
    %17 = arith.mulf %3, %16 : vector<32x512xf32>
    %18 = arith.addf %15, %17 : vector<32x512xf32>
    %19 = arith.addf %18, %5 : vector<32x512xf32>
    %20 = math.tanh %19 : vector<32x512xf32>
    %21 = arith.mulf %20, %7 : vector<32x512xf32>
    %cst = arith.constant dense<0.000000e+00> : vector<512xf32>
    %22 = vector.multi_reduction <add>, %21, %cst [0] : vector<32x512xf32> to vector<512xf32>
    %23 = vector.shape_cast %22 : vector<512xf32> to vector<1x512xf32>
    %c0_12 = arith.constant 0 : index
    %c0_13 = arith.constant 0 : index
    %24 = vector.load %arg3[%c0_12, %c0_13] : memref<1x512xf32, #tpu.memory_space<vmem>>, vector<1x512xf32>
    %25 = arith.addf %23, %24 : vector<1x512xf32>
    %26 = arith.index_cast %c0_i32 : i32 to index
    %c0_14 = arith.constant 0 : index
    %27 = vector.load %arg4[%26, %c0_14] : memref<16x512xf32, #tpu.memory_space<vmem>>, vector<1x512xf32>
    tpu.vector_store %arg4[%26, %c0_14], %25 {strides = array<i32>} : memref<16x512xf32, #tpu.memory_space<vmem>>, vector<1x512xf32>,
    %c1_i32 = arith.constant 1 : i32
    %c0_15 = arith.constant 0 : index
    %c0_16 = arith.constant 0 : index
    %c0_17 = arith.constant 0 : index
    %28 = vector.load %arg2[%c0_15, %c0_16, %c0_17] : memref<4x32x512xf32, #tpu.memory_space<vmem>>, vector<1x32x512xf32>
    %29 = vector.shape_cast %28 : vector<1x32x512xf32> to vector<32x512xf32>
    %c1_18 = arith.constant 1 : index
    %c0_19 = arith.constant 0 : index
    %c0_20 = arith.constant 0 : index
    %30 = vector.load %arg2[%c1_18, %c0_19, %c0_20] : memref<4x32x512xf32, #tpu.memory_space<vmem>>, vector<1x32x512xf32>
    %31 = vector.shape_cast %30 : vector<1x32x512xf32> to vector<32x512xf32>
    %c2_21 = arith.constant 2 : index
    %c0_22 = arith.constant 0 : index
    %c0_23 = arith.constant 0 : index
    %32 = vector.load %arg2[%c2_21, %c0_22, %c0_23] : memref<4x32x512xf32, #tpu.memory_space<vmem>>, vector<1x32x512xf32>
    %33 = vector.shape_cast %32 : vector<1x32x512xf32> to vector<32x512xf32>
    %c3_24 = arith.constant 3 : index
    %c0_25 = arith.constant 0 : index
    %c0_26 = arith.constant 0 : index
    %34 = vector.load %arg2[%c3_24, %c0_25, %c0_26] : memref<4x32x512xf32, #tpu.memory_space<vmem>>, vector<1x32x512xf32>
    %35 = vector.shape_cast %34 : vector<1x32x512xf32> to vector<32x512xf32>
    %c0_27 = arith.constant 0 : index
    %36 = arith.index_cast %c1_i32 : i32 to index
    %c0_28 = arith.constant 0 : index
    %37 = vector.load %arg1[%c0_27, %36, %c0_28] : memref<2x16x512xf32, #tpu.memory_space<vmem>>, vector<1x1x512xf32>
    %38 = vector.shape_cast %37 : vector<1x1x512xf32> to vector<1x512xf32>
    %c1_29 = arith.constant 1 : index
    %39 = arith.index_cast %c1_i32 : i32 to index
    %c0_30 = arith.constant 0 : index
    %40 = vector.load %arg1[%c1_29, %39, %c0_30] : memref<2x16x512xf32, #tpu.memory_space<vmem>>, vector<1x1x512xf32>
    %41 = vector.shape_cast %40 : vector<1x1x512xf32> to vector<1x512xf32>
    %42 = vector.broadcast %38 : vector<1x512xf32> to vector<32x512xf32>
    %43 = arith.mulf %29, %42 : vector<32x512xf32>
    %44 = vector.broadcast %41 : vector<1x512xf32> to vector<32x512xf32>
    %45 = arith.mulf %31, %44 : vector<32x512xf32>
    %46 = arith.addf %43, %45 : vector<32x512xf32>
    %47 = arith.addf %46, %33 : vector<32x512xf32>
    %48 = math.tanh %47 : vector<32x512xf32>
    %49 = arith.mulf %48, %35 : vector<32x512xf32>
    %cst_31 = arith.constant dense<0.000000e+00> : vector<512xf32>
    %50 = vector.multi_reduction <add>, %49, %cst_31 [0] : vector<32x512xf32> to vector<512xf32>
    %51 = vector.shape_cast %50 : vector<512xf32> to vector<1x512xf32>
    %c0_32 = arith.constant 0 : index
    %c0_33 = arith.constant 0 : index
    %52 = vector.load %arg3[%c0_32, %c0_33] : memref<1x512xf32, #tpu.memory_space<vmem>>, vector<1x512xf32>
    %53 = arith.addf %51, %52 : vector<1x512xf32>
    %54 = arith.index_cast %c1_i32 : i32 to index
    %c0_34 = arith.constant 0 : index
    %55 = vector.load %arg4[%54, %c0_34] : memref<16x512xf32, #tpu.memory_space<vmem>>, vector<1x512xf32>
    tpu.vector_store %arg4[%54, %c0_34], %53 {strides = array<i32>} : memref<16x512xf32, #tpu.memory_space<vmem>>, vector<1x512xf32>,
    %c2_i32 = arith.constant 2 : i32
    %c0_35 = arith.constant 0 : index
    %c0_36 = arith.constant 0 : index
    %c0_37 = arith.constant 0 : index
    %56 = vector.load %arg2[%c0_35, %c0_36, %c0_37] : memref<4x32x512xf32, #tpu.memory_space<vmem>>, vector<1x32x512xf32>
    %57 = vector.shape_cast %56 : vector<1x32x512xf32> to vector<32x512xf32>
    %c1_38 = arith.constant 1 : index
    %c0_39 = arith.constant 0 : index
    %c0_40 = arith.constant 0 : index
    %58 = vector.load %arg2[%c1_38, %c0_39, %c0_40] : memref<4x32x512xf32, #tpu.memory_space<vmem>>, vector<1x32x512xf32>
    %59 = vector.shape_cast %58 : vector<1x32x512xf32> to vector<32x512xf32>
    %c2_41 = arith.constant 2 : index
    %c0_42 = arith.constant 0 : index
    %c0_43 = arith.constant 0 : index
    %60 = vector.load %arg2[%c2_41, %c0_42, %c0_43] : memref<4x32x512xf32, #tpu.memory_space<vmem>>, vector<1x32x512xf32>
    %61 = vector.shape_cast %60 : vector<1x32x512xf32> to vector<32x512xf32>
    %c3_44 = arith.constant 3 : index
    %c0_45 = arith.constant 0 : index
    %c0_46 = arith.constant 0 : index
    %62 = vector.load %arg2[%c3_44, %c0_45, %c0_46] : memref<4x32x512xf32, #tpu.memory_space<vmem>>, vector<1x32x512xf32>
    %63 = vector.shape_cast %62 : vector<1x32x512xf32> to vector<32x512xf32>
    %c0_47 = arith.constant 0 : index
    %64 = arith.index_cast %c2_i32 : i32 to index
    %c0_48 = arith.constant 0 : index
    %65 = vector.load %arg1[%c0_47, %64, %c0_48] : memref<2x16x512xf32, #tpu.memory_space<vmem>>, vector<1x1x512xf32>
    %66 = vector.shape_cast %65 : vector<1x1x512xf32> to vector<1x512xf32>
    %c1_49 = arith.constant 1 : index
    %67 = arith.index_cast %c2_i32 : i32 to index
    %c0_50 = arith.constant 0 : index
    %68 = vector.load %arg1[%c1_49, %67, %c0_50] : memref<2x16x512xf32, #tpu.memory_space<vmem>>, vector<1x1x512xf32>
    %69 = vector.shape_cast %68 : vector<1x1x512xf32> to vector<1x512xf32>
    %70 = vector.broadcast %66 : vector<1x512xf32> to vector<32x512xf32>
    %71 = arith.mulf %57, %70 : vector<32x512xf32>
    %72 = vector.broadcast %69 : vector<1x512xf32> to vector<32x512xf32>
    %73 = arith.mulf %59, %72 : vector<32x512xf32>
    %74 = arith.addf %71, %73 : vector<32x512xf32>
    %75 = arith.addf %74, %61 : vector<32x512xf32>
    %76 = math.tanh %75 : vector<32x512xf32>
    %77 = arith.mulf %76, %63 : vector<32x512xf32>
    %cst_51 = arith.constant dense<0.000000e+00> : vector<512xf32>
    %78 = vector.multi_reduction <add>, %77, %cst_51 [0] : vector<32x512xf32> to vector<512xf32>
    %79 = vector.shape_cast %78 : vector<512xf32> to vector<1x512xf32>
    %c0_52 = arith.constant 0 : index
    %c0_53 = arith.constant 0 : index
    %80 = vector.load %arg3[%c0_52, %c0_53] : memref<1x512xf32, #tpu.memory_space<vmem>>, vector<1x512xf32>
    %81 = arith.addf %79, %80 : vector<1x512xf32>
    %82 = arith.index_cast %c2_i32 : i32 to index
    %c0_54 = arith.constant 0 : index
    %83 = vector.load %arg4[%82, %c0_54] : memref<16x512xf32, #tpu.memory_space<vmem>>, vector<1x512xf32>
    tpu.vector_store %arg4[%82, %c0_54], %81 {strides = array<i32>} : memref<16x512xf32, #tpu.memory_space<vmem>>, vector<1x512xf32>,
    %c3_i32 = arith.constant 3 : i32
    %c0_55 = arith.constant 0 : index
    %c0_56 = arith.constant 0 : index
    %c0_57 = arith.constant 0 : index
    %84 = vector.load %arg2[%c0_55, %c0_56, %c0_57] : memref<4x32x512xf32, #tpu.memory_space<vmem>>, vector<1x32x512xf32>
    %85 = vector.shape_cast %84 : vector<1x32x512xf32> to vector<32x512xf32>
    %c1_58 = arith.constant 1 : index
    %c0_59 = arith.constant 0 : index
    %c0_60 = arith.constant 0 : index
    %86 = vector.load %arg2[%c1_58, %c0_59, %c0_60] : memref<4x32x512xf32, #tpu.memory_space<vmem>>, vector<1x32x512xf32>
    %87 = vector.shape_cast %86 : vector<1x32x512xf32> to vector<32x512xf32>
    %c2_61 = arith.constant 2 : index
    %c0_62 = arith.constant 0 : index
    %c0_63 = arith.constant 0 : index
    %88 = vector.load %arg2[%c2_61, %c0_62, %c0_63] : memref<4x32x512xf32, #tpu.memory_space<vmem>>, vector<1x32x512xf32>
    %89 = vector.shape_cast %88 : vector<1x32x512xf32> to vector<32x512xf32>
    %c3_64 = arith.constant 3 : index
    %c0_65 = arith.constant 0 : index
    %c0_66 = arith.constant 0 : index
    %90 = vector.load %arg2[%c3_64, %c0_65, %c0_66] : memref<4x32x512xf32, #tpu.memory_space<vmem>>, vector<1x32x512xf32>
    %91 = vector.shape_cast %90 : vector<1x32x512xf32> to vector<32x512xf32>
    %c0_67 = arith.constant 0 : index
    %92 = arith.index_cast %c3_i32 : i32 to index
    %c0_68 = arith.constant 0 : index
    %93 = vector.load %arg1[%c0_67, %92, %c0_68] : memref<2x16x512xf32, #tpu.memory_space<vmem>>, vector<1x1x512xf32>
    %94 = vector.shape_cast %93 : vector<1x1x512xf32> to vector<1x512xf32>
    %c1_69 = arith.constant 1 : index
    %95 = arith.index_cast %c3_i32 : i32 to index
    %c0_70 = arith.constant 0 : index
    %96 = vector.load %arg1[%c1_69, %95, %c0_70] : memref<2x16x512xf32, #tpu.memory_space<vmem>>, vector<1x1x512xf32>
    %97 = vector.shape_cast %96 : vector<1x1x512xf32> to vector<1x512xf32>
    %98 = vector.broadcast %94 : vector<1x512xf32> to vector<32x512xf32>
    %99 = arith.mulf %85, %98 : vector<32x512xf32>
    %100 = vector.broadcast %97 : vector<1x512xf32> to vector<32x512xf32>
    %101 = arith.mulf %87, %100 : vector<32x512xf32>
    %102 = arith.addf %99, %101 : vector<32x512xf32>
    %103 = arith.addf %102, %89 : vector<32x512xf32>
    %104 = math.tanh %103 : vector<32x512xf32>
    %105 = arith.mulf %104, %91 : vector<32x512xf32>
    %cst_71 = arith.constant dense<0.000000e+00> : vector<512xf32>
    %106 = vector.multi_reduction <add>, %105, %cst_71 [0] : vector<32x512xf32> to vector<512xf32>
    %107 = vector.shape_cast %106 : vector<512xf32> to vector<1x512xf32>
    %c0_72 = arith.constant 0 : index
    %c0_73 = arith.constant 0 : index
    %108 = vector.load %arg3[%c0_72, %c0_73] : memref<1x512xf32, #tpu.memory_space<vmem>>, vector<1x512xf32>
    %109 = arith.addf %107, %108 : vector<1x512xf32>
    %110 = arith.index_cast %c3_i32 : i32 to index
    %c0_74 = arith.constant 0 : index
    %111 = vector.load %arg4[%110, %c0_74] : memref<16x512xf32, #tpu.memory_space<vmem>>, vector<1x512xf32>
    tpu.vector_store %arg4[%110, %c0_74], %109 {strides = array<i32>} : memref<16x512xf32, #tpu.memory_space<vmem>>, vector<1x512xf32>,
    %c4_i32 = arith.constant 4 : i32
    %c0_75 = arith.constant 0 : index
    %c0_76 = arith.constant 0 : index
    %c0_77 = arith.constant 0 : index
    %112 = vector.load %arg2[%c0_75, %c0_76, %c0_77] : memref<4x32x512xf32, #tpu.memory_space<vmem>>, vector<1x32x512xf32>
    %113 = vector.shape_cast %112 : vector<1x32x512xf32> to vector<32x512xf32>
    %c1_78 = arith.constant 1 : index
    %c0_79 = arith.constant 0 : index
    %c0_80 = arith.constant 0 : index
    %114 = vector.load %arg2[%c1_78, %c0_79, %c0_80] : memref<4x32x512xf32, #tpu.memory_space<vmem>>, vector<1x32x512xf32>
    %115 = vector.shape_cast %114 : vector<1x32x512xf32> to vector<32x512xf32>
    %c2_81 = arith.constant 2 : index
    %c0_82 = arith.constant 0 : index
    %c0_83 = arith.constant 0 : index
    %116 = vector.load %arg2[%c2_81, %c0_82, %c0_83] : memref<4x32x512xf32, #tpu.memory_space<vmem>>, vector<1x32x512xf32>
    %117 = vector.shape_cast %116 : vector<1x32x512xf32> to vector<32x512xf32>
    %c3_84 = arith.constant 3 : index
    %c0_85 = arith.constant 0 : index
    %c0_86 = arith.constant 0 : index
    %118 = vector.load %arg2[%c3_84, %c0_85, %c0_86] : memref<4x32x512xf32, #tpu.memory_space<vmem>>, vector<1x32x512xf32>
    %119 = vector.shape_cast %118 : vector<1x32x512xf32> to vector<32x512xf32>
    %c0_87 = arith.constant 0 : index
    %120 = arith.index_cast %c4_i32 : i32 to index
    %c0_88 = arith.constant 0 : index
    %121 = vector.load %arg1[%c0_87, %120, %c0_88] : memref<2x16x512xf32, #tpu.memory_space<vmem>>, vector<1x1x512xf32>
    %122 = vector.shape_cast %121 : vector<1x1x512xf32> to vector<1x512xf32>
    %c1_89 = arith.constant 1 : index
    %123 = arith.index_cast %c4_i32 : i32 to index
    %c0_90 = arith.constant 0 : index
    %124 = vector.load %arg1[%c1_89, %123, %c0_90] : memref<2x16x512xf32, #tpu.memory_space<vmem>>, vector<1x1x512xf32>
    %125 = vector.shape_cast %124 : vector<1x1x512xf32> to vector<1x512xf32>
    %126 = vector.broadcast %122 : vector<1x512xf32> to vector<32x512xf32>
    %127 = arith.mulf %113, %126 : vector<32x512xf32>
    %128 = vector.broadcast %125 : vector<1x512xf32> to vector<32x512xf32>
    %129 = arith.mulf %115, %128 : vector<32x512xf32>
    %130 = arith.addf %127, %129 : vector<32x512xf32>
    %131 = arith.addf %130, %117 : vector<32x512xf32>
    %132 = math.tanh %131 : vector<32x512xf32>
    %133 = arith.mulf %132, %119 : vector<32x512xf32>
    %cst_91 = arith.constant dense<0.000000e+00> : vector<512xf32>
    %134 = vector.multi_reduction <add>, %133, %cst_91 [0] : vector<32x512xf32> to vector<512xf32>
    %135 = vector.shape_cast %134 : vector<512xf32> to vector<1x512xf32>
    %c0_92 = arith.constant 0 : index
    %c0_93 = arith.constant 0 : index
    %136 = vector.load %arg3[%c0_92, %c0_93] : memref<1x512xf32, #tpu.memory_space<vmem>>, vector<1x512xf32>
    %137 = arith.addf %135, %136 : vector<1x512xf32>
    %138 = arith.index_cast %c4_i32 : i32 to index
    %c0_94 = arith.constant 0 : index
    %139 = vector.load %arg4[%138, %c0_94] : memref<16x512xf32, #tpu.memory_space<vmem>>, vector<1x512xf32>
    tpu.vector_store %arg4[%138, %c0_94], %137 {strides = array<i32>} : memref<16x512xf32, #tpu.memory_space<vmem>>, vector<1x512xf32>,
    %c5_i32 = arith.constant 5 : i32
    %c0_95 = arith.constant 0 : index
    %c0_96 = arith.constant 0 : index
    %c0_97 = arith.constant 0 : index
    %140 = vector.load %arg2[%c0_95, %c0_96, %c0_97] : memref<4x32x512xf32, #tpu.memory_space<vmem>>, vector<1x32x512xf32>
    %141 = vector.shape_cast %140 : vector<1x32x512xf32> to vector<32x512xf32>
    %c1_98 = arith.constant 1 : index
    %c0_99 = arith.constant 0 : index
    %c0_100 = arith.constant 0 : index
    %142 = vector.load %arg2[%c1_98, %c0_99, %c0_100] : memref<4x32x512xf32, #tpu.memory_space<vmem>>, vector<1x32x512xf32>
    %143 = vector.shape_cast %142 : vector<1x32x512xf32> to vector<32x512xf32>
    %c2_101 = arith.constant 2 : index
    %c0_102 = arith.constant 0 : index
    %c0_103 = arith.constant 0 : index
    %144 = vector.load %arg2[%c2_101, %c0_102, %c0_103] : memref<4x32x512xf32, #tpu.memory_space<vmem>>, vector<1x32x512xf32>
    %145 = vector.shape_cast %144 : vector<1x32x512xf32> to vector<32x512xf32>
    %c3_104 = arith.constant 3 : index
    %c0_105 = arith.constant 0 : index
    %c0_106 = arith.constant 0 : index
    %146 = vector.load %arg2[%c3_104, %c0_105, %c0_106] : memref<4x32x512xf32, #tpu.memory_space<vmem>>, vector<1x32x512xf32>
    %147 = vector.shape_cast %146 : vector<1x32x512xf32> to vector<32x512xf32>
    %c0_107 = arith.constant 0 : index
    %148 = arith.index_cast %c5_i32 : i32 to index
    %c0_108 = arith.constant 0 : index
    %149 = vector.load %arg1[%c0_107, %148, %c0_108] : memref<2x16x512xf32, #tpu.memory_space<vmem>>, vector<1x1x512xf32>
    %150 = vector.shape_cast %149 : vector<1x1x512xf32> to vector<1x512xf32>
    %c1_109 = arith.constant 1 : index
    %151 = arith.index_cast %c5_i32 : i32 to index
    %c0_110 = arith.constant 0 : index
    %152 = vector.load %arg1[%c1_109, %151, %c0_110] : memref<2x16x512xf32, #tpu.memory_space<vmem>>, vector<1x1x512xf32>
    %153 = vector.shape_cast %152 : vector<1x1x512xf32> to vector<1x512xf32>
    %154 = vector.broadcast %150 : vector<1x512xf32> to vector<32x512xf32>
    %155 = arith.mulf %141, %154 : vector<32x512xf32>
    %156 = vector.broadcast %153 : vector<1x512xf32> to vector<32x512xf32>
    %157 = arith.mulf %143, %156 : vector<32x512xf32>
    %158 = arith.addf %155, %157 : vector<32x512xf32>
    %159 = arith.addf %158, %145 : vector<32x512xf32>
    %160 = math.tanh %159 : vector<32x512xf32>
    %161 = arith.mulf %160, %147 : vector<32x512xf32>
    %cst_111 = arith.constant dense<0.000000e+00> : vector<512xf32>
    %162 = vector.multi_reduction <add>, %161, %cst_111 [0] : vector<32x512xf32> to vector<512xf32>
    %163 = vector.shape_cast %162 : vector<512xf32> to vector<1x512xf32>
    %c0_112 = arith.constant 0 : index
    %c0_113 = arith.constant 0 : index
    %164 = vector.load %arg3[%c0_112, %c0_113] : memref<1x512xf32, #tpu.memory_space<vmem>>, vector<1x512xf32>
    %165 = arith.addf %163, %164 : vector<1x512xf32>
    %166 = arith.index_cast %c5_i32 : i32 to index
    %c0_114 = arith.constant 0 : index
    %167 = vector.load %arg4[%166, %c0_114] : memref<16x512xf32, #tpu.memory_space<vmem>>, vector<1x512xf32>
    tpu.vector_store %arg4[%166, %c0_114], %165 {strides = array<i32>} : memref<16x512xf32, #tpu.memory_space<vmem>>, vector<1x512xf32>,
    %c6_i32 = arith.constant 6 : i32
    %c0_115 = arith.constant 0 : index
    %c0_116 = arith.constant 0 : index
    %c0_117 = arith.constant 0 : index
    %168 = vector.load %arg2[%c0_115, %c0_116, %c0_117] : memref<4x32x512xf32, #tpu.memory_space<vmem>>, vector<1x32x512xf32>
    %169 = vector.shape_cast %168 : vector<1x32x512xf32> to vector<32x512xf32>
    %c1_118 = arith.constant 1 : index
    %c0_119 = arith.constant 0 : index
    %c0_120 = arith.constant 0 : index
    %170 = vector.load %arg2[%c1_118, %c0_119, %c0_120] : memref<4x32x512xf32, #tpu.memory_space<vmem>>, vector<1x32x512xf32>
    %171 = vector.shape_cast %170 : vector<1x32x512xf32> to vector<32x512xf32>
    %c2_121 = arith.constant 2 : index
    %c0_122 = arith.constant 0 : index
    %c0_123 = arith.constant 0 : index
    %172 = vector.load %arg2[%c2_121, %c0_122, %c0_123] : memref<4x32x512xf32, #tpu.memory_space<vmem>>, vector<1x32x512xf32>
    %173 = vector.shape_cast %172 : vector<1x32x512xf32> to vector<32x512xf32>
    %c3_124 = arith.constant 3 : index
    %c0_125 = arith.constant 0 : index
    %c0_126 = arith.constant 0 : index
    %174 = vector.load %arg2[%c3_124, %c0_125, %c0_126] : memref<4x32x512xf32, #tpu.memory_space<vmem>>, vector<1x32x512xf32>
    %175 = vector.shape_cast %174 : vector<1x32x512xf32> to vector<32x512xf32>
    %c0_127 = arith.constant 0 : index
    %176 = arith.index_cast %c6_i32 : i32 to index
    %c0_128 = arith.constant 0 : index
    %177 = vector.load %arg1[%c0_127, %176, %c0_128] : memref<2x16x512xf32, #tpu.memory_space<vmem>>, vector<1x1x512xf32>
    %178 = vector.shape_cast %177 : vector<1x1x512xf32> to vector<1x512xf32>
    %c1_129 = arith.constant 1 : index
    %179 = arith.index_cast %c6_i32 : i32 to index
    %c0_130 = arith.constant 0 : index
    %180 = vector.load %arg1[%c1_129, %179, %c0_130] : memref<2x16x512xf32, #tpu.memory_space<vmem>>, vector<1x1x512xf32>
    %181 = vector.shape_cast %180 : vector<1x1x512xf32> to vector<1x512xf32>
    %182 = vector.broadcast %178 : vector<1x512xf32> to vector<32x512xf32>
    %183 = arith.mulf %169, %182 : vector<32x512xf32>
    %184 = vector.broadcast %181 : vector<1x512xf32> to vector<32x512xf32>
    %185 = arith.mulf %171, %184 : vector<32x512xf32>
    %186 = arith.addf %183, %185 : vector<32x512xf32>
    %187 = arith.addf %186, %173 : vector<32x512xf32>
    %188 = math.tanh %187 : vector<32x512xf32>
    %189 = arith.mulf %188, %175 : vector<32x512xf32>
    %cst_131 = arith.constant dense<0.000000e+00> : vector<512xf32>
    %190 = vector.multi_reduction <add>, %189, %cst_131 [0] : vector<32x512xf32> to vector<512xf32>
    %191 = vector.shape_cast %190 : vector<512xf32> to vector<1x512xf32>
    %c0_132 = arith.constant 0 : index
    %c0_133 = arith.constant 0 : index
    %192 = vector.load %arg3[%c0_132, %c0_133] : memref<1x512xf32, #tpu.memory_space<vmem>>, vector<1x512xf32>
    %193 = arith.addf %191, %192 : vector<1x512xf32>
    %194 = arith.index_cast %c6_i32 : i32 to index
    %c0_134 = arith.constant 0 : index
    %195 = vector.load %arg4[%194, %c0_134] : memref<16x512xf32, #tpu.memory_space<vmem>>, vector<1x512xf32>
    tpu.vector_store %arg4[%194, %c0_134], %193 {strides = array<i32>} : memref<16x512xf32, #tpu.memory_space<vmem>>, vector<1x512xf32>,
    %c7_i32 = arith.constant 7 : i32
    %c0_135 = arith.constant 0 : index
    %c0_136 = arith.constant 0 : index
    %c0_137 = arith.constant 0 : index
    %196 = vector.load %arg2[%c0_135, %c0_136, %c0_137] : memref<4x32x512xf32, #tpu.memory_space<vmem>>, vector<1x32x512xf32>
    %197 = vector.shape_cast %196 : vector<1x32x512xf32> to vector<32x512xf32>
    %c1_138 = arith.constant 1 : index
    %c0_139 = arith.constant 0 : index
    %c0_140 = arith.constant 0 : index
    %198 = vector.load %arg2[%c1_138, %c0_139, %c0_140] : memref<4x32x512xf32, #tpu.memory_space<vmem>>, vector<1x32x512xf32>
    %199 = vector.shape_cast %198 : vector<1x32x512xf32> to vector<32x512xf32>
    %c2_141 = arith.constant 2 : index
    %c0_142 = arith.constant 0 : index
    %c0_143 = arith.constant 0 : index
    %200 = vector.load %arg2[%c2_141, %c0_142, %c0_143] : memref<4x32x512xf32, #tpu.memory_space<vmem>>, vector<1x32x512xf32>
    %201 = vector.shape_cast %200 : vector<1x32x512xf32> to vector<32x512xf32>
    %c3_144 = arith.constant 3 : index
    %c0_145 = arith.constant 0 : index
    %c0_146 = arith.constant 0 : index
    %202 = vector.load %arg2[%c3_144, %c0_145, %c0_146] : memref<4x32x512xf32, #tpu.memory_space<vmem>>, vector<1x32x512xf32>
    %203 = vector.shape_cast %202 : vector<1x32x512xf32> to vector<32x512xf32>
    %c0_147 = arith.constant 0 : index
    %204 = arith.index_cast %c7_i32 : i32 to index
    %c0_148 = arith.constant 0 : index
    %205 = vector.load %arg1[%c0_147, %204, %c0_148] : memref<2x16x512xf32, #tpu.memory_space<vmem>>, vector<1x1x512xf32>
    %206 = vector.shape_cast %205 : vector<1x1x512xf32> to vector<1x512xf32>
    %c1_149 = arith.constant 1 : index
    %207 = arith.index_cast %c7_i32 : i32 to index
    %c0_150 = arith.constant 0 : index
    %208 = vector.load %arg1[%c1_149, %207, %c0_150] : memref<2x16x512xf32, #tpu.memory_space<vmem>>, vector<1x1x512xf32>
    %209 = vector.shape_cast %208 : vector<1x1x512xf32> to vector<1x512xf32>
    %210 = vector.broadcast %206 : vector<1x512xf32> to vector<32x512xf32>
    %211 = arith.mulf %197, %210 : vector<32x512xf32>
    %212 = vector.broadcast %209 : vector<1x512xf32> to vector<32x512xf32>
    %213 = arith.mulf %199, %212 : vector<32x512xf32>
    %214 = arith.addf %211, %213 : vector<32x512xf32>
    %215 = arith.addf %214, %201 : vector<32x512xf32>
    %216 = math.tanh %215 : vector<32x512xf32>
    %217 = arith.mulf %216, %203 : vector<32x512xf32>
    %cst_151 = arith.constant dense<0.000000e+00> : vector<512xf32>
    %218 = vector.multi_reduction <add>, %217, %cst_151 [0] : vector<32x512xf32> to vector<512xf32>
    %219 = vector.shape_cast %218 : vector<512xf32> to vector<1x512xf32>
    %c0_152 = arith.constant 0 : index
    %c0_153 = arith.constant 0 : index
    %220 = vector.load %arg3[%c0_152, %c0_153] : memref<1x512xf32, #tpu.memory_space<vmem>>, vector<1x512xf32>
    %221 = arith.addf %219, %220 : vector<1x512xf32>
    %222 = arith.index_cast %c7_i32 : i32 to index
    %c0_154 = arith.constant 0 : index
    %223 = vector.load %arg4[%222, %c0_154] : memref<16x512xf32, #tpu.memory_space<vmem>>, vector<1x512xf32>
    tpu.vector_store %arg4[%222, %c0_154], %221 {strides = array<i32>} : memref<16x512xf32, #tpu.memory_space<vmem>>, vector<1x512xf32>,
    %c8_i32 = arith.constant 8 : i32
    %c0_155 = arith.constant 0 : index
    %c0_156 = arith.constant 0 : index
    %c0_157 = arith.constant 0 : index
    %224 = vector.load %arg2[%c0_155, %c0_156, %c0_157] : memref<4x32x512xf32, #tpu.memory_space<vmem>>, vector<1x32x512xf32>
    %225 = vector.shape_cast %224 : vector<1x32x512xf32> to vector<32x512xf32>
    %c1_158 = arith.constant 1 : index
    %c0_159 = arith.constant 0 : index
    %c0_160 = arith.constant 0 : index
    %226 = vector.load %arg2[%c1_158, %c0_159, %c0_160] : memref<4x32x512xf32, #tpu.memory_space<vmem>>, vector<1x32x512xf32>
    %227 = vector.shape_cast %226 : vector<1x32x512xf32> to vector<32x512xf32>
    %c2_161 = arith.constant 2 : index
    %c0_162 = arith.constant 0 : index
    %c0_163 = arith.constant 0 : index
    %228 = vector.load %arg2[%c2_161, %c0_162, %c0_163] : memref<4x32x512xf32, #tpu.memory_space<vmem>>, vector<1x32x512xf32>
    %229 = vector.shape_cast %228 : vector<1x32x512xf32> to vector<32x512xf32>
    %c3_164 = arith.constant 3 : index
    %c0_165 = arith.constant 0 : index
    %c0_166 = arith.constant 0 : index
    %230 = vector.load %arg2[%c3_164, %c0_165, %c0_166] : memref<4x32x512xf32, #tpu.memory_space<vmem>>, vector<1x32x512xf32>
    %231 = vector.shape_cast %230 : vector<1x32x512xf32> to vector<32x512xf32>
    %c0_167 = arith.constant 0 : index
    %232 = arith.index_cast %c8_i32 : i32 to index
    %c0_168 = arith.constant 0 : index
    %233 = vector.load %arg1[%c0_167, %232, %c0_168] : memref<2x16x512xf32, #tpu.memory_space<vmem>>, vector<1x1x512xf32>
    %234 = vector.shape_cast %233 : vector<1x1x512xf32> to vector<1x512xf32>
    %c1_169 = arith.constant 1 : index
    %235 = arith.index_cast %c8_i32 : i32 to index
    %c0_170 = arith.constant 0 : index
    %236 = vector.load %arg1[%c1_169, %235, %c0_170] : memref<2x16x512xf32, #tpu.memory_space<vmem>>, vector<1x1x512xf32>
    %237 = vector.shape_cast %236 : vector<1x1x512xf32> to vector<1x512xf32>
    %238 = vector.broadcast %234 : vector<1x512xf32> to vector<32x512xf32>
    %239 = arith.mulf %225, %238 : vector<32x512xf32>
    %240 = vector.broadcast %237 : vector<1x512xf32> to vector<32x512xf32>
    %241 = arith.mulf %227, %240 : vector<32x512xf32>
    %242 = arith.addf %239, %241 : vector<32x512xf32>
    %243 = arith.addf %242, %229 : vector<32x512xf32>
    %244 = math.tanh %243 : vector<32x512xf32>
    %245 = arith.mulf %244, %231 : vector<32x512xf32>
    %cst_171 = arith.constant dense<0.000000e+00> : vector<512xf32>
    %246 = vector.multi_reduction <add>, %245, %cst_171 [0] : vector<32x512xf32> to vector<512xf32>
    %247 = vector.shape_cast %246 : vector<512xf32> to vector<1x512xf32>
    %c0_172 = arith.constant 0 : index
    %c0_173 = arith.constant 0 : index
    %248 = vector.load %arg3[%c0_172, %c0_173] : memref<1x512xf32, #tpu.memory_space<vmem>>, vector<1x512xf32>
    %249 = arith.addf %247, %248 : vector<1x512xf32>
    %250 = arith.index_cast %c8_i32 : i32 to index
    %c0_174 = arith.constant 0 : index
    %251 = vector.load %arg4[%250, %c0_174] : memref<16x512xf32, #tpu.memory_space<vmem>>, vector<1x512xf32>
    tpu.vector_store %arg4[%250, %c0_174], %249 {strides = array<i32>} : memref<16x512xf32, #tpu.memory_space<vmem>>, vector<1x512xf32>,
    %c9_i32 = arith.constant 9 : i32
    %c0_175 = arith.constant 0 : index
    %c0_176 = arith.constant 0 : index
    %c0_177 = arith.constant 0 : index
    %252 = vector.load %arg2[%c0_175, %c0_176, %c0_177] : memref<4x32x512xf32, #tpu.memory_space<vmem>>, vector<1x32x512xf32>
    %253 = vector.shape_cast %252 : vector<1x32x512xf32> to vector<32x512xf32>
    %c1_178 = arith.constant 1 : index
    %c0_179 = arith.constant 0 : index
    %c0_180 = arith.constant 0 : index
    %254 = vector.load %arg2[%c1_178, %c0_179, %c0_180] : memref<4x32x512xf32, #tpu.memory_space<vmem>>, vector<1x32x512xf32>
    %255 = vector.shape_cast %254 : vector<1x32x512xf32> to vector<32x512xf32>
    %c2_181 = arith.constant 2 : index
    %c0_182 = arith.constant 0 : index
    %c0_183 = arith.constant 0 : index
    %256 = vector.load %arg2[%c2_181, %c0_182, %c0_183] : memref<4x32x512xf32, #tpu.memory_space<vmem>>, vector<1x32x512xf32>
    %257 = vector.shape_cast %256 : vector<1x32x512xf32> to vector<32x512xf32>
    %c3_184 = arith.constant 3 : index
    %c0_185 = arith.constant 0 : index
    %c0_186 = arith.constant 0 : index
    %258 = vector.load %arg2[%c3_184, %c0_185, %c0_186] : memref<4x32x512xf32, #tpu.memory_space<vmem>>, vector<1x32x512xf32>
    %259 = vector.shape_cast %258 : vector<1x32x512xf32> to vector<32x512xf32>
    %c0_187 = arith.constant 0 : index
    %260 = arith.index_cast %c9_i32 : i32 to index
    %c0_188 = arith.constant 0 : index
    %261 = vector.load %arg1[%c0_187, %260, %c0_188] : memref<2x16x512xf32, #tpu.memory_space<vmem>>, vector<1x1x512xf32>
    %262 = vector.shape_cast %261 : vector<1x1x512xf32> to vector<1x512xf32>
    %c1_189 = arith.constant 1 : index
    %263 = arith.index_cast %c9_i32 : i32 to index
    %c0_190 = arith.constant 0 : index
    %264 = vector.load %arg1[%c1_189, %263, %c0_190] : memref<2x16x512xf32, #tpu.memory_space<vmem>>, vector<1x1x512xf32>
    %265 = vector.shape_cast %264 : vector<1x1x512xf32> to vector<1x512xf32>
    %266 = vector.broadcast %262 : vector<1x512xf32> to vector<32x512xf32>
    %267 = arith.mulf %253, %266 : vector<32x512xf32>
    %268 = vector.broadcast %265 : vector<1x512xf32> to vector<32x512xf32>
    %269 = arith.mulf %255, %268 : vector<32x512xf32>
    %270 = arith.addf %267, %269 : vector<32x512xf32>
    %271 = arith.addf %270, %257 : vector<32x512xf32>
    %272 = math.tanh %271 : vector<32x512xf32>
    %273 = arith.mulf %272, %259 : vector<32x512xf32>
    %cst_191 = arith.constant dense<0.000000e+00> : vector<512xf32>
    %274 = vector.multi_reduction <add>, %273, %cst_191 [0] : vector<32x512xf32> to vector<512xf32>
    %275 = vector.shape_cast %274 : vector<512xf32> to vector<1x512xf32>
    %c0_192 = arith.constant 0 : index
    %c0_193 = arith.constant 0 : index
    %276 = vector.load %arg3[%c0_192, %c0_193] : memref<1x512xf32, #tpu.memory_space<vmem>>, vector<1x512xf32>
    %277 = arith.addf %275, %276 : vector<1x512xf32>
    %278 = arith.index_cast %c9_i32 : i32 to index
    %c0_194 = arith.constant 0 : index
    %279 = vector.load %arg4[%278, %c0_194] : memref<16x512xf32, #tpu.memory_space<vmem>>, vector<1x512xf32>
    tpu.vector_store %arg4[%278, %c0_194], %277 {strides = array<i32>} : memref<16x512xf32, #tpu.memory_space<vmem>>, vector<1x512xf32>,
    %c10_i32 = arith.constant 10 : i32
    %c0_195 = arith.constant 0 : index
    %c0_196 = arith.constant 0 : index
    %c0_197 = arith.constant 0 : index
    %280 = vector.load %arg2[%c0_195, %c0_196, %c0_197] : memref<4x32x512xf32, #tpu.memory_space<vmem>>, vector<1x32x512xf32>
    %281 = vector.shape_cast %280 : vector<1x32x512xf32> to vector<32x512xf32>
    %c1_198 = arith.constant 1 : index
    %c0_199 = arith.constant 0 : index
    %c0_200 = arith.constant 0 : index
    %282 = vector.load %arg2[%c1_198, %c0_199, %c0_200] : memref<4x32x512xf32, #tpu.memory_space<vmem>>, vector<1x32x512xf32>
    %283 = vector.shape_cast %282 : vector<1x32x512xf32> to vector<32x512xf32>
    %c2_201 = arith.constant 2 : index
    %c0_202 = arith.constant 0 : index
    %c0_203 = arith.constant 0 : index
    %284 = vector.load %arg2[%c2_201, %c0_202, %c0_203] : memref<4x32x512xf32, #tpu.memory_space<vmem>>, vector<1x32x512xf32>
    %285 = vector.shape_cast %284 : vector<1x32x512xf32> to vector<32x512xf32>
    %c3_204 = arith.constant 3 : index
    %c0_205 = arith.constant 0 : index
    %c0_206 = arith.constant 0 : index
    %286 = vector.load %arg2[%c3_204, %c0_205, %c0_206] : memref<4x32x512xf32, #tpu.memory_space<vmem>>, vector<1x32x512xf32>
    %287 = vector.shape_cast %286 : vector<1x32x512xf32> to vector<32x512xf32>
    %c0_207 = arith.constant 0 : index
    %288 = arith.index_cast %c10_i32 : i32 to index
    %c0_208 = arith.constant 0 : index
    %289 = vector.load %arg1[%c0_207, %288, %c0_208] : memref<2x16x512xf32, #tpu.memory_space<vmem>>, vector<1x1x512xf32>
    %290 = vector.shape_cast %289 : vector<1x1x512xf32> to vector<1x512xf32>
    %c1_209 = arith.constant 1 : index
    %291 = arith.index_cast %c10_i32 : i32 to index
    %c0_210 = arith.constant 0 : index
    %292 = vector.load %arg1[%c1_209, %291, %c0_210] : memref<2x16x512xf32, #tpu.memory_space<vmem>>, vector<1x1x512xf32>
    %293 = vector.shape_cast %292 : vector<1x1x512xf32> to vector<1x512xf32>
    %294 = vector.broadcast %290 : vector<1x512xf32> to vector<32x512xf32>
    %295 = arith.mulf %281, %294 : vector<32x512xf32>
    %296 = vector.broadcast %293 : vector<1x512xf32> to vector<32x512xf32>
    %297 = arith.mulf %283, %296 : vector<32x512xf32>
    %298 = arith.addf %295, %297 : vector<32x512xf32>
    %299 = arith.addf %298, %285 : vector<32x512xf32>
    %300 = math.tanh %299 : vector<32x512xf32>
    %301 = arith.mulf %300, %287 : vector<32x512xf32>
    %cst_211 = arith.constant dense<0.000000e+00> : vector<512xf32>
    %302 = vector.multi_reduction <add>, %301, %cst_211 [0] : vector<32x512xf32> to vector<512xf32>
    %303 = vector.shape_cast %302 : vector<512xf32> to vector<1x512xf32>
    %c0_212 = arith.constant 0 : index
    %c0_213 = arith.constant 0 : index
    %304 = vector.load %arg3[%c0_212, %c0_213] : memref<1x512xf32, #tpu.memory_space<vmem>>, vector<1x512xf32>
    %305 = arith.addf %303, %304 : vector<1x512xf32>
    %306 = arith.index_cast %c10_i32 : i32 to index
    %c0_214 = arith.constant 0 : index
    %307 = vector.load %arg4[%306, %c0_214] : memref<16x512xf32, #tpu.memory_space<vmem>>, vector<1x512xf32>
    tpu.vector_store %arg4[%306, %c0_214], %305 {strides = array<i32>} : memref<16x512xf32, #tpu.memory_space<vmem>>, vector<1x512xf32>,
    %c11_i32 = arith.constant 11 : i32
    %c0_215 = arith.constant 0 : index
    %c0_216 = arith.constant 0 : index
    %c0_217 = arith.constant 0 : index
    %308 = vector.load %arg2[%c0_215, %c0_216, %c0_217] : memref<4x32x512xf32, #tpu.memory_space<vmem>>, vector<1x32x512xf32>
    %309 = vector.shape_cast %308 : vector<1x32x512xf32> to vector<32x512xf32>
    %c1_218 = arith.constant 1 : index
    %c0_219 = arith.constant 0 : index
    %c0_220 = arith.constant 0 : index
    %310 = vector.load %arg2[%c1_218, %c0_219, %c0_220] : memref<4x32x512xf32, #tpu.memory_space<vmem>>, vector<1x32x512xf32>
    %311 = vector.shape_cast %310 : vector<1x32x512xf32> to vector<32x512xf32>
    %c2_221 = arith.constant 2 : index
    %c0_222 = arith.constant 0 : index
    %c0_223 = arith.constant 0 : index
    %312 = vector.load %arg2[%c2_221, %c0_222, %c0_223] : memref<4x32x512xf32, #tpu.memory_space<vmem>>, vector<1x32x512xf32>
    %313 = vector.shape_cast %312 : vector<1x32x512xf32> to vector<32x512xf32>
    %c3_224 = arith.constant 3 : index
    %c0_225 = arith.constant 0 : index
    %c0_226 = arith.constant 0 : index
    %314 = vector.load %arg2[%c3_224, %c0_225, %c0_226] : memref<4x32x512xf32, #tpu.memory_space<vmem>>, vector<1x32x512xf32>
    %315 = vector.shape_cast %314 : vector<1x32x512xf32> to vector<32x512xf32>
    %c0_227 = arith.constant 0 : index
    %316 = arith.index_cast %c11_i32 : i32 to index
    %c0_228 = arith.constant 0 : index
    %317 = vector.load %arg1[%c0_227, %316, %c0_228] : memref<2x16x512xf32, #tpu.memory_space<vmem>>, vector<1x1x512xf32>
    %318 = vector.shape_cast %317 : vector<1x1x512xf32> to vector<1x512xf32>
    %c1_229 = arith.constant 1 : index
    %319 = arith.index_cast %c11_i32 : i32 to index
    %c0_230 = arith.constant 0 : index
    %320 = vector.load %arg1[%c1_229, %319, %c0_230] : memref<2x16x512xf32, #tpu.memory_space<vmem>>, vector<1x1x512xf32>
    %321 = vector.shape_cast %320 : vector<1x1x512xf32> to vector<1x512xf32>
    %322 = vector.broadcast %318 : vector<1x512xf32> to vector<32x512xf32>
    %323 = arith.mulf %309, %322 : vector<32x512xf32>
    %324 = vector.broadcast %321 : vector<1x512xf32> to vector<32x512xf32>
    %325 = arith.mulf %311, %324 : vector<32x512xf32>
    %326 = arith.addf %323, %325 : vector<32x512xf32>
    %327 = arith.addf %326, %313 : vector<32x512xf32>
    %328 = math.tanh %327 : vector<32x512xf32>
    %329 = arith.mulf %328, %315 : vector<32x512xf32>
    %cst_231 = arith.constant dense<0.000000e+00> : vector<512xf32>
    %330 = vector.multi_reduction <add>, %329, %cst_231 [0] : vector<32x512xf32> to vector<512xf32>
    %331 = vector.shape_cast %330 : vector<512xf32> to vector<1x512xf32>
    %c0_232 = arith.constant 0 : index
    %c0_233 = arith.constant 0 : index
    %332 = vector.load %arg3[%c0_232, %c0_233] : memref<1x512xf32, #tpu.memory_space<vmem>>, vector<1x512xf32>
    %333 = arith.addf %331, %332 : vector<1x512xf32>
    %334 = arith.index_cast %c11_i32 : i32 to index
    %c0_234 = arith.constant 0 : index
    %335 = vector.load %arg4[%334, %c0_234] : memref<16x512xf32, #tpu.memory_space<vmem>>, vector<1x512xf32>
    tpu.vector_store %arg4[%334, %c0_234], %333 {strides = array<i32>} : memref<16x512xf32, #tpu.memory_space<vmem>>, vector<1x512xf32>,
    %c12_i32 = arith.constant 12 : i32
    %c0_235 = arith.constant 0 : index
    %c0_236 = arith.constant 0 : index
    %c0_237 = arith.constant 0 : index
    %336 = vector.load %arg2[%c0_235, %c0_236, %c0_237] : memref<4x32x512xf32, #tpu.memory_space<vmem>>, vector<1x32x512xf32>
    %337 = vector.shape_cast %336 : vector<1x32x512xf32> to vector<32x512xf32>
    %c1_238 = arith.constant 1 : index
    %c0_239 = arith.constant 0 : index
    %c0_240 = arith.constant 0 : index
    %338 = vector.load %arg2[%c1_238, %c0_239, %c0_240] : memref<4x32x512xf32, #tpu.memory_space<vmem>>, vector<1x32x512xf32>
    %339 = vector.shape_cast %338 : vector<1x32x512xf32> to vector<32x512xf32>
    %c2_241 = arith.constant 2 : index
    %c0_242 = arith.constant 0 : index
    %c0_243 = arith.constant 0 : index
    %340 = vector.load %arg2[%c2_241, %c0_242, %c0_243] : memref<4x32x512xf32, #tpu.memory_space<vmem>>, vector<1x32x512xf32>
    %341 = vector.shape_cast %340 : vector<1x32x512xf32> to vector<32x512xf32>
    %c3_244 = arith.constant 3 : index
    %c0_245 = arith.constant 0 : index
    %c0_246 = arith.constant 0 : index
    %342 = vector.load %arg2[%c3_244, %c0_245, %c0_246] : memref<4x32x512xf32, #tpu.memory_space<vmem>>, vector<1x32x512xf32>
    %343 = vector.shape_cast %342 : vector<1x32x512xf32> to vector<32x512xf32>
    %c0_247 = arith.constant 0 : index
    %344 = arith.index_cast %c12_i32 : i32 to index
    %c0_248 = arith.constant 0 : index
    %345 = vector.load %arg1[%c0_247, %344, %c0_248] : memref<2x16x512xf32, #tpu.memory_space<vmem>>, vector<1x1x512xf32>
    %346 = vector.shape_cast %345 : vector<1x1x512xf32> to vector<1x512xf32>
    %c1_249 = arith.constant 1 : index
    %347 = arith.index_cast %c12_i32 : i32 to index
    %c0_250 = arith.constant 0 : index
    %348 = vector.load %arg1[%c1_249, %347, %c0_250] : memref<2x16x512xf32, #tpu.memory_space<vmem>>, vector<1x1x512xf32>
    %349 = vector.shape_cast %348 : vector<1x1x512xf32> to vector<1x512xf32>
    %350 = vector.broadcast %346 : vector<1x512xf32> to vector<32x512xf32>
    %351 = arith.mulf %337, %350 : vector<32x512xf32>
    %352 = vector.broadcast %349 : vector<1x512xf32> to vector<32x512xf32>
    %353 = arith.mulf %339, %352 : vector<32x512xf32>
    %354 = arith.addf %351, %353 : vector<32x512xf32>
    %355 = arith.addf %354, %341 : vector<32x512xf32>
    %356 = math.tanh %355 : vector<32x512xf32>
    %357 = arith.mulf %356, %343 : vector<32x512xf32>
    %cst_251 = arith.constant dense<0.000000e+00> : vector<512xf32>
    %358 = vector.multi_reduction <add>, %357, %cst_251 [0] : vector<32x512xf32> to vector<512xf32>
    %359 = vector.shape_cast %358 : vector<512xf32> to vector<1x512xf32>
    %c0_252 = arith.constant 0 : index
    %c0_253 = arith.constant 0 : index
    %360 = vector.load %arg3[%c0_252, %c0_253] : memref<1x512xf32, #tpu.memory_space<vmem>>, vector<1x512xf32>
    %361 = arith.addf %359, %360 : vector<1x512xf32>
    %362 = arith.index_cast %c12_i32 : i32 to index
    %c0_254 = arith.constant 0 : index
    %363 = vector.load %arg4[%362, %c0_254] : memref<16x512xf32, #tpu.memory_space<vmem>>, vector<1x512xf32>
    tpu.vector_store %arg4[%362, %c0_254], %361 {strides = array<i32>} : memref<16x512xf32, #tpu.memory_space<vmem>>, vector<1x512xf32>,
    %c13_i32 = arith.constant 13 : i32
    %c0_255 = arith.constant 0 : index
    %c0_256 = arith.constant 0 : index
    %c0_257 = arith.constant 0 : index
    %364 = vector.load %arg2[%c0_255, %c0_256, %c0_257] : memref<4x32x512xf32, #tpu.memory_space<vmem>>, vector<1x32x512xf32>
    %365 = vector.shape_cast %364 : vector<1x32x512xf32> to vector<32x512xf32>
    %c1_258 = arith.constant 1 : index
    %c0_259 = arith.constant 0 : index
    %c0_260 = arith.constant 0 : index
    %366 = vector.load %arg2[%c1_258, %c0_259, %c0_260] : memref<4x32x512xf32, #tpu.memory_space<vmem>>, vector<1x32x512xf32>
    %367 = vector.shape_cast %366 : vector<1x32x512xf32> to vector<32x512xf32>
    %c2_261 = arith.constant 2 : index
    %c0_262 = arith.constant 0 : index
    %c0_263 = arith.constant 0 : index
    %368 = vector.load %arg2[%c2_261, %c0_262, %c0_263] : memref<4x32x512xf32, #tpu.memory_space<vmem>>, vector<1x32x512xf32>
    %369 = vector.shape_cast %368 : vector<1x32x512xf32> to vector<32x512xf32>
    %c3_264 = arith.constant 3 : index
    %c0_265 = arith.constant 0 : index
    %c0_266 = arith.constant 0 : index
    %370 = vector.load %arg2[%c3_264, %c0_265, %c0_266] : memref<4x32x512xf32, #tpu.memory_space<vmem>>, vector<1x32x512xf32>
    %371 = vector.shape_cast %370 : vector<1x32x512xf32> to vector<32x512xf32>
    %c0_267 = arith.constant 0 : index
    %372 = arith.index_cast %c13_i32 : i32 to index
    %c0_268 = arith.constant 0 : index
    %373 = vector.load %arg1[%c0_267, %372, %c0_268] : memref<2x16x512xf32, #tpu.memory_space<vmem>>, vector<1x1x512xf32>
    %374 = vector.shape_cast %373 : vector<1x1x512xf32> to vector<1x512xf32>
    %c1_269 = arith.constant 1 : index
    %375 = arith.index_cast %c13_i32 : i32 to index
    %c0_270 = arith.constant 0 : index
    %376 = vector.load %arg1[%c1_269, %375, %c0_270] : memref<2x16x512xf32, #tpu.memory_space<vmem>>, vector<1x1x512xf32>
    %377 = vector.shape_cast %376 : vector<1x1x512xf32> to vector<1x512xf32>
    %378 = vector.broadcast %374 : vector<1x512xf32> to vector<32x512xf32>
    %379 = arith.mulf %365, %378 : vector<32x512xf32>
    %380 = vector.broadcast %377 : vector<1x512xf32> to vector<32x512xf32>
    %381 = arith.mulf %367, %380 : vector<32x512xf32>
    %382 = arith.addf %379, %381 : vector<32x512xf32>
    %383 = arith.addf %382, %369 : vector<32x512xf32>
    %384 = math.tanh %383 : vector<32x512xf32>
    %385 = arith.mulf %384, %371 : vector<32x512xf32>
    %cst_271 = arith.constant dense<0.000000e+00> : vector<512xf32>
    %386 = vector.multi_reduction <add>, %385, %cst_271 [0] : vector<32x512xf32> to vector<512xf32>
    %387 = vector.shape_cast %386 : vector<512xf32> to vector<1x512xf32>
    %c0_272 = arith.constant 0 : index
    %c0_273 = arith.constant 0 : index
    %388 = vector.load %arg3[%c0_272, %c0_273] : memref<1x512xf32, #tpu.memory_space<vmem>>, vector<1x512xf32>
    %389 = arith.addf %387, %388 : vector<1x512xf32>
    %390 = arith.index_cast %c13_i32 : i32 to index
    %c0_274 = arith.constant 0 : index
    %391 = vector.load %arg4[%390, %c0_274] : memref<16x512xf32, #tpu.memory_space<vmem>>, vector<1x512xf32>
    tpu.vector_store %arg4[%390, %c0_274], %389 {strides = array<i32>} : memref<16x512xf32, #tpu.memory_space<vmem>>, vector<1x512xf32>,
    %c14_i32 = arith.constant 14 : i32
    %c0_275 = arith.constant 0 : index
    %c0_276 = arith.constant 0 : index
    %c0_277 = arith.constant 0 : index
    %392 = vector.load %arg2[%c0_275, %c0_276, %c0_277] : memref<4x32x512xf32, #tpu.memory_space<vmem>>, vector<1x32x512xf32>
    %393 = vector.shape_cast %392 : vector<1x32x512xf32> to vector<32x512xf32>
    %c1_278 = arith.constant 1 : index
    %c0_279 = arith.constant 0 : index
    %c0_280 = arith.constant 0 : index
    %394 = vector.load %arg2[%c1_278, %c0_279, %c0_280] : memref<4x32x512xf32, #tpu.memory_space<vmem>>, vector<1x32x512xf32>
    %395 = vector.shape_cast %394 : vector<1x32x512xf32> to vector<32x512xf32>
    %c2_281 = arith.constant 2 : index
    %c0_282 = arith.constant 0 : index
    %c0_283 = arith.constant 0 : index
    %396 = vector.load %arg2[%c2_281, %c0_282, %c0_283] : memref<4x32x512xf32, #tpu.memory_space<vmem>>, vector<1x32x512xf32>
    %397 = vector.shape_cast %396 : vector<1x32x512xf32> to vector<32x512xf32>
    %c3_284 = arith.constant 3 : index
    %c0_285 = arith.constant 0 : index
    %c0_286 = arith.constant 0 : index
    %398 = vector.load %arg2[%c3_284, %c0_285, %c0_286] : memref<4x32x512xf32, #tpu.memory_space<vmem>>, vector<1x32x512xf32>
    %399 = vector.shape_cast %398 : vector<1x32x512xf32> to vector<32x512xf32>
    %c0_287 = arith.constant 0 : index
    %400 = arith.index_cast %c14_i32 : i32 to index
    %c0_288 = arith.constant 0 : index
    %401 = vector.load %arg1[%c0_287, %400, %c0_288] : memref<2x16x512xf32, #tpu.memory_space<vmem>>, vector<1x1x512xf32>
    %402 = vector.shape_cast %401 : vector<1x1x512xf32> to vector<1x512xf32>
    %c1_289 = arith.constant 1 : index
    %403 = arith.index_cast %c14_i32 : i32 to index
    %c0_290 = arith.constant 0 : index
    %404 = vector.load %arg1[%c1_289, %403, %c0_290] : memref<2x16x512xf32, #tpu.memory_space<vmem>>, vector<1x1x512xf32>
    %405 = vector.shape_cast %404 : vector<1x1x512xf32> to vector<1x512xf32>
    %406 = vector.broadcast %402 : vector<1x512xf32> to vector<32x512xf32>
    %407 = arith.mulf %393, %406 : vector<32x512xf32>
    %408 = vector.broadcast %405 : vector<1x512xf32> to vector<32x512xf32>
    %409 = arith.mulf %395, %408 : vector<32x512xf32>
    %410 = arith.addf %407, %409 : vector<32x512xf32>
    %411 = arith.addf %410, %397 : vector<32x512xf32>
    %412 = math.tanh %411 : vector<32x512xf32>
    %413 = arith.mulf %412, %399 : vector<32x512xf32>
    %cst_291 = arith.constant dense<0.000000e+00> : vector<512xf32>
    %414 = vector.multi_reduction <add>, %413, %cst_291 [0] : vector<32x512xf32> to vector<512xf32>
    %415 = vector.shape_cast %414 : vector<512xf32> to vector<1x512xf32>
    %c0_292 = arith.constant 0 : index
    %c0_293 = arith.constant 0 : index
    %416 = vector.load %arg3[%c0_292, %c0_293] : memref<1x512xf32, #tpu.memory_space<vmem>>, vector<1x512xf32>
    %417 = arith.addf %415, %416 : vector<1x512xf32>
    %418 = arith.index_cast %c14_i32 : i32 to index
    %c0_294 = arith.constant 0 : index
    %419 = vector.load %arg4[%418, %c0_294] : memref<16x512xf32, #tpu.memory_space<vmem>>, vector<1x512xf32>
    tpu.vector_store %arg4[%418, %c0_294], %417 {strides = array<i32>} : memref<16x512xf32, #tpu.memory_space<vmem>>, vector<1x512xf32>,
    %c15_i32 = arith.constant 15 : i32
    %c0_295 = arith.constant 0 : index
    %c0_296 = arith.constant 0 : index
    %c0_297 = arith.constant 0 : index
    %420 = vector.load %arg2[%c0_295, %c0_296, %c0_297] : memref<4x32x512xf32, #tpu.memory_space<vmem>>, vector<1x32x512xf32>
    %421 = vector.shape_cast %420 : vector<1x32x512xf32> to vector<32x512xf32>
    %c1_298 = arith.constant 1 : index
    %c0_299 = arith.constant 0 : index
    %c0_300 = arith.constant 0 : index
    %422 = vector.load %arg2[%c1_298, %c0_299, %c0_300] : memref<4x32x512xf32, #tpu.memory_space<vmem>>, vector<1x32x512xf32>
    %423 = vector.shape_cast %422 : vector<1x32x512xf32> to vector<32x512xf32>
    %c2_301 = arith.constant 2 : index
    %c0_302 = arith.constant 0 : index
    %c0_303 = arith.constant 0 : index
    %424 = vector.load %arg2[%c2_301, %c0_302, %c0_303] : memref<4x32x512xf32, #tpu.memory_space<vmem>>, vector<1x32x512xf32>
    %425 = vector.shape_cast %424 : vector<1x32x512xf32> to vector<32x512xf32>
    %c3_304 = arith.constant 3 : index
    %c0_305 = arith.constant 0 : index
    %c0_306 = arith.constant 0 : index
    %426 = vector.load %arg2[%c3_304, %c0_305, %c0_306] : memref<4x32x512xf32, #tpu.memory_space<vmem>>, vector<1x32x512xf32>
    %427 = vector.shape_cast %426 : vector<1x32x512xf32> to vector<32x512xf32>
    %c0_307 = arith.constant 0 : index
    %428 = arith.index_cast %c15_i32 : i32 to index
    %c0_308 = arith.constant 0 : index
    %429 = vector.load %arg1[%c0_307, %428, %c0_308] : memref<2x16x512xf32, #tpu.memory_space<vmem>>, vector<1x1x512xf32>
    %430 = vector.shape_cast %429 : vector<1x1x512xf32> to vector<1x512xf32>
    %c1_309 = arith.constant 1 : index
    %431 = arith.index_cast %c15_i32 : i32 to index
    %c0_310 = arith.constant 0 : index
    %432 = vector.load %arg1[%c1_309, %431, %c0_310] : memref<2x16x512xf32, #tpu.memory_space<vmem>>, vector<1x1x512xf32>
    %433 = vector.shape_cast %432 : vector<1x1x512xf32> to vector<1x512xf32>
    %434 = vector.broadcast %430 : vector<1x512xf32> to vector<32x512xf32>
    %435 = arith.mulf %421, %434 : vector<32x512xf32>
    %436 = vector.broadcast %433 : vector<1x512xf32> to vector<32x512xf32>
    %437 = arith.mulf %423, %436 : vector<32x512xf32>
    %438 = arith.addf %435, %437 : vector<32x512xf32>
    %439 = arith.addf %438, %425 : vector<32x512xf32>
    %440 = math.tanh %439 : vector<32x512xf32>
    %441 = arith.mulf %440, %427 : vector<32x512xf32>
    %cst_311 = arith.constant dense<0.000000e+00> : vector<512xf32>
    %442 = vector.multi_reduction <add>, %441, %cst_311 [0] : vector<32x512xf32> to vector<512xf32>
    %443 = vector.shape_cast %442 : vector<512xf32> to vector<1x512xf32>
    %c0_312 = arith.constant 0 : index
    %c0_313 = arith.constant 0 : index
    %444 = vector.load %arg3[%c0_312, %c0_313] : memref<1x512xf32, #tpu.memory_space<vmem>>, vector<1x512xf32>
    %445 = arith.addf %443, %444 : vector<1x512xf32>
    %446 = arith.index_cast %c15_i32 : i32 to index
    %c0_314 = arith.constant 0 : index
    %447 = vector.load %arg4[%446, %c0_314] : memref<16x512xf32, #tpu.memory_space<vmem>>, vector<1x512xf32>
    tpu.vector_store %arg4[%446, %c0_314], %445 {strides = array<i32>} : memref<16x512xf32, #tpu.memory_space<vmem>>, vector<1x512xf32>,
    %c16_i32 = arith.constant 16 : i32
    return
  }
  func.func @transform_0(%arg0: i32) -> (i32, i32, i32) {
    %c0_i32 = arith.constant 0 : i32
    %c0_i32_0 = arith.constant 0 : i32
    %c0_i32_1 = arith.constant 0 : i32
    return %c0_i32, %arg0, %c0_i32_0 : i32, i32, i32
  }
  func.func @transform_1(%arg0: i32) -> (i32, i32, i32) {
    %c0_i32 = arith.constant 0 : i32
    %c0_i32_0 = arith.constant 0 : i32
    %c0_i32_1 = arith.constant 0 : i32
    %c0_i32_2 = arith.constant 0 : i32
    return %c0_i32, %c0_i32_0, %c0_i32_1 : i32, i32, i32
  }
  func.func @transform_2(%arg0: i32) -> (i32, i32) {
    %c0_i32 = arith.constant 0 : i32
    %c0_i32_0 = arith.constant 0 : i32
    %c0_i32_1 = arith.constant 0 : i32
    return %c0_i32, %c0_i32_0 : i32, i32
  }
  func.func @transform_3(%arg0: i32) -> (i32, i32) {
    %c0_i32 = arith.constant 0 : i32
    %c0_i32_0 = arith.constant 0 : i32
    return %arg0, %c0_i32 : i32, i32
  }
}

</mosaic_0001>

<llo_original>
// kernel: pressure_head_forward_t.1
$region0: #{pressure_head_forward_t.1}
  #allocation0 [shape = 'u32[]', space=smem, size = 0x4, offset = 0x4, fixed_abs, tag = 'smem constant byte address 0x4 - core index']
  #allocation1 [shape = 'u32[72,128]{1,0:T(1,128)}', space=vmem, size = 0x9000, scoped, tag = 'internal scratch']
  %s0 = inlined_call_operand.vmem [shape: f32[2,16,512], index: 0, kind: input, shape index: {}]
  %s1 = inlined_call_operand.hbm [shape: f32[4,32,512], index: 1, kind: input, shape index: {}]
  %s2 = inlined_call_operand.vmem [shape: f32[1,512], index: 2, kind: input, shape index: {}]
  %s3 = inlined_call_operand.vmem [shape: f32[16,512], index: 3, kind: output, shape index: {}]
  %s4 = sld [smem:[#allocation0]]
  $region26: #{pressure_head_forward_t.1} parent=0
    _
  %s6 = ssub.s32 1, %s4
  %s7 = scalar_select 0, %s6, %s4
  $region1: #{pressure_head_forward_t.1} parent=0
    #allocation2 [shape = 'u8[262144]{0}', space=vmem, size = 0x40000, scoped, tag = 'input window, operand 1, single buffered']
    #allocation3 [shape = 's32[1]{0}', space=sflag, size = 0x4, scoped, tag = 'scoped memory for pressure_head_forward_t.1']
    %8 = vsyncpa [#allocation3], 0
    // Predicated region
    $region2: #{pressure_head_forward_t.1} parent=1 // pred_check
      _
    $region3: #{pressure_head_forward_t.1} parent=1 // pred_check_branch
      %10 = sbr.rel (0) target = $region5
    $region4: #{pressure_head_forward_t.1} parent=1 // pred_region
      _
    $region5: #{pressure_head_forward_t.1} parent=1 // pred_fallthru
      _
    // Predicated region
    $region6: #{pressure_head_forward_t.1} parent=1 // pred_check
      _
    $region7: #{pressure_head_forward_t.1} parent=1 // pred_check_branch
      %12 = sbr.rel (0) target = $region9
    $region8: #{pressure_head_forward_t.1} parent=1 // pred_region
      %14 = vsyncadd [#allocation3], 0
      %s15 = sshll.u32 %s1, 4
      %s16 = int_to_ptr.hbm [resolvable:$true] %s15
      %s17 = sshll.u32 [#allocation2], 4
      %s18 = int_to_ptr.vmem [resolvable:$true] %s17
      %23 = dma.hbm_to_vmem [thread:$0]  %s16, 8192, %s18, [#allocation3], 512, 512, 32
    $region9: #{pressure_head_forward_t.1} parent=1 // pred_fallthru
      _
    // Predicated region
    $region10: #{pressure_head_forward_t.1} parent=1 // pred_check
      _
    $region11: #{pressure_head_forward_t.1} parent=1 // pred_check_branch
      %25 = sbr.rel (0) target = $region13
    $region12: #{pressure_head_forward_t.1} parent=1 // pred_region
      _
    $region13: #{pressure_head_forward_t.1} parent=1 // pred_fallthru
      _
    // Predicated region
    $region14: #{pressure_head_forward_t.1} parent=1 // pred_check
      _
    $region15: #{pressure_head_forward_t.1} parent=1 // pred_check_branch
      %27 = sbr.rel (0) target = $region17
    $region16: #{pressure_head_forward_t.1} parent=1 // pred_region
      %29 = dma.done [#allocation3], 8192
    $region17: #{pressure_head_forward_t.1} parent=1 // pred_fallthru
      _
    %v30 = vld [vmem:[#allocation2] sm:$0xff]
    %v31 = vld [vmem:[#allocation2 + $0x8] sm:$0xff]
    %v32 = vld [vmem:[#allocation2 + $0x10] sm:$0xff]
    %v33 = vld [vmem:[#allocation2 + $0x18] sm:$0xff]
    %v34 = vld [vmem:[#allocation2 + $0x20] sm:$0xff]
    %v35 = vld [vmem:[#allocation2 + $0x28] sm:$0xff]
    %v36 = vld [vmem:[#allocation2 + $0x30] sm:$0xff]
    %v37 = vld [vmem:[#allocation2 + $0x38] sm:$0xff]
    %v38 = vld [vmem:[#allocation2 + $0x40] sm:$0xff]
    %v39 = vld [vmem:[#allocation2 + $0x48] sm:$0xff]
    %v40 = vld [vmem:[#allocation2 + $0x50] sm:$0xff]
    %v41 = vld [vmem:[#allocation2 + $0x58] sm:$0xff]
    %v42 = vld [vmem:[#allocation2 + $0x60] sm:$0xff]
    %v43 = vld [vmem:[#allocation2 + $0x68] sm:$0xff]
    %v44 = vld [vmem:[#allocation2 + $0x70] sm:$0xff]
    %v45 = vld [vmem:[#allocation2 + $0x78] sm:$0xff]
    %s46 = scalar_lea.vmem [#allocation2], 128
    %v47 = vld [vmem:[%s46] sm:$0xff]
    %v48 = vld [vmem:[%s46 + $0x8] sm:$0xff]
    %v49 = vld [vmem:[%s46 + $0x10] sm:$0xff]
    %v50 = vld [vmem:[%s46 + $0x18] sm:$0xff]
    %v51 = vld [vmem:[%s46 + $0x20] sm:$0xff]
    %v52 = vld [vmem:[%s46 + $0x28] sm:$0xff]
    %v53 = vld [vmem:[%s46 + $0x30] sm:$0xff]
    %v54 = vld [vmem:[%s46 + $0x38] sm:$0xff]
    %v55 = vld [vmem:[%s46 + $0x40] sm:$0xff]
    %v56 = vld [vmem:[%s46 + $0x48] sm:$0xff]
    %v57 = vld [vmem:[%s46 + $0x50] sm:$0xff]
    %v58 = vld [vmem:[%s46 + $0x58] sm:$0xff]
    %v59 = vld [vmem:[%s46 + $0x60] sm:$0xff]
    %v60 = vld [vmem:[%s46 + $0x68] sm:$0xff]
    %v61 = vld [vmem:[%s46 + $0x70] sm:$0xff]
    %v62 = vld [vmem:[%s46 + $0x78] sm:$0xff]
    %s63 = scalar_lea.vmem [#allocation2], 256
    %v64 = vld [vmem:[%s63] sm:$0xff]
    %v65 = vld [vmem:[%s63 + $0x8] sm:$0xff]
    %v66 = vld [vmem:[%s63 + $0x10] sm:$0xff]
    %v67 = vld [vmem:[%s63 + $0x18] sm:$0xff]
    %v68 = vld [vmem:[%s63 + $0x20] sm:$0xff]
    %v69 = vld [vmem:[%s63 + $0x28] sm:$0xff]
    %v70 = vld [vmem:[%s63 + $0x30] sm:$0xff]
    %v71 = vld [vmem:[%s63 + $0x38] sm:$0xff]
    %v72 = vld [vmem:[%s63 + $0x40] sm:$0xff]
    %v73 = vld [vmem:[%s63 + $0x48] sm:$0xff]
    %v74 = vld [vmem:[%s63 + $0x50] sm:$0xff]
    %v75 = vld [vmem:[%s63 + $0x58] sm:$0xff]
    %v76 = vld [vmem:[%s63 + $0x60] sm:$0xff]
    %v77 = vld [vmem:[%s63 + $0x68] sm:$0xff]
    %v78 = vld [vmem:[%s63 + $0x70] sm:$0xff]
    %v79 = vld [vmem:[%s63 + $0x78] sm:$0xff]
    %s80 = scalar_lea.vmem [#allocation2], 384
    %v81 = vld [vmem:[%s80] sm:$0xff]
    %v82 = vld [vmem:[%s80 + $0x8] sm:$0xff]
    %v83 = vld [vmem:[%s80 + $0x10] sm:$0xff]
    %v84 = vld [vmem:[%s80 + $0x18] sm:$0xff]
    %v85 = vld [vmem:[%s80 + $0x20] sm:$0xff]
    %v86 = vld [vmem:[%s80 + $0x28] sm:$0xff]
    %v87 = vld [vmem:[%s80 + $0x30] sm:$0xff]
    %v88 = vld [vmem:[%s80 + $0x38] sm:$0xff]
    %v89 = vld [vmem:[%s80 + $0x40] sm:$0xff]
    %v90 = vld [vmem:[%s80 + $0x48] sm:$0xff]
    %v91 = vld [vmem:[%s80 + $0x50] sm:$0xff]
    %v92 = vld [vmem:[%s80 + $0x58] sm:$0xff]
    %v93 = vld [vmem:[%s80 + $0x60] sm:$0xff]
    %v94 = vld [vmem:[%s80 + $0x68] sm:$0xff]
    %v95 = vld [vmem:[%s80 + $0x70] sm:$0xff]
    %v96 = vld [vmem:[%s80 + $0x78] sm:$0xff]
    %v97 = vld [vmem:[%s0] ss:$8 sm:$0xf]
    %s98 = scalar_lea.vmem %s0, 64
    %v99 = vld [vmem:[%s98] ss:$8 sm:$0xf]
    %v101 = vperm.slane %v97, 0
    %v102 = vperm.slane %v97, 1
    %v103 = vperm.slane %v97, 2
    %v104 = vperm.slane %v97, 3
    %v109 = vmul.f32 %v30, %v101
    %v110 = vmul.f32 %v31, %v102
    %v111 = vmul.f32 %v32, %v103
    %v112 = vmul.f32 %v33, %v104
    %v113 = vmul.f32 %v34, %v101
    %v114 = vmul.f32 %v35, %v102
    %v115 = vmul.f32 %v36, %v103
    %v116 = vmul.f32 %v37, %v104
    %v117 = vmul.f32 %v38, %v101
    %v118 = vmul.f32 %v39, %v102
    %v119 = vmul.f32 %v40, %v103
    %v120 = vmul.f32 %v41, %v104
    %v121 = vmul.f32 %v42, %v101
    %v122 = vmul.f32 %v43, %v102
    %v123 = vmul.f32 %v44, %v103
    %v124 = vmul.f32 %v45, %v104
    %v126 = vperm.slane %v99, 0
    %v127 = vperm.slane %v99, 1
    %v128 = vperm.slane %v99, 2
    %v129 = vperm.slane %v99, 3
    %v134 = vmul.f32 %v47, %v126
    %v135 = vmul.f32 %v48, %v127
    %v136 = vmul.f32 %v49, %v128
    %v137 = vmul.f32 %v50, %v129
    %v138 = vmul.f32 %v51, %v126
    %v139 = vmul.f32 %v52, %v127
    %v140 = vmul.f32 %v53, %v128
    %v141 = vmul.f32 %v54, %v129
    %v142 = vmul.f32 %v55, %v126
    %v143 = vmul.f32 %v56, %v127
    %v144 = vmul.f32 %v57, %v128
    %v145 = vmul.f32 %v58, %v129
    %v146 = vmul.f32 %v59, %v126
    %v147 = vmul.f32 %v60, %v127
    %v148 = vmul.f32 %v61, %v128
    %v149 = vmul.f32 %v62, %v129
    %v150 = vadd.f32 %v109, %v134
    %v151 = vadd.f32 %v110, %v135
    %v152 = vadd.f32 %v111, %v136
    %v153 = vadd.f32 %v112, %v137
    %v154 = vadd.f32 %v113, %v138
    %v155 = vadd.f32 %v114, %v139
    %v156 = vadd.f32 %v115, %v140
    %v157 = vadd.f32 %v116, %v141
    %v158 = vadd.f32 %v117, %v142
    %v159 = vadd.f32 %v118, %v143
    %v160 = vadd.f32 %v119, %v144
    %v161 = vadd.f32 %v120, %v145
    %v162 = vadd.f32 %v121, %v146
    %v163 = vadd.f32 %v122, %v147
    %v164 = vadd.f32 %v123, %v148
    %v165 = vadd.f32 %v124, %v149
    %v166 = vadd.f32 %v150, %v64
    %v167 = vadd.f32 %v151, %v65
    %v168 = vadd.f32 %v152, %v66
    %v169 = vadd.f32 %v153, %v67
    %v170 = vadd.f32 %v154, %v68
    %v171 = vadd.f32 %v155, %v69
    %v172 = vadd.f32 %v156, %v70
    %v173 = vadd.f32 %v157, %v71
    %v174 = vadd.f32 %v158, %v72
    %v175 = vadd.f32 %v159, %v73
    %v176 = vadd.f32 %v160, %v74
    %v177 = vadd.f32 %v161, %v75
    %v178 = vadd.f32 %v162, %v76
    %v179 = vadd.f32 %v163, %v77
    %v180 = vadd.f32 %v164, %v78
    %v181 = vadd.f32 %v165, %v79
    %v182 = vtanh.pop %v166
    %v183 = vtanh.pop %v167
    %v184 = vtanh.pop %v168
    %v185 = vtanh.pop %v169
    %v186 = vtanh.pop %v170
    %v187 = vtanh.pop %v171
    %v188 = vtanh.pop %v172
    %v189 = vtanh.pop %v173
    %v190 = vtanh.pop %v174
    %v191 = vtanh.pop %v175
    %v192 = vtanh.pop %v176
    %v193 = vtanh.pop %v177
    %v194 = vtanh.pop %v178
    %v195 = vtanh.pop %v179
    %v196 = vtanh.pop %v180
    %v197 = vtanh.pop %v181
    %v198 = vmul.f32 %v182, %v81
    %v199 = vmul.f32 %v183, %v82
    %v200 = vmul.f32 %v184, %v83
    %v201 = vmul.f32 %v185, %v84
    %v202 = vmul.f32 %v186, %v85
    %v203 = vmul.f32 %v187, %v86
    %v204 = vmul.f32 %v188, %v87
    %v205 = vmul.f32 %v189, %v88
    %v206 = vmul.f32 %v190, %v89
    %v207 = vmul.f32 %v191, %v90
    %v208 = vmul.f32 %v192, %v91
    %v209 = vmul.f32 %v193, %v92
    %v210 = vmul.f32 %v194, %v93
    %v211 = vmul.f32 %v195, %v94
    %v212 = vmul.f32 %v196, %v95
    %v213 = vmul.f32 %v197, %v96
    %v214 = vadd.f32 %v198, %v202
    %v215 = vadd.f32 %v214, %v206
    %v216 = vadd.f32 %v215, %v210
    %v217 = vrot.slane %v216, 4
    %v218 = vadd.f32 %v216, %v217
    %v219 = vrot.slane %v218, 2
    %v220 = vadd.f32 %v218, %v219
    %v221 = vrot.slane %v220, 1
    %v222 = vadd.f32 %v220, %v221
    %v223 = vadd.f32 %v199, %v203
    %v224 = vadd.f32 %v223, %v207
    %v225 = vadd.f32 %v224, %v211
    %v226 = vrot.slane %v225, 4
    %v227 = vadd.f32 %v225, %v226
    %v228 = vrot.slane %v227, 2
    %v229 = vadd.f32 %v227, %v228
    %v230 = vrot.slane %v229, 1
    %v231 = vadd.f32 %v229, %v230
    %v232 = vadd.f32 %v200, %v204
    %v233 = vadd.f32 %v232, %v208
    %v234 = vadd.f32 %v233, %v212
    %v235 = vrot.slane %v234, 4
    %v236 = vadd.f32 %v234, %v235
    %v237 = vrot.slane %v236, 2
    %v238 = vadd.f32 %v236, %v237
    %v239 = vrot.slane %v238, 1
    %v240 = vadd.f32 %v238, %v239
    %v241 = vadd.f32 %v201, %v205
    %v242 = vadd.f32 %v241, %v209
    %v243 = vadd.f32 %v242, %v213
    %v244 = vrot.slane %v243, 4
    %v245 = vadd.f32 %v243, %v244
    %v246 = vrot.slane %v245, 2
    %v247 = vadd.f32 %v245, %v246
    %v248 = vrot.slane %v247, 1
    %v249 = vadd.f32 %v247, %v248
    %v250 = vld [vmem:[%s2] sm:$0xf]
    %v252 = vperm.slane %v250, 0
    %v253 = vperm.slane %v250, 1
    %v254 = vperm.slane %v250, 2
    %v255 = vperm.slane %v250, 3
    %v260 = vadd.f32 %v222, %v252
    %v261 = vadd.f32 %v231, %v253
    %v262 = vadd.f32 %v240, %v254
    %v263 = vadd.f32 %v249, %v255
    %v268 = vrot.slane %v261, 7
    %v269 = vrot.slane %v262, 6
    %v270 = vrot.slane %v263, 5
    %vm271 = vcmask 1040384
    %v272 = vsel %vm271, %v260, %v268
    %vm273 = vcmask 1042434
    %v274 = vsel %vm273, %v269, %v270
    %vm275 = vcmask 1041408
    %v276 = vsel %vm275, %v272, %v274
    %v278 = vlaneseq
    %vm279 = vcmp.ge.s32.totalorder %v278, 0
    %vm280 = vcmp.lt.s32.totalorder %v278, 512
    %vm281 = vmand %vm279, %vm280
    %282 = vst.msk [vmem:[%s3] ss:$8 sm:$0xf] %vm281, %v276
    %283 = vst.msk [vmem:[%s3] ss:$8 sm:$0x0] %vm281, %v276
    %v284 = vld [vmem:[#allocation2] sm:$0xff]
    %v285 = vld [vmem:[#allocation2 + $0x8] sm:$0xff]
    %v286 = vld [vmem:[#allocation2 + $0x10] sm:$0xff]
    %v287 = vld [vmem:[#allocation2 + $0x18] sm:$0xff]
    %v288 = vld [vmem:[#allocation2 + $0x20] sm:$0xff]
    %v289 = vld [vmem:[#allocation2 + $0x28] sm:$0xff]
    %v290 = vld [vmem:[#allocation2 + $0x30] sm:$0xff]
    %v291 = vld [vmem:[#allocation2 + $0x38] sm:$0xff]
    %v292 = vld [vmem:[#allocation2 + $0x40] sm:$0xff]
    %v293 = vld [vmem:[#allocation2 + $0x48] sm:$0xff]
    %v294 = vld [vmem:[#allocation2 + $0x50] sm:$0xff]
    %v295 = vld [vmem:[#allocation2 + $0x58] sm:$0xff]
    %v296 = vld [vmem:[#allocation2 + $0x60] sm:$0xff]
    %v297 = vld [vmem:[#allocation2 + $0x68] sm:$0xff]
    %v298 = vld [vmem:[#allocation2 + $0x70] sm:$0xff]
    %v299 = vld [vmem:[#allocation2 + $0x78] sm:$0xff]
    %v300 = vld [vmem:[%s46] sm:$0xff]
    %v301 = vld [vmem:[%s46 + $0x8] sm:$0xff]
    %v302 = vld [vmem:[%s46 + $0x10] sm:$0xff]
    %v303 = vld [vmem:[%s46 + $0x18] sm:$0xff]
    %v304 = vld [vmem:[%s46 + $0x20] sm:$0xff]
    %v305 = vld [vmem:[%s46 + $0x28] sm:$0xff]
    %v306 = vld [vmem:[%s46 + $0x30] sm:$0xff]
    %v307 = vld [vmem:[%s46 + $0x38] sm:$0xff]
    %v308 = vld [vmem:[%s46 + $0x40] sm:$0xff]
    %v309 = vld [vmem:[%s46 + $0x48] sm:$0xff]
    %v310 = vld [vmem:[%s46 + $0x50] sm:$0xff]
    %v311 = vld [vmem:[%s46 + $0x58] sm:$0xff]
    %v312 = vld [vmem:[%s46 + $0x60] sm:$0xff]
    %v313 = vld [vmem:[%s46 + $0x68] sm:$0xff]
    %v314 = vld [vmem:[%s46 + $0x70] sm:$0xff]
    %v315 = vld [vmem:[%s46 + $0x78] sm:$0xff]
    %v316 = vld [vmem:[%s63] sm:$0xff]
    %v317 = vld [vmem:[%s63 + $0x8] sm:$0xff]
    %v318 = vld [vmem:[%s63 + $0x10] sm:$0xff]
    %v319 = vld [vmem:[%s63 + $0x18] sm:$0xff]
    %v320 = vld [vmem:[%s63 + $0x20] sm:$0xff]
    %v321 = vld [vmem:[%s63 + $0x28] sm:$0xff]
    %v322 = vld [vmem:[%s63 + $0x30] sm:$0xff]
    %v323 = vld [vmem:[%s63 + $0x38] sm:$0xff]
    %v324 = vld [vmem:[%s63 + $0x40] sm:$0xff]
    %v325 = vld [vmem:[%s63 + $0x48] sm:$0xff]
    %v326 = vld [vmem:[%s63 + $0x50] sm:$0xff]
    %v327 = vld [vmem:[%s63 + $0x58] sm:$0xff]
    %v328 = vld [vmem:[%s63 + $0x60] sm:$0xff]
    %v329 = vld [vmem:[%s63 + $0x68] sm:$0xff]
    %v330 = vld [vmem:[%s63 + $0x70] sm:$0xff]
    %v331 = vld [vmem:[%s63 + $0x78] sm:$0xff]
    %v332 = vld [vmem:[%s80] sm:$0xff]
    %v333 = vld [vmem:[%s80 + $0x8] sm:$0xff]
    %v334 = vld [vmem:[%s80 + $0x10] sm:$0xff]
    %v335 = vld [vmem:[%s80 + $0x18] sm:$0xff]
    %v336 = vld [vmem:[%s80 + $0x20] sm:$0xff]
    %v337 = vld [vmem:[%s80 + $0x28] sm:$0xff]
    %v338 = vld [vmem:[%s80 + $0x30] sm:$0xff]
    %v339 = vld [vmem:[%s80 + $0x38] sm:$0xff]
    %v340 = vld [vmem:[%s80 + $0x40] sm:$0xff]
    %v341 = vld [vmem:[%s80 + $0x48] sm:$0xff]
    %v342 = vld [vmem:[%s80 + $0x50] sm:$0xff]
    %v343 = vld [vmem:[%s80 + $0x58] sm:$0xff]
    %v344 = vld [vmem:[%s80 + $0x60] sm:$0xff]
    %v345 = vld [vmem:[%s80 + $0x68] sm:$0xff]
    %v346 = vld [vmem:[%s80 + $0x70] sm:$0xff]
    %v347 = vld [vmem:[%s80 + $0x78] sm:$0xff]
    %s348 = scalar_lea.vmem %s0, 1
    %v349 = vld [vmem:[%s348] ss:$8 sm:$0xf]
    %s350 = scalar_lea.vmem %s98, 1
    %v351 = vld [vmem:[%s350] ss:$8 sm:$0xf]
    %v353 = vperm.slane %v349, 0
    %v354 = vperm.slane %v349, 1
    %v355 = vperm.slane %v349, 2
    %v356 = vperm.slane %v349, 3
    %v361 = vmul.f32 %v284, %v353
    %v362 = vmul.f32 %v285, %v354
    %v363 = vmul.f32 %v286, %v355
    %v364 = vmul.f32 %v287, %v356
    %v365 = vmul.f32 %v288, %v353
    %v366 = vmul.f32 %v289, %v354
    %v367 = vmul.f32 %v290, %v355
    %v368 = vmul.f32 %v291, %v356
    %v369 = vmul.f32 %v292, %v353
    %v370 = vmul.f32 %v293, %v354
    %v371 = vmul.f32 %v294, %v355
    %v372 = vmul.f32 %v295, %v356
    %v373 = vmul.f32 %v296, %v353
    %v374 = vmul.f32 %v297, %v354
    %v375 = vmul.f32 %v298, %v355
    %v376 = vmul.f32 %v299, %v356
    %v378 = vperm.slane %v351, 0
    %v379 = vperm.slane %v351, 1
    %v380 = vperm.slane %v351, 2
    %v381 = vperm.slane %v351, 3
    %v386 = vmul.f32 %v300, %v378
    %v387 = vmul.f32 %v301, %v379
    %v388 = vmul.f32 %v302, %v380
    %v389 = vmul.f32 %v303, %v381
    %v390 = vmul.f32 %v304, %v378
    %v391 = vmul.f32 %v305, %v379
    %v392 = vmul.f32 %v306, %v380
    %v393 = vmul.f32 %v307, %v381
    %v394 = vmul.f32 %v308, %v378
    %v395 = vmul.f32 %v309, %v379
    %v396 = vmul.f32 %v310, %v380
    %v397 = vmul.f32 %v311, %v381
    %v398 = vmul.f32 %v312, %v378
    %v399 = vmul.f32 %v313, %v379
    %v400 = vmul.f32 %v314, %v380
    %v401 = vmul.f32 %v315, %v381
    %v402 = vadd.f32 %v361, %v386
    %v403 = vadd.f32 %v362, %v387
    %v404 = vadd.f32 %v363, %v388
    %v405 = vadd.f32 %v364, %v389
    %v406 = vadd.f32 %v365, %v390
    %v407 = vadd.f32 %v366, %v391
    %v408 = vadd.f32 %v367, %v392
    %v409 = vadd.f32 %v368, %v393
    %v410 = vadd.f32 %v369, %v394
    %v411 = vadd.f32 %v370, %v395
    %v412 = vadd.f32 %v371, %v396
    %v413 = vadd.f32 %v372, %v397
    %v414 = vadd.f32 %v373, %v398
    %v415 = vadd.f32 %v374, %v399
    %v416 = vadd.f32 %v375, %v400
    %v417 = vadd.f32 %v376, %v401
    %v418 = vadd.f32 %v402, %v316
    %v419 = vadd.f32 %v403, %v317
    %v420 = vadd.f32 %v404, %v318
    %v421 = vadd.f32 %v405, %v319
    %v422 = vadd.f32 %v406, %v320
    %v423 = vadd.f32 %v407, %v321
    %v424 = vadd.f32 %v408, %v322
    %v425 = vadd.f32 %v409, %v323
    %v426 = vadd.f32 %v410, %v324
    %v427 = vadd.f32 %v411, %v325
    %v428 = vadd.f32 %v412, %v326
    %v429 = vadd.f32 %v413, %v327
    %v430 = vadd.f32 %v414, %v328
    %v431 = vadd.f32 %v415, %v329
    %v432 = vadd.f32 %v416, %v330
    %v433 = vadd.f32 %v417, %v331
    %v434 = vtanh.pop %v418
    %v435 = vtanh.pop %v419
    %v436 = vtanh.pop %v420
    %v437 = vtanh.pop %v421
    %v438 = vtanh.pop %v422
    %v439 = vtanh.pop %v423
    %v440 = vtanh.pop %v424
    %v441 = vtanh.pop %v425
    %v442 = vtanh.pop %v426
    %v443 = vtanh.pop %v427
    %v444 = vtanh.pop %v428
    %v445 = vtanh.pop %v429
    %v446 = vtanh.pop %v430
    %v447 = vtanh.pop %v431
    %v448 = vtanh.pop %v432
    %v449 = vtanh.pop %v433
    %v450 = vmul.f32 %v434, %v332
    %v451 = vmul.f32 %v435, %v333
    %v452 = vmul.f32 %v436, %v334
    %v453 = vmul.f32 %v437, %v335
    %v454 = vmul.f32 %v438, %v336
    %v455 = vmul.f32 %v439, %v337
    %v456 = vmul.f32 %v440, %v338
    %v457 = vmul.f32 %v441, %v339
    %v458 = vmul.f32 %v442, %v340
    %v459 = vmul.f32 %v443, %v341
    %v460 = vmul.f32 %v444, %v342
    %v461 = vmul.f32 %v445, %v343
    %v462 = vmul.f32 %v446, %v344
    %v463 = vmul.f32 %v447, %v345
    %v464 = vmul.f32 %v448, %v346
    %v465 = vmul.f32 %v449, %v347
    %v466 = vadd.f32 %v450, %v454
    %v467 = vadd.f32 %v466, %v458
    %v468 = vadd.f32 %v467, %v462
    %v469 = vrot.slane %v468, 4
    %v470 = vadd.f32 %v468, %v469
    %v471 = vrot.slane %v470, 2
    %v472 = vadd.f32 %v470, %v471
    %v473 = vrot.slane %v472, 1
    %v474 = vadd.f32 %v472, %v473
    %v475 = vadd.f32 %v451, %v455
    %v476 = vadd.f32 %v475, %v459
    %v477 = vadd.f32 %v476, %v463
    %v478 = vrot.slane %v477, 4
    %v479 = vadd.f32 %v477, %v478
    %v480 = vrot.slane %v479, 2
    %v481 = vadd.f32 %v479, %v480
    %v482 = vrot.slane %v481, 1
    %v483 = vadd.f32 %v481, %v482
    %v484 = vadd.f32 %v452, %v456
    %v485 = vadd.f32 %v484, %v460
    %v486 = vadd.f32 %v485, %v464
    %v487 = vrot.slane %v486, 4
    %v488 = vadd.f32 %v486, %v487
    %v489 = vrot.slane %v488, 2
    %v490 = vadd.f32 %v488, %v489
    %v491 = vrot.slane %v490, 1
    %v492 = vadd.f32 %v490, %v491
    %v493 = vadd.f32 %v453, %v457
    %v494 = vadd.f32 %v493, %v461
    %v495 = vadd.f32 %v494, %v465
    %v496 = vrot.slane %v495, 4
    %v497 = vadd.f32 %v495, %v496
    %v498 = vrot.slane %v497, 2
    %v499 = vadd.f32 %v497, %v498
    %v500 = vrot.slane %v499, 1
    %v501 = vadd.f32 %v499, %v500
    %v502 = vld [vmem:[%s2] sm:$0xf]
    %v504 = vperm.slane %v502, 0
    %v505 = vperm.slane %v502, 1
    %v506 = vperm.slane %v502, 2
    %v507 = vperm.slane %v502, 3
    %v512 = vadd.f32 %v474, %v504
    %v513 = vadd.f32 %v483, %v505
    %v514 = vadd.f32 %v492, %v506
    %v515 = vadd.f32 %v501, %v507
    %v520 = vrot.slane %v513, 7
    %v521 = vrot.slane %v514, 6
    %v522 = vrot.slane %v515, 5
    %v523 = vsel %vm271, %v512, %v520
    %v524 = vsel %vm273, %v521, %v522
    %v525 = vsel %vm275, %v523, %v524
    %s527 = scalar_lea.vmem %s3, 1
    %528 = vst.msk [vmem:[%s527] ss:$8 sm:$0xf] %vm281, %v525
    %529 = vst.msk [vmem:[%s527] ss:$8 sm:$0x0] %vm281, %v525
    %v530 = vld [vmem:[#allocation2] sm:$0xff]
    %v531 = vld [vmem:[#allocation2 + $0x8] sm:$0xff]
    %v532 = vld [vmem:[#allocation2 + $0x10] sm:$0xff]
    %v533 = vld [vmem:[#allocation2 + $0x18] sm:$0xff]
    %v534 = vld [vmem:[#allocation2 + $0x20] sm:$0xff]
    %v535 = vld [vmem:[#allocation2 + $0x28] sm:$0xff]
    %v536 = vld [vmem:[#allocation2 + $0x30] sm:$0xff]
    %v537 = vld [vmem:[#allocation2 + $0x38] sm:$0xff]
    %v538 = vld [vmem:[#allocation2 + $0x40] sm:$0xff]
    %v539 = vld [vmem:[#allocation2 + $0x48] sm:$0xff]
    %v540 = vld [vmem:[#allocation2 + $0x50] sm:$0xff]
    %v541 = vld [vmem:[#allocation2 + $0x58] sm:$0xff]
    %v542 = vld [vmem:[#allocation2 + $0x60] sm:$0xff]
    %v543 = vld [vmem:[#allocation2 + $0x68] sm:$0xff]
    %v544 = vld [vmem:[#allocation2 + $0x70] sm:$0xff]
    %v545 = vld [vmem:[#allocation2 + $0x78] sm:$0xff]
    %v546 = vld [vmem:[%s46] sm:$0xff]
    %v547 = vld [vmem:[%s46 + $0x8] sm:$0xff]
    %v548 = vld [vmem:[%s46 + $0x10] sm:$0xff]
    %v549 = vld [vmem:[%s46 + $0x18] sm:$0xff]
    %v550 = vld [vmem:[%s46 + $0x20] sm:$0xff]
    %v551 = vld [vmem:[%s46 + $0x28] sm:$0xff]
    %v552 = vld [vmem:[%s46 + $0x30] sm:$0xff]
    %v553 = vld [vmem:[%s46 + $0x38] sm:$0xff]
    %v554 = vld [vmem:[%s46 + $0x40] sm:$0xff]
    %v555 = vld [vmem:[%s46 + $0x48] sm:$0xff]
    %v556 = vld [vmem:[%s46 + $0x50] sm:$0xff]
    %v557 = vld [vmem:[%s46 + $0x58] sm:$0xff]
    %v558 = vld [vmem:[%s46 + $0x60] sm:$0xff]
    %v559 = vld [vmem:[%s46 + $0x68] sm:$0xff]
    %v560 = vld [vmem:[%s46 + $0x70] sm:$0xff]
    %v561 = vld [vmem:[%s46 + $0x78] sm:$0xff]
    %v562 = vld [vmem:[%s63] sm:$0xff]
    %v563 = vld [vmem:[%s63 + $0x8] sm:$0xff]
    %v564 = vld [vmem:[%s63 + $0x10] sm:$0xff]
    %v565 = vld [vmem:[%s63 + $0x18] sm:$0xff]
    %v566 = vld [vmem:[%s63 + $0x20] sm:$0xff]
    %v567 = vld [vmem:[%s63 + $0x28] sm:$0xff]
    %v568 = vld [vmem:[%s63 + $0x30] sm:$0xff]
    %v569 = vld [vmem:[%s63 + $0x38] sm:$0xff]
    %v570 = vld [vmem:[%s63 + $0x40] sm:$0xff]
    %v571 = vld [vmem:[%s63 + $0x48] sm:$0xff]
    %v572 = vld [vmem:[%s63 + $0x50] sm:$0xff]
    %v573 = vld [vmem:[%s63 + $0x58] sm:$0xff]
    %v574 = vld [vmem:[%s63 + $0x60] sm:$0xff]
    %v575 = vld [vmem:[%s63 + $0x68] sm:$0xff]
    %v576 = vld [vmem:[%s63 + $0x70] sm:$0xff]
    %v577 = vld [vmem:[%s63 + $0x78] sm:$0xff]
    %v578 = vld [vmem:[%s80] sm:$0xff]
    %v579 = vld [vmem:[%s80 + $0x8] sm:$0xff]
    %v580 = vld [vmem:[%s80 + $0x10] sm:$0xff]
    %v581 = vld [vmem:[%s80 + $0x18] sm:$0xff]
    %v582 = vld [vmem:[%s80 + $0x20] sm:$0xff]
    %v583 = vld [vmem:[%s80 + $0x28] sm:$0xff]
    %v584 = vld [vmem:[%s80 + $0x30] sm:$0xff]
    %v585 = vld [vmem:[%s80 + $0x38] sm:$0xff]
    %v586 = vld [vmem:[%s80 + $0x40] sm:$0xff]
    %v587 = vld [vmem:[%s80 + $0x48] sm:$0xff]
    %v588 = vld [vmem:[%s80 + $0x50] sm:$0xff]
    %v589 = vld [vmem:[%s80 + $0x58] sm:$0xff]
    %v590 = vld [vmem:[%s80 + $0x60] sm:$0xff]
    %v591 = vld [vmem:[%s80 + $0x68] sm:$0xff]
    %v592 = vld [vmem:[%s80 + $0x70] sm:$0xff]
    %v593 = vld [vmem:[%s80 + $0x78] sm:$0xff]
    %s594 = scalar_lea.vmem %s0, 2
    %v595 = vld [vmem:[%s594] ss:$8 sm:$0xf]
    %s596 = scalar_lea.vmem %s98, 2
    %v597 = vld [vmem:[%s596] ss:$8 sm:$0xf]
    %v599 = vperm.slane %v595, 0
    %v600 = vperm.slane %v595, 1
    %v601 = vperm.slane %v595, 2
    %v602 = vperm.slane %v595, 3
    %v607 = vmul.f32 %v530, %v599
    %v608 = vmul.f32 %v531, %v600
    %v609 = vmul.f32 %v532, %v601
    %v610 = vmul.f32 %v533, %v602
    %v611 = vmul.f32 %v534, %v599
    %v612 = vmul.f32 %v535, %v600
    %v613 = vmul.f32 %v536, %v601
    %v614 = vmul.f32 %v537, %v602
    %v615 = vmul.f32 %v538, %v599
    %v616 = vmul.f32 %v539, %v600
    %v617 = vmul.f32 %v540, %v601
    %v618 = vmul.f32 %v541, %v602
    %v619 = vmul.f32 %v542, %v599
    %v620 = vmul.f32 %v543, %v600
    %v621 = vmul.f32 %v544, %v601
    %v622 = vmul.f32 %v545, %v602
    %v624 = vperm.slane %v597, 0
    %v625 = vperm.slane %v597, 1
    %v626 = vperm.slane %v597, 2
    %v627 = vperm.slane %v597, 3
    %v632 = vmul.f32 %v546, %v624
    %v633 = vmul.f32 %v547, %v625
    %v634 = vmul.f32 %v548, %v626
    %v635 = vmul.f32 %v549, %v627
    %v636 = vmul.f32 %v550, %v624
    %v637 = vmul.f32 %v551, %v625
    %v638 = vmul.f32 %v552, %v626
    %v639 = vmul.f32 %v553, %v627
    %v640 = vmul.f32 %v554, %v624
    %v641 = vmul.f32 %v555, %v625
    %v642 = vmul.f32 %v556, %v626
    %v643 = vmul.f32 %v557, %v627
    %v644 = vmul.f32 %v558, %v624
    %v645 = vmul.f32 %v559, %v625
    %v646 = vmul.f32 %v560, %v626
    %v647 = vmul.f32 %v561, %v627
    %v648 = vadd.f32 %v607, %v632
    %v649 = vadd.f32 %v608, %v633
    %v650 = vadd.f32 %v609, %v634
    %v651 = vadd.f32 %v610, %v635
    %v652 = vadd.f32 %v611, %v636
    %v653 = vadd.f32 %v612, %v637
    %v654 = vadd.f32 %v613, %v638
    %v655 = vadd.f32 %v614, %v639
    %v656 = vadd.f32 %v615, %v640
    %v657 = vadd.f32 %v616, %v641
    %v658 = vadd.f32 %v617, %v642
    %v659 = vadd.f32 %v618, %v643
    %v660 = vadd.f32 %v619, %v644
    %v661 = vadd.f32 %v620, %v645
    %v662 = vadd.f32 %v621, %v646
    %v663 = vadd.f32 %v622, %v647
    %v664 = vadd.f32 %v648, %v562
    %v665 = vadd.f32 %v649, %v563
    %v666 = vadd.f32 %v650, %v564
    %v667 = vadd.f32 %v651, %v565
    %v668 = vadd.f32 %v652, %v566
    %v669 = vadd.f32 %v653, %v567
    %v670 = vadd.f32 %v654, %v568
    %v671 = vadd.f32 %v655, %v569
    %v672 = vadd.f32 %v656, %v570
    %v673 = vadd.f32 %v657, %v571
    %v674 = vadd.f32 %v658, %v572
    %v675 = vadd.f32 %v659, %v573
    %v676 = vadd.f32 %v660, %v574
    %v677 = vadd.f32 %v661, %v575
    %v678 = vadd.f32 %v662, %v576
    %v679 = vadd.f32 %v663, %v577
    %v680 = vtanh.pop %v664
    %v681 = vtanh.pop %v665
    %v682 = vtanh.pop %v666
    %v683 = vtanh.pop %v667
    %v684 = vtanh.pop %v668
    %v685 = vtanh.pop %v669
    %v686 = vtanh.pop %v670
    %v687 = vtanh.pop %v671
    %v688 = vtanh.pop %v672
    %v689 = vtanh.pop %v673
    %v690 = vtanh.pop %v674
    %v691 = vtanh.pop %v675
    %v692 = vtanh.pop %v676
    %v693 = vtanh.pop %v677
    %v694 = vtanh.pop %v678
    %v695 = vtanh.pop %v679
    %v696 = vmul.f32 %v680, %v578
    %v697 = vmul.f32 %v681, %v579
    %v698 = vmul.f32 %v682, %v580
    %v699 = vmul.f32 %v683, %v581
    %v700 = vmul.f32 %v684, %v582
    %v701 = vmul.f32 %v685, %v583
    %v702 = vmul.f32 %v686, %v584
    %v703 = vmul.f32 %v687, %v585
    %v704 = vmul.f32 %v688, %v586
    %v705 = vmul.f32 %v689, %v587
    %v706 = vmul.f32 %v690, %v588
    %v707 = vmul.f32 %v691, %v589
    %v708 = vmul.f32 %v692, %v590
    %v709 = vmul.f32 %v693, %v591
    %v710 = vmul.f32 %v694, %v592
    %v711 = vmul.f32 %v695, %v593
    %v712 = vadd.f32 %v696, %v700
    %v713 = vadd.f32 %v712, %v704
    %v714 = vadd.f32 %v713, %v708
    %v715 = vrot.slane %v714, 4
    %v716 = vadd.f32 %v714, %v715
    %v717 = vrot.slane %v716, 2
    %v718 = vadd.f32 %v716, %v717
    %v719 = vrot.slane %v718, 1
    %v720 = vadd.f32 %v718, %v719
    %v721 = vadd.f32 %v697, %v701
    %v722 = vadd.f32 %v721, %v705
    %v723 = vadd.f32 %v722, %v709
    %v724 = vrot.slane %v723, 4
    %v725 = vadd.f32 %v723, %v724
    %v726 = vrot.slane %v725, 2
    %v727 = vadd.f32 %v725, %v726
    %v728 = vrot.slane %v727, 1
    %v729 = vadd.f32 %v727, %v728
    %v730 = vadd.f32 %v698, %v702
    %v731 = vadd.f32 %v730, %v706
    %v732 = vadd.f32 %v731, %v710
    %v733 = vrot.slane %v732, 4
    %v734 = vadd.f32 %v732, %v733
    %v735 = vrot.slane %v734, 2
    %v736 = vadd.f32 %v734, %v735
    %v737 = vrot.slane %v736, 1
    %v738 = vadd.f32 %v736, %v737
    %v739 = vadd.f32 %v699, %v703
    %v740 = vadd.f32 %v739, %v707
    %v741 = vadd.f32 %v740, %v711
    %v742 = vrot.slane %v741, 4
    %v743 = vadd.f32 %v741, %v742
    %v744 = vrot.slane %v743, 2
    %v745 = vadd.f32 %v743, %v744
    %v746 = vrot.slane %v745, 1
    %v747 = vadd.f32 %v745, %v746
    %v748 = vld [vmem:[%s2] sm:$0xf]
    %v750 = vperm.slane %v748, 0
    %v751 = vperm.slane %v748, 1
    %v752 = vperm.slane %v748, 2
    %v753 = vperm.slane %v748, 3
    %v758 = vadd.f32 %v720, %v750
    %v759 = vadd.f32 %v729, %v751
    %v760 = vadd.f32 %v738, %v752
    %v761 = vadd.f32 %v747, %v753
    %v766 = vrot.slane %v759, 7
    %v767 = vrot.slane %v760, 6
    %v768 = vrot.slane %v761, 5
    %v769 = vsel %vm271, %v758, %v766
    %v770 = vsel %vm273, %v767, %v768
    %v771 = vsel %vm275, %v769, %v770
    %s773 = scalar_lea.vmem %s3, 2
    %774 = vst.msk [vmem:[%s773] ss:$8 sm:$0xf] %vm281, %v771
    %775 = vst.msk [vmem:[%s773] ss:$8 sm:$0x0] %vm281, %v771
    %v776 = vld [vmem:[#allocation2] sm:$0xff]
    %v777 = vld [vmem:[#allocation2 + $0x8] sm:$0xff]
    %v778 = vld [vmem:[#allocation2 + $0x10] sm:$0xff]
    %v779 = vld [vmem:[#allocation2 + $0x18] sm:$0xff]
    %v780 = vld [vmem:[#allocation2 + $0x20] sm:$0xff]
    %v781 = vld [vmem:[#allocation2 + $0x28] sm:$0xff]
    %v782 = vld [vmem:[#allocation2 + $0x30] sm:$0xff]
    %v783 = vld [vmem:[#allocation2 + $0x38] sm:$0xff]
    %v784 = vld [vmem:[#allocation2 + $0x40] sm:$0xff]
    %v785 = vld [vmem:[#allocation2 + $0x48] sm:$0xff]
    %v786 = vld [vmem:[#allocation2 + $0x50] sm:$0xff]
    %v787 = vld [vmem:[#allocation2 + $0x58] sm:$0xff]
    %v788 = vld [vmem:[#allocation2 + $0x60] sm:$0xff]
    %v789 = vld [vmem:[#allocation2 + $0x68] sm:$0xff]
    %v790 = vld [vmem:[#allocation2 + $0x70] sm:$0xff]
    %v791 = vld [vmem:[#allocation2 + $0x78] sm:$0xff]
    %v792 = vld [vmem:[%s46] sm:$0xff]
    %v793 = vld [vmem:[%s46 + $0x8] sm:$0xff]
    %v794 = vld [vmem:[%s46 + $0x10] sm:$0xff]
    %v795 = vld [vmem:[%s46 + $0x18] sm:$0xff]
    %v796 = vld [vmem:[%s46 + $0x20] sm:$0xff]
    %v797 = vld [vmem:[%s46 + $0x28] sm:$0xff]
    %v798 = vld [vmem:[%s46 + $0x30] sm:$0xff]
    %v799 = vld [vmem:[%s46 + $0x38] sm:$0xff]
    %v800 = vld [vmem:[%s46 + $0x40] sm:$0xff]
    %v801 = vld [vmem:[%s46 + $0x48] sm:$0xff]
    %v802 = vld [vmem:[%s46 + $0x50] sm:$0xff]
    %v803 = vld [vmem:[%s46 + $0x58] sm:$0xff]
    %v804 = vld [vmem:[%s46 + $0x60] sm:$0xff]
    %v805 = vld [vmem:[%s46 + $0x68] sm:$0xff]
    %v806 = vld [vmem:[%s46 + $0x70] sm:$0xff]
    %v807 = vld [vmem:[%s46 + $0x78] sm:$0xff]
    %v808 = vld [vmem:[%s63] sm:$0xff]
    %v809 = vld [vmem:[%s63 + $0x8] sm:$0xff]
    %v810 = vld [vmem:[%s63 + $0x10] sm:$0xff]
    %v811 = vld [vmem:[%s63 + $0x18] sm:$0xff]
    %v812 = vld [vmem:[%s63 + $0x20] sm:$0xff]
    %v813 = vld [vmem:[%s63 + $0x28] sm:$0xff]
    %v814 = vld [vmem:[%s63 + $0x30] sm:$0xff]
    %v815 = vld [vmem:[%s63 + $0x38] sm:$0xff]
    %v816 = vld [vmem:[%s63 + $0x40] sm:$0xff]
    %v817 = vld [vmem:[%s63 + $0x48] sm:$0xff]
    %v818 = vld [vmem:[%s63 + $0x50] sm:$0xff]
    %v819 = vld [vmem:[%s63 + $0x58] sm:$0xff]
    %v820 = vld [vmem:[%s63 + $0x60] sm:$0xff]
    %v821 = vld [vmem:[%s63 + $0x68] sm:$0xff]
    %v822 = vld [vmem:[%s63 + $0x70] sm:$0xff]
    %v823 = vld [vmem:[%s63 + $0x78] sm:$0xff]
    %v824 = vld [vmem:[%s80] sm:$0xff]
    %v825 = vld [vmem:[%s80 + $0x8] sm:$0xff]
    %v826 = vld [vmem:[%s80 + $0x10] sm:$0xff]
    %v827 = vld [vmem:[%s80 + $0x18] sm:$0xff]
    %v828 = vld [vmem:[%s80 + $0x20] sm:$0xff]
    %v829 = vld [vmem:[%s80 + $0x28] sm:$0xff]
    %v830 = vld [vmem:[%s80 + $0x30] sm:$0xff]
    %v831 = vld [vmem:[%s80 + $0x38] sm:$0xff]
    %v832 = vld [vmem:[%s80 + $0x40] sm:$0xff]
    %v833 = vld [vmem:[%s80 + $0x48] sm:$0xff]
    %v834 = vld [vmem:[%s80 + $0x50] sm:$0xff]
    %v835 = vld [vmem:[%s80 + $0x58] sm:$0xff]
    %v836 = vld [vmem:[%s80 + $0x60] sm:$0xff]
    %v837 = vld [vmem:[%s80 + $0x68] sm:$0xff]
    %v838 = vld [vmem:[%s80 + $0x70] sm:$0xff]
    %v839 = vld [vmem:[%s80 + $0x78] sm:$0xff]
    %s840 = scalar_lea.vmem %s0, 3
    %v841 = vld [vmem:[%s840] ss:$8 sm:$0xf]
    %s842 = scalar_lea.vmem %s98, 3
    %v843 = vld [vmem:[%s842] ss:$8 sm:$0xf]
    %v845 = vperm.slane %v841, 0
    %v846 = vperm.slane %v841, 1
    %v847 = vperm.slane %v841, 2
    %v848 = vperm.slane %v841, 3
    %v853 = vmul.f32 %v776, %v845
    %v854 = vmul.f32 %v777, %v846
    %v855 = vmul.f32 %v778, %v847
    %v856 = vmul.f32 %v779, %v848
    %v857 = vmul.f32 %v780, %v845
    %v858 = vmul.f32 %v781, %v846
    %v859 = vmul.f32 %v782, %v847
    %v860 = vmul.f32 %v783, %v848
    %v861 = vmul.f32 %v784, %v845
    %v862 = vmul.f32 %v785, %v846
    %v863 = vmul.f32 %v786, %v847
    %v864 = vmul.f32 %v787, %v848
    %v865 = vmul.f32 %v788, %v845
    %v866 = vmul.f32 %v789, %v846
    %v867 = vmul.f32 %v790, %v847
    %v868 = vmul.f32 %v791, %v848
    %v870 = vperm.slane %v843, 0
    %v871 = vperm.slane %v843, 1
    %v872 = vperm.slane %v843, 2
    %v873 = vperm.slane %v843, 3
    %v878 = vmul.f32 %v792, %v870
    %v879 = vmul.f32 %v793, %v871
    %v880 = vmul.f32 %v794, %v872
    %v881 = vmul.f32 %v795, %v873
    %v882 = vmul.f32 %v796, %v870
    %v883 = vmul.f32 %v797, %v871
    %v884 = vmul.f32 %v798, %v872
    %v885 = vmul.f32 %v799, %v873
    %v886 = vmul.f32 %v800, %v870
    %v887 = vmul.f32 %v801, %v871
    %v888 = vmul.f32 %v802, %v872
    %v889 = vmul.f32 %v803, %v873
    %v890 = vmul.f32 %v804, %v870
    %v891 = vmul.f32 %v805, %v871
    %v892 = vmul.f32 %v806, %v872
    %v893 = vmul.f32 %v807, %v873
    %v894 = vadd.f32 %v853, %v878
    %v895 = vadd.f32 %v854, %v879
    %v896 = vadd.f32 %v855, %v880
    %v897 = vadd.f32 %v856, %v881
    %v898 = vadd.f32 %v857, %v882
    %v899 = vadd.f32 %v858, %v883
    %v900 = vadd.f32 %v859, %v884
    %v901 = vadd.f32 %v860, %v885
    %v902 = vadd.f32 %v861, %v886
    %v903 = vadd.f32 %v862, %v887
    %v904 = vadd.f32 %v863, %v888
    %v905 = vadd.f32 %v864, %v889
    %v906 = vadd.f32 %v865, %v890
    %v907 = vadd.f32 %v866, %v891
    %v908 = vadd.f32 %v867, %v892
    %v909 = vadd.f32 %v868, %v893
    %v910 = vadd.f32 %v894, %v808
    %v911 = vadd.f32 %v895, %v809
    %v912 = vadd.f32 %v896, %v810
    %v913 = vadd.f32 %v897, %v811
    %v914 = vadd.f32 %v898, %v812
    %v915 = vadd.f32 %v899, %v813
    %v916 = vadd.f32 %v900, %v814
    %v917 = vadd.f32 %v901, %v815
    %v918 = vadd.f32 %v902, %v816
    %v919 = vadd.f32 %v903, %v817
    %v920 = vadd.f32 %v904, %v818
    %v921 = vadd.f32 %v905, %v819
    %v922 = vadd.f32 %v906, %v820
    %v923 = vadd.f32 %v907, %v821
    %v924 = vadd.f32 %v908, %v822
    %v925 = vadd.f32 %v909, %v823
    %v926 = vtanh.pop %v910
    %v927 = vtanh.pop %v911
    %v928 = vtanh.pop %v912
    %v929 = vtanh.pop %v913
    %v930 = vtanh.pop %v914
    %v931 = vtanh.pop %v915
    %v932 = vtanh.pop %v916
    %v933 = vtanh.pop %v917
    %v934 = vtanh.pop %v918
    %v935 = vtanh.pop %v919
    %v936 = vtanh.pop %v920
    %v937 = vtanh.pop %v921
    %v938 = vtanh.pop %v922
    %v939 = vtanh.pop %v923
    %v940 = vtanh.pop %v924
    %v941 = vtanh.pop %v925
    %v942 = vmul.f32 %v926, %v824
    %v943 = vmul.f32 %v927, %v825
    %v944 = vmul.f32 %v928, %v826
    %v945 = vmul.f32 %v929, %v827
    %v946 = vmul.f32 %v930, %v828
    %v947 = vmul.f32 %v931, %v829
    %v948 = vmul.f32 %v932, %v830
    %v949 = vmul.f32 %v933, %v831
    %v950 = vmul.f32 %v934, %v832
    %v951 = vmul.f32 %v935, %v833
    %v952 = vmul.f32 %v936, %v834
    %v953 = vmul.f32 %v937, %v835
    %v954 = vmul.f32 %v938, %v836
    %v955 = vmul.f32 %v939, %v837
    %v956 = vmul.f32 %v940, %v838
    %v957 = vmul.f32 %v941, %v839
    %v958 = vadd.f32 %v942, %v946
    %v959 = vadd.f32 %v958, %v950
    %v960 = vadd.f32 %v959, %v954
    %v961 = vrot.slane %v960, 4
    %v962 = vadd.f32 %v960, %v961
    %v963 = vrot.slane %v962, 2
    %v964 = vadd.f32 %v962, %v963
    %v965 = vrot.slane %v964, 1
    %v966 = vadd.f32 %v964, %v965
    %v967 = vadd.f32 %v943, %v947
    %v968 = vadd.f32 %v967, %v951
    %v969 = vadd.f32 %v968, %v955
    %v970 = vrot.slane %v969, 4
    %v971 = vadd.f32 %v969, %v970
    %v972 = vrot.slane %v971, 2
    %v973 = vadd.f32 %v971, %v972
    %v974 = vrot.slane %v973, 1
    %v975 = vadd.f32 %v973, %v974
    %v976 = vadd.f32 %v944, %v948
    %v977 = vadd.f32 %v976, %v952
    %v978 = vadd.f32 %v977, %v956
    %v979 = vrot.slane %v978, 4
    %v980 = vadd.f32 %v978, %v979
    %v981 = vrot.slane %v980, 2
    %v982 = vadd.f32 %v980, %v981
    %v983 = vrot.slane %v982, 1
    %v984 = vadd.f32 %v982, %v983
    %v985 = vadd.f32 %v945, %v949
    %v986 = vadd.f32 %v985, %v953
    %v987 = vadd.f32 %v986, %v957
    %v988 = vrot.slane %v987, 4
    %v989 = vadd.f32 %v987, %v988
    %v990 = vrot.slane %v989, 2
    %v991 = vadd.f32 %v989, %v990
    %v992 = vrot.slane %v991, 1
    %v993 = vadd.f32 %v991, %v992
    %v994 = vld [vmem:[%s2] sm:$0xf]
    %v996 = vperm.slane %v994, 0
    %v997 = vperm.slane %v994, 1
    %v998 = vperm.slane %v994, 2
    %v999 = vperm.slane %v994, 3
    %v1004 = vadd.f32 %v966, %v996
    %v1005 = vadd.f32 %v975, %v997
    %v1006 = vadd.f32 %v984, %v998
    %v1007 = vadd.f32 %v993, %v999
    %v1012 = vrot.slane %v1005, 7
    %v1013 = vrot.slane %v1006, 6
    %v1014 = vrot.slane %v1007, 5
    %v1015 = vsel %vm271, %v1004, %v1012
    %v1016 = vsel %vm273, %v1013, %v1014
    %v1017 = vsel %vm275, %v1015, %v1016
    %s1019 = scalar_lea.vmem %s3, 3
    %1020 = vst.msk [vmem:[%s1019] ss:$8 sm:$0xf] %vm281, %v1017
    %1021 = vst.msk [vmem:[%s1019] ss:$8 sm:$0x0] %vm281, %v1017
    %v1022 = vld [vmem:[#allocation2] sm:$0xff]
    %v1023 = vld [vmem:[#allocation2 + $0x8] sm:$0xff]
    %v1024 = vld [vmem:[#allocation2 + $0x10] sm:$0xff]
    %v1025 = vld [vmem:[#allocation2 + $0x18] sm:$0xff]
    %v1026 = vld [vmem:[#allocation2 + $0x20] sm:$0xff]
    %v1027 = vld [vmem:[#allocation2 + $0x28] sm:$0xff]
    %v1028 = vld [vmem:[#allocation2 + $0x30] sm:$0xff]
    %v1029 = vld [vmem:[#allocation2 + $0x38] sm:$0xff]
    %v1030 = vld [vmem:[#allocation2 + $0x40] sm:$0xff]
    %v1031 = vld [vmem:[#allocation2 + $0x48] sm:$0xff]
    %v1032 = vld [vmem:[#allocation2 + $0x50] sm:$0xff]
    %v1033 = vld [vmem:[#allocation2 + $0x58] sm:$0xff]
    %v1034 = vld [vmem:[#allocation2 + $0x60] sm:$0xff]
    %v1035 = vld [vmem:[#allocation2 + $0x68] sm:$0xff]
    %v1036 = vld [vmem:[#allocation2 + $0x70] sm:$0xff]
    %v1037 = vld [vmem:[#allocation2 + $0x78] sm:$0xff]
    %v1038 = vld [vmem:[%s46] sm:$0xff]
    %v1039 = vld [vmem:[%s46 + $0x8] sm:$0xff]
    %v1040 = vld [vmem:[%s46 + $0x10] sm:$0xff]
    %v1041 = vld [vmem:[%s46 + $0x18] sm:$0xff]
    %v1042 = vld [vmem:[%s46 + $0x20] sm:$0xff]
    %v1043 = vld [vmem:[%s46 + $0x28] sm:$0xff]
    %v1044 = vld [vmem:[%s46 + $0x30] sm:$0xff]
    %v1045 = vld [vmem:[%s46 + $0x38] sm:$0xff]
    %v1046 = vld [vmem:[%s46 + $0x40] sm:$0xff]
    %v1047 = vld [vmem:[%s46 + $0x48] sm:$0xff]
    %v1048 = vld [vmem:[%s46 + $0x50] sm:$0xff]
    %v1049 = vld [vmem:[%s46 + $0x58] sm:$0xff]
    %v1050 = vld [vmem:[%s46 + $0x60] sm:$0xff]
    %v1051 = vld [vmem:[%s46 + $0x68] sm:$0xff]
    %v1052 = vld [vmem:[%s46 + $0x70] sm:$0xff]
    %v1053 = vld [vmem:[%s46 + $0x78] sm:$0xff]
    %v1054 = vld [vmem:[%s63] sm:$0xff]
    %v1055 = vld [vmem:[%s63 + $0x8] sm:$0xff]
    %v1056 = vld [vmem:[%s63 + $0x10] sm:$0xff]
    %v1057 = vld [vmem:[%s63 + $0x18] sm:$0xff]
    %v1058 = vld [vmem:[%s63 + $0x20] sm:$0xff]
    %v1059 = vld [vmem:[%s63 + $0x28] sm:$0xff]
    %v1060 = vld [vmem:[%s63 + $0x30] sm:$0xff]
    %v1061 = vld [vmem:[%s63 + $0x38] sm:$0xff]
    %v1062 = vld [vmem:[%s63 + $0x40] sm:$0xff]
    %v1063 = vld [vmem:[%s63 + $0x48] sm:$0xff]
    %v1064 = vld [vmem:[%s63 + $0x50] sm:$0xff]
    %v1065 = vld [vmem:[%s63 + $0x58] sm:$0xff]
    %v1066 = vld [vmem:[%s63 + $0x60] sm:$0xff]
    %v1067 = vld [vmem:[%s63 + $0x68] sm:$0xff]
    %v1068 = vld [vmem:[%s63 + $0x70] sm:$0xff]
    %v1069 = vld [vmem:[%s63 + $0x78] sm:$0xff]
    %v1070 = vld [vmem:[%s80] sm:$0xff]
    %v1071 = vld [vmem:[%s80 + $0x8] sm:$0xff]
    %v1072 = vld [vmem:[%s80 + $0x10] sm:$0xff]
    %v1073 = vld [vmem:[%s80 + $0x18] sm:$0xff]
    %v1074 = vld [vmem:[%s80 + $0x20] sm:$0xff]
    %v1075 = vld [vmem:[%s80 + $0x28] sm:$0xff]
    %v1076 = vld [vmem:[%s80 + $0x30] sm:$0xff]
    %v1077 = vld [vmem:[%s80 + $0x38] sm:$0xff]
    %v1078 = vld [vmem:[%s80 + $0x40] sm:$0xff]
    %v1079 = vld [vmem:[%s80 + $0x48] sm:$0xff]
    %v1080 = vld [vmem:[%s80 + $0x50] sm:$0xff]
    %v1081 = vld [vmem:[%s80 + $0x58] sm:$0xff]
    %v1082 = vld [vmem:[%s80 + $0x60] sm:$0xff]
    %v1083 = vld [vmem:[%s80 + $0x68] sm:$0xff]
    %v1084 = vld [vmem:[%s80 + $0x70] sm:$0xff]
    %v1085 = vld [vmem:[%s80 + $0x78] sm:$0xff]
    %s1086 = scalar_lea.vmem %s0, 4
    %v1087 = vld [vmem:[%s1086] ss:$8 sm:$0xf]
    %s1088 = scalar_lea.vmem %s98, 4
    %v1089 = vld [vmem:[%s1088] ss:$8 sm:$0xf]
    %v1091 = vperm.slane %v1087, 0
    %v1092 = vperm.slane %v1087, 1
    %v1093 = vperm.slane %v1087, 2
    %v1094 = vperm.slane %v1087, 3
    %v1099 = vmul.f32 %v1022, %v1091
    %v1100 = vmul.f32 %v1023, %v1092
    %v1101 = vmul.f32 %v1024, %v1093
    %v1102 = vmul.f32 %v1025, %v1094
    %v1103 = vmul.f32 %v1026, %v1091
    %v1104 = vmul.f32 %v1027, %v1092
    %v1105 = vmul.f32 %v1028, %v1093
    %v1106 = vmul.f32 %v1029, %v1094
    %v1107 = vmul.f32 %v1030, %v1091
    %v1108 = vmul.f32 %v1031, %v1092
    %v1109 = vmul.f32 %v1032, %v1093
    %v1110 = vmul.f32 %v1033, %v1094
    %v1111 = vmul.f32 %v1034, %v1091
    %v1112 = vmul.f32 %v1035, %v1092
    %v1113 = vmul.f32 %v1036, %v1093
    %v1114 = vmul.f32 %v1037, %v1094
    %v1116 = vperm.slane %v1089, 0
    %v1117 = vperm.slane %v1089, 1
    %v1118 = vperm.slane %v1089, 2
    %v1119 = vperm.slane %v1089, 3
    %v1124 = vmul.f32 %v1038, %v1116
    %v1125 = vmul.f32 %v1039, %v1117
    %v1126 = vmul.f32 %v1040, %v1118
    %v1127 = vmul.f32 %v1041, %v1119
    %v1128 = vmul.f32 %v1042, %v1116
    %v1129 = vmul.f32 %v1043, %v1117
    %v1130 = vmul.f32 %v1044, %v1118
    %v1131 = vmul.f32 %v1045, %v1119
    %v1132 = vmul.f32 %v1046, %v1116
    %v1133 = vmul.f32 %v1047, %v1117
    %v1134 = vmul.f32 %v1048, %v1118
    %v1135 = vmul.f32 %v1049, %v1119
    %v1136 = vmul.f32 %v1050, %v1116
    %v1137 = vmul.f32 %v1051, %v1117
    %v1138 = vmul.f32 %v1052, %v1118
    %v1139 = vmul.f32 %v1053, %v1119
    %v1140 = vadd.f32 %v1099, %v1124
    %v1141 = vadd.f32 %v1100, %v1125
    %v1142 = vadd.f32 %v1101, %v1126
    %v1143 = vadd.f32 %v1102, %v1127
    %v1144 = vadd.f32 %v1103, %v1128
    %v1145 = vadd.f32 %v1104, %v1129
    %v1146 = vadd.f32 %v1105, %v1130
    %v1147 = vadd.f32 %v1106, %v1131
    %v1148 = vadd.f32 %v1107, %v1132
    %v1149 = vadd.f32 %v1108, %v1133
    %v1150 = vadd.f32 %v1109, %v1134
    %v1151 = vadd.f32 %v1110, %v1135
    %v1152 = vadd.f32 %v1111, %v1136
    %v1153 = vadd.f32 %v1112, %v1137
    %v1154 = vadd.f32 %v1113, %v1138
    %v1155 = vadd.f32 %v1114, %v1139
    %v1156 = vadd.f32 %v1140, %v1054
    %v1157 = vadd.f32 %v1141, %v1055
    %v1158 = vadd.f32 %v1142, %v1056
    %v1159 = vadd.f32 %v1143, %v1057
    %v1160 = vadd.f32 %v1144, %v1058
    %v1161 = vadd.f32 %v1145, %v1059
    %v1162 = vadd.f32 %v1146, %v1060
    %v1163 = vadd.f32 %v1147, %v1061
    %v1164 = vadd.f32 %v1148, %v1062
    %v1165 = vadd.f32 %v1149, %v1063
    %v1166 = vadd.f32 %v1150, %v1064
    %v1167 = vadd.f32 %v1151, %v1065
    %v1168 = vadd.f32 %v1152, %v1066
    %v1169 = vadd.f32 %v1153, %v1067
    %v1170 = vadd.f32 %v1154, %v1068
    %v1171 = vadd.f32 %v1155, %v1069
    %v1172 = vtanh.pop %v1156
    %v1173 = vtanh.pop %v1157
    %v1174 = vtanh.pop %v1158
    %v1175 = vtanh.pop %v1159
    %v1176 = vtanh.pop %v1160
    %v1177 = vtanh.pop %v1161
    %v1178 = vtanh.pop %v1162
    %v1179 = vtanh.pop %v1163
    %v1180 = vtanh.pop %v1164
    %v1181 = vtanh.pop %v1165
    %v1182 = vtanh.pop %v1166
    %v1183 = vtanh.pop %v1167
    %v1184 = vtanh.pop %v1168
    %v1185 = vtanh.pop %v1169
    %v1186 = vtanh.pop %v1170
    %v1187 = vtanh.pop %v1171
    %v1188 = vmul.f32 %v1172, %v1070
    %v1189 = vmul.f32 %v1173, %v1071
    %v1190 = vmul.f32 %v1174, %v1072
    %v1191 = vmul.f32 %v1175, %v1073
    %v1192 = vmul.f32 %v1176, %v1074
    %v1193 = vmul.f32 %v1177, %v1075
    %v1194 = vmul.f32 %v1178, %v1076
    %v1195 = vmul.f32 %v1179, %v1077
    %v1196 = vmul.f32 %v1180, %v1078
    %v1197 = vmul.f32 %v1181, %v1079
    %v1198 = vmul.f32 %v1182, %v1080
    %v1199 = vmul.f32 %v1183, %v1081
    %v1200 = vmul.f32 %v1184, %v1082
    %v1201 = vmul.f32 %v1185, %v1083
    %v1202 = vmul.f32 %v1186, %v1084
    %v1203 = vmul.f32 %v1187, %v1085
    %v1204 = vadd.f32 %v1188, %v1192
    %v1205 = vadd.f32 %v1204, %v1196
    %v1206 = vadd.f32 %v1205, %v1200
    %v1207 = vrot.slane %v1206, 4
    %v1208 = vadd.f32 %v1206, %v1207
    %v1209 = vrot.slane %v1208, 2
    %v1210 = vadd.f32 %v1208, %v1209
    %v1211 = vrot.slane %v1210, 1
    %v1212 = vadd.f32 %v1210, %v1211
    %v1213 = vadd.f32 %v1189, %v1193
    %v1214 = vadd.f32 %v1213, %v1197
    %v1215 = vadd.f32 %v1214, %v1201
    %v1216 = vrot.slane %v1215, 4
    %v1217 = vadd.f32 %v1215, %v1216
    %v1218 = vrot.slane %v1217, 2
    %v1219 = vadd.f32 %v1217, %v1218
    %v1220 = vrot.slane %v1219, 1
    %v1221 = vadd.f32 %v1219, %v1220
    %v1222 = vadd.f32 %v1190, %v1194
    %v1223 = vadd.f32 %v1222, %v1198
    %v1224 = vadd.f32 %v1223, %v1202
    %v1225 = vrot.slane %v1224, 4
    %v1226 = vadd.f32 %v1224, %v1225
    %v1227 = vrot.slane %v1226, 2
    %v1228 = vadd.f32 %v1226, %v1227
    %v1229 = vrot.slane %v1228, 1
    %v1230 = vadd.f32 %v1228, %v1229
    %v1231 = vadd.f32 %v1191, %v1195
    %v1232 = vadd.f32 %v1231, %v1199
    %v1233 = vadd.f32 %v1232, %v1203
    %v1234 = vrot.slane %v1233, 4
    %v1235 = vadd.f32 %v1233, %v1234
    %v1236 = vrot.slane %v1235, 2
    %v1237 = vadd.f32 %v1235, %v1236
    %v1238 = vrot.slane %v1237, 1
    %v1239 = vadd.f32 %v1237, %v1238
    %v1240 = vld [vmem:[%s2] sm:$0xf]
    %v1242 = vperm.slane %v1240, 0
    %v1243 = vperm.slane %v1240, 1
    %v1244 = vperm.slane %v1240, 2
    %v1245 = vperm.slane %v1240, 3
    %v1250 = vadd.f32 %v1212, %v1242
    %v1251 = vadd.f32 %v1221, %v1243
    %v1252 = vadd.f32 %v1230, %v1244
    %v1253 = vadd.f32 %v1239, %v1245
    %v1258 = vrot.slane %v1251, 7
    %v1259 = vrot.slane %v1252, 6
    %v1260 = vrot.slane %v1253, 5
    %v1261 = vsel %vm271, %v1250, %v1258
    %v1262 = vsel %vm273, %v1259, %v1260
    %v1263 = vsel %vm275, %v1261, %v1262
    %s1265 = scalar_lea.vmem %s3, 4
    %1266 = vst.msk [vmem:[%s1265] ss:$8 sm:$0xf] %vm281, %v1263
    %1267 = vst.msk [vmem:[%s1265] ss:$8 sm:$0x0] %vm281, %v1263
    %v1268 = vld [vmem:[#allocation2] sm:$0xff]
    %v1269 = vld [vmem:[#allocation2 + $0x8] sm:$0xff]
    %v1270 = vld [vmem:[#allocation2 + $0x10] sm:$0xff]
    %v1271 = vld [vmem:[#allocation2 + $0x18] sm:$0xff]
    %v1272 = vld [vmem:[#allocation2 + $0x20] sm:$0xff]
    %v1273 = vld [vmem:[#allocation2 + $0x28] sm:$0xff]
    %v1274 = vld [vmem:[#allocation2 + $0x30] sm:$0xff]
    %v1275 = vld [vmem:[#allocation2 + $0x38] sm:$0xff]
    %v1276 = vld [vmem:[#allocation2 + $0x40] sm:$0xff]
    %v1277 = vld [vmem:[#allocation2 + $0x48] sm:$0xff]
    %v1278 = vld [vmem:[#allocation2 + $0x50] sm:$0xff]
    %v1279 = vld [vmem:[#allocation2 + $0x58] sm:$0xff]
    %v1280 = vld [vmem:[#allocation2 + $0x60] sm:$0xff]
    %v1281 = vld [vmem:[#allocation2 + $0x68] sm:$0xff]
    %v1282 = vld [vmem:[#allocation2 + $0x70] sm:$0xff]
    %v1283 = vld [vmem:[#allocation2 + $0x78] sm:$0xff]
    %v1284 = vld [vmem:[%s46] sm:$0xff]
    %v1285 = vld [vmem:[%s46 + $0x8] sm:$0xff]
    %v1286 = vld [vmem:[%s46 + $0x10] sm:$0xff]
    %v1287 = vld [vmem:[%s46 + $0x18] sm:$0xff]
    %v1288 = vld [vmem:[%s46 + $0x20] sm:$0xff]
    %v1289 = vld [vmem:[%s46 + $0x28] sm:$0xff]
    %v1290 = vld [vmem:[%s46 + $0x30] sm:$0xff]
    %v1291 = vld [vmem:[%s46 + $0x38] sm:$0xff]
    %v1292 = vld [vmem:[%s46 + $0x40] sm:$0xff]
    %v1293 = vld [vmem:[%s46 + $0x48] sm:$0xff]
    %v1294 = vld [vmem:[%s46 + $0x50] sm:$0xff]
    %v1295 = vld [vmem:[%s46 + $0x58] sm:$0xff]
    %v1296 = vld [vmem:[%s46 + $0x60] sm:$0xff]
    %v1297 = vld [vmem:[%s46 + $0x68] sm:$0xff]
    %v1298 = vld [vmem:[%s46 + $0x70] sm:$0xff]
    %v1299 = vld [vmem:[%s46 + $0x78] sm:$0xff]
    %v1300 = vld [vmem:[%s63] sm:$0xff]
    %v1301 = vld [vmem:[%s63 + $0x8] sm:$0xff]
    %v1302 = vld [vmem:[%s63 + $0x10] sm:$0xff]
    %v1303 = vld [vmem:[%s63 + $0x18] sm:$0xff]
    %v1304 = vld [vmem:[%s63 + $0x20] sm:$0xff]
    %v1305 = vld [vmem:[%s63 + $0x28] sm:$0xff]
    %v1306 = vld [vmem:[%s63 + $0x30] sm:$0xff]
    %v1307 = vld [vmem:[%s63 + $0x38] sm:$0xff]
    %v1308 = vld [vmem:[%s63 + $0x40] sm:$0xff]
    %v1309 = vld [vmem:[%s63 + $0x48] sm:$0xff]
    %v1310 = vld [vmem:[%s63 + $0x50] sm:$0xff]
    %v1311 = vld [vmem:[%s63 + $0x58] sm:$0xff]
    %v1312 = vld [vmem:[%s63 + $0x60] sm:$0xff]
    %v1313 = vld [vmem:[%s63 + $0x68] sm:$0xff]
    %v1314 = vld [vmem:[%s63 + $0x70] sm:$0xff]
    %v1315 = vld [vmem:[%s63 + $0x78] sm:$0xff]
    %v1316 = vld [vmem:[%s80] sm:$0xff]
    %v1317 = vld [vmem:[%s80 + $0x8] sm:$0xff]
    %v1318 = vld [vmem:[%s80 + $0x10] sm:$0xff]
    %v1319 = vld [vmem:[%s80 + $0x18] sm:$0xff]
    %v1320 = vld [vmem:[%s80 + $0x20] sm:$0xff]
    %v1321 = vld [vmem:[%s80 + $0x28] sm:$0xff]
    %v1322 = vld [vmem:[%s80 + $0x30] sm:$0xff]
    %v1323 = vld [vmem:[%s80 + $0x38] sm:$0xff]
    %v1324 = vld [vmem:[%s80 + $0x40] sm:$0xff]
    %v1325 = vld [vmem:[%s80 + $0x48] sm:$0xff]
    %v1326 = vld [vmem:[%s80 + $0x50] sm:$0xff]
    %v1327 = vld [vmem:[%s80 + $0x58] sm:$0xff]
    %v1328 = vld [vmem:[%s80 + $0x60] sm:$0xff]
    %v1329 = vld [vmem:[%s80 + $0x68] sm:$0xff]
    %v1330 = vld [vmem:[%s80 + $0x70] sm:$0xff]
    %v1331 = vld [vmem:[%s80 + $0x78] sm:$0xff]
    %s1332 = scalar_lea.vmem %s0, 5
    %v1333 = vld [vmem:[%s1332] ss:$8 sm:$0xf]
    %s1334 = scalar_lea.vmem %s98, 5
    %v1335 = vld [vmem:[%s1334] ss:$8 sm:$0xf]
    %v1337 = vperm.slane %v1333, 0
    %v1338 = vperm.slane %v1333, 1
    %v1339 = vperm.slane %v1333, 2
    %v1340 = vperm.slane %v1333, 3
    %v1345 = vmul.f32 %v1268, %v1337
    %v1346 = vmul.f32 %v1269, %v1338
    %v1347 = vmul.f32 %v1270, %v1339
    %v1348 = vmul.f32 %v1271, %v1340
    %v1349 = vmul.f32 %v1272, %v1337
    %v1350 = vmul.f32 %v1273, %v1338
    %v1351 = vmul.f32 %v1274, %v1339
    %v1352 = vmul.f32 %v1275, %v1340
    %v1353 = vmul.f32 %v1276, %v1337
    %v1354 = vmul.f32 %v1277, %v1338
    %v1355 = vmul.f32 %v1278, %v1339
    %v1356 = vmul.f32 %v1279, %v1340
    %v1357 = vmul.f32 %v1280, %v1337
    %v1358 = vmul.f32 %v1281, %v1338
    %v1359 = vmul.f32 %v1282, %v1339
    %v1360 = vmul.f32 %v1283, %v1340
    %v1362 = vperm.slane %v1335, 0
    %v1363 = vperm.slane %v1335, 1
    %v1364 = vperm.slane %v1335, 2
    %v1365 = vperm.slane %v1335, 3
    %v1370 = vmul.f32 %v1284, %v1362
    %v1371 = vmul.f32 %v1285, %v1363
    %v1372 = vmul.f32 %v1286, %v1364
    %v1373 = vmul.f32 %v1287, %v1365
    %v1374 = vmul.f32 %v1288, %v1362
    %v1375 = vmul.f32 %v1289, %v1363
    %v1376 = vmul.f32 %v1290, %v1364
    %v1377 = vmul.f32 %v1291, %v1365
    %v1378 = vmul.f32 %v1292, %v1362
    %v1379 = vmul.f32 %v1293, %v1363
    %v1380 = vmul.f32 %v1294, %v1364
    %v1381 = vmul.f32 %v1295, %v1365
    %v1382 = vmul.f32 %v1296, %v1362
    %v1383 = vmul.f32 %v1297, %v1363
    %v1384 = vmul.f32 %v1298, %v1364
    %v1385 = vmul.f32 %v1299, %v1365
    %v1386 = vadd.f32 %v1345, %v1370
    %v1387 = vadd.f32 %v1346, %v1371
    %v1388 = vadd.f32 %v1347, %v1372
    %v1389 = vadd.f32 %v1348, %v1373
    %v1390 = vadd.f32 %v1349, %v1374
    %v1391 = vadd.f32 %v1350, %v1375
    %v1392 = vadd.f32 %v1351, %v1376
    %v1393 = vadd.f32 %v1352, %v1377
    %v1394 = vadd.f32 %v1353, %v1378
    %v1395 = vadd.f32 %v1354, %v1379
    %v1396 = vadd.f32 %v1355, %v1380
    %v1397 = vadd.f32 %v1356, %v1381
    %v1398 = vadd.f32 %v1357, %v1382
    %v1399 = vadd.f32 %v1358, %v1383
    %v1400 = vadd.f32 %v1359, %v1384
    %v1401 = vadd.f32 %v1360, %v1385
    %v1402 = vadd.f32 %v1386, %v1300
    %v1403 = vadd.f32 %v1387, %v1301
    %v1404 = vadd.f32 %v1388, %v1302
    %v1405 = vadd.f32 %v1389, %v1303
    %v1406 = vadd.f32 %v1390, %v1304
    %v1407 = vadd.f32 %v1391, %v1305
    %v1408 = vadd.f32 %v1392, %v1306
    %v1409 = vadd.f32 %v1393, %v1307
    %v1410 = vadd.f32 %v1394, %v1308
    %v1411 = vadd.f32 %v1395, %v1309
    %v1412 = vadd.f32 %v1396, %v1310
    %v1413 = vadd.f32 %v1397, %v1311
    %v1414 = vadd.f32 %v1398, %v1312
    %v1415 = vadd.f32 %v1399, %v1313
    %v1416 = vadd.f32 %v1400, %v1314
    %v1417 = vadd.f32 %v1401, %v1315
    %v1418 = vtanh.pop %v1402
    %v1419 = vtanh.pop %v1403
    %v1420 = vtanh.pop %v1404
    %v1421 = vtanh.pop %v1405
    %v1422 = vtanh.pop %v1406
    %v1423 = vtanh.pop %v1407
    %v1424 = vtanh.pop %v1408
    %v1425 = vtanh.pop %v1409
    %v1426 = vtanh.pop %v1410
    %v1427 = vtanh.pop %v1411
    %v1428 = vtanh.pop %v1412
    %v1429 = vtanh.pop %v1413
    %v1430 = vtanh.pop %v1414
    %v1431 = vtanh.pop %v1415
    %v1432 = vtanh.pop %v1416
    %v1433 = vtanh.pop %v1417
    %v1434 = vmul.f32 %v1418, %v1316
    %v1435 = vmul.f32 %v1419, %v1317
    %v1436 = vmul.f32 %v1420, %v1318
    %v1437 = vmul.f32 %v1421, %v1319
    %v1438 = vmul.f32 %v1422, %v1320
    %v1439 = vmul.f32 %v1423, %v1321
    %v1440 = vmul.f32 %v1424, %v1322
    %v1441 = vmul.f32 %v1425, %v1323
    %v1442 = vmul.f32 %v1426, %v1324
    %v1443 = vmul.f32 %v1427, %v1325
    %v1444 = vmul.f32 %v1428, %v1326
    %v1445 = vmul.f32 %v1429, %v1327
    %v1446 = vmul.f32 %v1430, %v1328
    %v1447 = vmul.f32 %v1431, %v1329
    %v1448 = vmul.f32 %v1432, %v1330
    %v1449 = vmul.f32 %v1433, %v1331
    %v1450 = vadd.f32 %v1434, %v1438
    %v1451 = vadd.f32 %v1450, %v1442
    %v1452 = vadd.f32 %v1451, %v1446
    %v1453 = vrot.slane %v1452, 4
    %v1454 = vadd.f32 %v1452, %v1453
    %v1455 = vrot.slane %v1454, 2
    %v1456 = vadd.f32 %v1454, %v1455
    %v1457 = vrot.slane %v1456, 1
    %v1458 = vadd.f32 %v1456, %v1457
    %v1459 = vadd.f32 %v1435, %v1439
    %v1460 = vadd.f32 %v1459, %v1443
    %v1461 = vadd.f32 %v1460, %v1447
    %v1462 = vrot.slane %v1461, 4
    %v1463 = vadd.f32 %v1461, %v1462
    %v1464 = vrot.slane %v1463, 2
    %v1465 = vadd.f32 %v1463, %v1464
    %v1466 = vrot.slane %v1465, 1
    %v1467 = vadd.f32 %v1465, %v1466
    %v1468 = vadd.f32 %v1436, %v1440
    %v1469 = vadd.f32 %v1468, %v1444
    %v1470 = vadd.f32 %v1469, %v1448
    %v1471 = vrot.slane %v1470, 4
    %v1472 = vadd.f32 %v1470, %v1471
    %v1473 = vrot.slane %v1472, 2
    %v1474 = vadd.f32 %v1472, %v1473
    %v1475 = vrot.slane %v1474, 1
    %v1476 = vadd.f32 %v1474, %v1475
    %v1477 = vadd.f32 %v1437, %v1441
    %v1478 = vadd.f32 %v1477, %v1445
    %v1479 = vadd.f32 %v1478, %v1449
    %v1480 = vrot.slane %v1479, 4
    %v1481 = vadd.f32 %v1479, %v1480
    %v1482 = vrot.slane %v1481, 2
    %v1483 = vadd.f32 %v1481, %v1482
    %v1484 = vrot.slane %v1483, 1
    %v1485 = vadd.f32 %v1483, %v1484
    %v1486 = vld [vmem:[%s2] sm:$0xf]
    %v1488 = vperm.slane %v1486, 0
    %v1489 = vperm.slane %v1486, 1
    %v1490 = vperm.slane %v1486, 2
    %v1491 = vperm.slane %v1486, 3
    %v1496 = vadd.f32 %v1458, %v1488
    %v1497 = vadd.f32 %v1467, %v1489
    %v1498 = vadd.f32 %v1476, %v1490
    %v1499 = vadd.f32 %v1485, %v1491
    %v1504 = vrot.slane %v1497, 7
    %v1505 = vrot.slane %v1498, 6
    %v1506 = vrot.slane %v1499, 5
    %v1507 = vsel %vm271, %v1496, %v1504
    %v1508 = vsel %vm273, %v1505, %v1506
    %v1509 = vsel %vm275, %v1507, %v1508
    %s1511 = scalar_lea.vmem %s3, 5
    %1512 = vst.msk [vmem:[%s1511] ss:$8 sm:$0xf] %vm281, %v1509
    %1513 = vst.msk [vmem:[%s1511] ss:$8 sm:$0x0] %vm281, %v1509
    %v1514 = vld [vmem:[#allocation2] sm:$0xff]
    %v1515 = vld [vmem:[#allocation2 + $0x8] sm:$0xff]
    %v1516 = vld [vmem:[#allocation2 + $0x10] sm:$0xff]
    %v1517 = vld [vmem:[#allocation2 + $0x18] sm:$0xff]
    %v1518 = vld [vmem:[#allocation2 + $0x20] sm:$0xff]
    %v1519 = vld [vmem:[#allocation2 + $0x28] sm:$0xff]
    %v1520 = vld [vmem:[#allocation2 + $0x30] sm:$0xff]
    %v1521 = vld [vmem:[#allocation2 + $0x38] sm:$0xff]
    %v1522 = vld [vmem:[#allocation2 + $0x40] sm:$0xff]
    %v1523 = vld [vmem:[#allocation2 + $0x48] sm:$0xff]
    %v1524 = vld [vmem:[#allocation2 + $0x50] sm:$0xff]
    %v1525 = vld [vmem:[#allocation2 + $0x58] sm:$0xff]
    %v1526 = vld [vmem:[#allocation2 + $0x60] sm:$0xff]
    %v1527 = vld [vmem:[#allocation2 + $0x68] sm:$0xff]
    %v1528 = vld [vmem:[#allocation2 + $0x70] sm:$0xff]
    %v1529 = vld [vmem:[#allocation2 + $0x78] sm:$0xff]
    %v1530 = vld [vmem:[%s46] sm:$0xff]
    %v1531 = vld [vmem:[%s46 + $0x8] sm:$0xff]
    %v1532 = vld [vmem:[%s46 + $0x10] sm:$0xff]
    %v1533 = vld [vmem:[%s46 + $0x18] sm:$0xff]
    %v1534 = vld [vmem:[%s46 + $0x20] sm:$0xff]
    %v1535 = vld [vmem:[%s46 + $0x28] sm:$0xff]
    %v1536 = vld [vmem:[%s46 + $0x30] sm:$0xff]
    %v1537 = vld [vmem:[%s46 + $0x38] sm:$0xff]
    %v1538 = vld [vmem:[%s46 + $0x40] sm:$0xff]
    %v1539 = vld [vmem:[%s46 + $0x48] sm:$0xff]
    %v1540 = vld [vmem:[%s46 + $0x50] sm:$0xff]
    %v1541 = vld [vmem:[%s46 + $0x58] sm:$0xff]
    %v1542 = vld [vmem:[%s46 + $0x60] sm:$0xff]
    %v1543 = vld [vmem:[%s46 + $0x68] sm:$0xff]
    %v1544 = vld [vmem:[%s46 + $0x70] sm:$0xff]
    %v1545 = vld [vmem:[%s46 + $0x78] sm:$0xff]
    %v1546 = vld [vmem:[%s63] sm:$0xff]
    %v1547 = vld [vmem:[%s63 + $0x8] sm:$0xff]
    %v1548 = vld [vmem:[%s63 + $0x10] sm:$0xff]
    %v1549 = vld [vmem:[%s63 + $0x18] sm:$0xff]
    %v1550 = vld [vmem:[%s63 + $0x20] sm:$0xff]
    %v1551 = vld [vmem:[%s63 + $0x28] sm:$0xff]
    %v1552 = vld [vmem:[%s63 + $0x30] sm:$0xff]
    %v1553 = vld [vmem:[%s63 + $0x38] sm:$0xff]
    %v1554 = vld [vmem:[%s63 + $0x40] sm:$0xff]
    %v1555 = vld [vmem:[%s63 + $0x48] sm:$0xff]
    %v1556 = vld [vmem:[%s63 + $0x50] sm:$0xff]
    %v1557 = vld [vmem:[%s63 + $0x58] sm:$0xff]
    %v1558 = vld [vmem:[%s63 + $0x60] sm:$0xff]
    %v1559 = vld [vmem:[%s63 + $0x68] sm:$0xff]
    %v1560 = vld [vmem:[%s63 + $0x70] sm:$0xff]
    %v1561 = vld [vmem:[%s63 + $0x78] sm:$0xff]
    %v1562 = vld [vmem:[%s80] sm:$0xff]
    %v1563 = vld [vmem:[%s80 + $0x8] sm:$0xff]
    %v1564 = vld [vmem:[%s80 + $0x10] sm:$0xff]
    %v1565 = vld [vmem:[%s80 + $0x18] sm:$0xff]
    %v1566 = vld [vmem:[%s80 + $0x20] sm:$0xff]
    %v1567 = vld [vmem:[%s80 + $0x28] sm:$0xff]
    %v1568 = vld [vmem:[%s80 + $0x30] sm:$0xff]
    %v1569 = vld [vmem:[%s80 + $0x38] sm:$0xff]
    %v1570 = vld [vmem:[%s80 + $0x40] sm:$0xff]
    %v1571 = vld [vmem:[%s80 + $0x48] sm:$0xff]
    %v1572 = vld [vmem:[%s80 + $0x50] sm:$0xff]
    %v1573 = vld [vmem:[%s80 + $0x58] sm:$0xff]
    %v1574 = vld [vmem:[%s80 + $0x60] sm:$0xff]
    %v1575 = vld [vmem:[%s80 + $0x68] sm:$0xff]
    %v1576 = vld [vmem:[%s80 + $0x70] sm:$0xff]
    %v1577 = vld [vmem:[%s80 + $0x78] sm:$0xff]
    %s1578 = scalar_lea.vmem %s0, 6
    %v1579 = vld [vmem:[%s1578] ss:$8 sm:$0xf]
    %s1580 = scalar_lea.vmem %s98, 6
    %v1581 = vld [vmem:[%s1580] ss:$8 sm:$0xf]
    %v1583 = vperm.slane %v1579, 0
    %v1584 = vperm.slane %v1579, 1
    %v1585 = vperm.slane %v1579, 2
    %v1586 = vperm.slane %v1579, 3
    %v1591 = vmul.f32 %v1514, %v1583
    %v1592 = vmul.f32 %v1515, %v1584
    %v1593 = vmul.f32 %v1516, %v1585
    %v1594 = vmul.f32 %v1517, %v1586
    %v1595 = vmul.f32 %v1518, %v1583
    %v1596 = vmul.f32 %v1519, %v1584
    %v1597 = vmul.f32 %v1520, %v1585
    %v1598 = vmul.f32 %v1521, %v1586
    %v1599 = vmul.f32 %v1522, %v1583
    %v1600 = vmul.f32 %v1523, %v1584
    %v1601 = vmul.f32 %v1524, %v1585
    %v1602 = vmul.f32 %v1525, %v1586
    %v1603 = vmul.f32 %v1526, %v1583
    %v1604 = vmul.f32 %v1527, %v1584
    %v1605 = vmul.f32 %v1528, %v1585
    %v1606 = vmul.f32 %v1529, %v1586
    %v1608 = vperm.slane %v1581, 0
    %v1609 = vperm.slane %v1581, 1
    %v1610 = vperm.slane %v1581, 2
    %v1611 = vperm.slane %v1581, 3
    %v1616 = vmul.f32 %v1530, %v1608
    %v1617 = vmul.f32 %v1531, %v1609
    %v1618 = vmul.f32 %v1532, %v1610
    %v1619 = vmul.f32 %v1533, %v1611
    %v1620 = vmul.f32 %v1534, %v1608
    %v1621 = vmul.f32 %v1535, %v1609
    %v1622 = vmul.f32 %v1536, %v1610
    %v1623 = vmul.f32 %v1537, %v1611
    %v1624 = vmul.f32 %v1538, %v1608
    %v1625 = vmul.f32 %v1539, %v1609
    %v1626 = vmul.f32 %v1540, %v1610
    %v1627 = vmul.f32 %v1541, %v1611
    %v1628 = vmul.f32 %v1542, %v1608
    %v1629 = vmul.f32 %v1543, %v1609
    %v1630 = vmul.f32 %v1544, %v1610
    %v1631 = vmul.f32 %v1545, %v1611
    %v1632 = vadd.f32 %v1591, %v1616
    %v1633 = vadd.f32 %v1592, %v1617
    %v1634 = vadd.f32 %v1593, %v1618
    %v1635 = vadd.f32 %v1594, %v1619
    %v1636 = vadd.f32 %v1595, %v1620
    %v1637 = vadd.f32 %v1596, %v1621
    %v1638 = vadd.f32 %v1597, %v1622
    %v1639 = vadd.f32 %v1598, %v1623
    %v1640 = vadd.f32 %v1599, %v1624
    %v1641 = vadd.f32 %v1600, %v1625
    %v1642 = vadd.f32 %v1601, %v1626
    %v1643 = vadd.f32 %v1602, %v1627
    %v1644 = vadd.f32 %v1603, %v1628
    %v1645 = vadd.f32 %v1604, %v1629
    %v1646 = vadd.f32 %v1605, %v1630
    %v1647 = vadd.f32 %v1606, %v1631
    %v1648 = vadd.f32 %v1632, %v1546
    %v1649 = vadd.f32 %v1633, %v1547
    %v1650 = vadd.f32 %v1634, %v1548
    %v1651 = vadd.f32 %v1635, %v1549
    %v1652 = vadd.f32 %v1636, %v1550
    %v1653 = vadd.f32 %v1637, %v1551
    %v1654 = vadd.f32 %v1638, %v1552
    %v1655 = vadd.f32 %v1639, %v1553
    %v1656 = vadd.f32 %v1640, %v1554
    %v1657 = vadd.f32 %v1641, %v1555
    %v1658 = vadd.f32 %v1642, %v1556
    %v1659 = vadd.f32 %v1643, %v1557
    %v1660 = vadd.f32 %v1644, %v1558
    %v1661 = vadd.f32 %v1645, %v1559
    %v1662 = vadd.f32 %v1646, %v1560
    %v1663 = vadd.f32 %v1647, %v1561
    %v1664 = vtanh.pop %v1648
    %v1665 = vtanh.pop %v1649
    %v1666 = vtanh.pop %v1650
    %v1667 = vtanh.pop %v1651
    %v1668 = vtanh.pop %v1652
    %v1669 = vtanh.pop %v1653
    %v1670 = vtanh.pop %v1654
    %v1671 = vtanh.pop %v1655
    %v1672 = vtanh.pop %v1656
    %v1673 = vtanh.pop %v1657
    %v1674 = vtanh.pop %v1658
    %v1675 = vtanh.pop %v1659
    %v1676 = vtanh.pop %v1660
    %v1677 = vtanh.pop %v1661
    %v1678 = vtanh.pop %v1662
    %v1679 = vtanh.pop %v1663
    %v1680 = vmul.f32 %v1664, %v1562
    %v1681 = vmul.f32 %v1665, %v1563
    %v1682 = vmul.f32 %v1666, %v1564
    %v1683 = vmul.f32 %v1667, %v1565
    %v1684 = vmul.f32 %v1668, %v1566
    %v1685 = vmul.f32 %v1669, %v1567
    %v1686 = vmul.f32 %v1670, %v1568
    %v1687 = vmul.f32 %v1671, %v1569
    %v1688 = vmul.f32 %v1672, %v1570
    %v1689 = vmul.f32 %v1673, %v1571
    %v1690 = vmul.f32 %v1674, %v1572
    %v1691 = vmul.f32 %v1675, %v1573
    %v1692 = vmul.f32 %v1676, %v1574
    %v1693 = vmul.f32 %v1677, %v1575
    %v1694 = vmul.f32 %v1678, %v1576
    %v1695 = vmul.f32 %v1679, %v1577
    %v1696 = vadd.f32 %v1680, %v1684
    %v1697 = vadd.f32 %v1696, %v1688
    %v1698 = vadd.f32 %v1697, %v1692
    %v1699 = vrot.slane %v1698, 4
    %v1700 = vadd.f32 %v1698, %v1699
    %v1701 = vrot.slane %v1700, 2
    %v1702 = vadd.f32 %v1700, %v1701
    %v1703 = vrot.slane %v1702, 1
    %v1704 = vadd.f32 %v1702, %v1703
    %v1705 = vadd.f32 %v1681, %v1685
    %v1706 = vadd.f32 %v1705, %v1689
    %v1707 = vadd.f32 %v1706, %v1693
    %v1708 = vrot.slane %v1707, 4
    %v1709 = vadd.f32 %v1707, %v1708
    %v1710 = vrot.slane %v1709, 2
    %v1711 = vadd.f32 %v1709, %v1710
    %v1712 = vrot.slane %v1711, 1
    %v1713 = vadd.f32 %v1711, %v1712
    %v1714 = vadd.f32 %v1682, %v1686
    %v1715 = vadd.f32 %v1714, %v1690
    %v1716 = vadd.f32 %v1715, %v1694
    %v1717 = vrot.slane %v1716, 4
    %v1718 = vadd.f32 %v1716, %v1717
    %v1719 = vrot.slane %v1718, 2
    %v1720 = vadd.f32 %v1718, %v1719
    %v1721 = vrot.slane %v1720, 1
    %v1722 = vadd.f32 %v1720, %v1721
    %v1723 = vadd.f32 %v1683, %v1687
    %v1724 = vadd.f32 %v1723, %v1691
    %v1725 = vadd.f32 %v1724, %v1695
    %v1726 = vrot.slane %v1725, 4
    %v1727 = vadd.f32 %v1725, %v1726
    %v1728 = vrot.slane %v1727, 2
    %v1729 = vadd.f32 %v1727, %v1728
    %v1730 = vrot.slane %v1729, 1
    %v1731 = vadd.f32 %v1729, %v1730
    %v1732 = vld [vmem:[%s2] sm:$0xf]
    %v1734 = vperm.slane %v1732, 0
    %v1735 = vperm.slane %v1732, 1
    %v1736 = vperm.slane %v1732, 2
    %v1737 = vperm.slane %v1732, 3
    %v1742 = vadd.f32 %v1704, %v1734
    %v1743 = vadd.f32 %v1713, %v1735
    %v1744 = vadd.f32 %v1722, %v1736
    %v1745 = vadd.f32 %v1731, %v1737
    %v1750 = vrot.slane %v1743, 7
    %v1751 = vrot.slane %v1744, 6
    %v1752 = vrot.slane %v1745, 5
    %v1753 = vsel %vm271, %v1742, %v1750
    %v1754 = vsel %vm273, %v1751, %v1752
    %v1755 = vsel %vm275, %v1753, %v1754
    %s1757 = scalar_lea.vmem %s3, 6
    %1758 = vst.msk [vmem:[%s1757] ss:$8 sm:$0xf] %vm281, %v1755
    %1759 = vst.msk [vmem:[%s1757] ss:$8 sm:$0x0] %vm281, %v1755
    %v1760 = vld [vmem:[#allocation2] sm:$0xff]
    %v1761 = vld [vmem:[#allocation2 + $0x8] sm:$0xff]
    %v1762 = vld [vmem:[#allocation2 + $0x10] sm:$0xff]
    %v1763 = vld [vmem:[#allocation2 + $0x18] sm:$0xff]
    %v1764 = vld [vmem:[#allocation2 + $0x20] sm:$0xff]
    %v1765 = vld [vmem:[#allocation2 + $0x28] sm:$0xff]
    %v1766 = vld [vmem:[#allocation2 + $0x30] sm:$0xff]
    %v1767 = vld [vmem:[#allocation2 + $0x38] sm:$0xff]
    %v1768 = vld [vmem:[#allocation2 + $0x40] sm:$0xff]
    %v1769 = vld [vmem:[#allocation2 + $0x48] sm:$0xff]
    %v1770 = vld [vmem:[#allocation2 + $0x50] sm:$0xff]
    %v1771 = vld [vmem:[#allocation2 + $0x58] sm:$0xff]
    %v1772 = vld [vmem:[#allocation2 + $0x60] sm:$0xff]
    %v1773 = vld [vmem:[#allocation2 + $0x68] sm:$0xff]
    %v1774 = vld [vmem:[#allocation2 + $0x70] sm:$0xff]
    %v1775 = vld [vmem:[#allocation2 + $0x78] sm:$0xff]
    %v1776 = vld [vmem:[%s46] sm:$0xff]
    %v1777 = vld [vmem:[%s46 + $0x8] sm:$0xff]
    %v1778 = vld [vmem:[%s46 + $0x10] sm:$0xff]
    %v1779 = vld [vmem:[%s46 + $0x18] sm:$0xff]
    %v1780 = vld [vmem:[%s46 + $0x20] sm:$0xff]
    %v1781 = vld [vmem:[%s46 + $0x28] sm:$0xff]
    %v1782 = vld [vmem:[%s46 + $0x30] sm:$0xff]
    %v1783 = vld [vmem:[%s46 + $0x38] sm:$0xff]
    %v1784 = vld [vmem:[%s46 + $0x40] sm:$0xff]
    %v1785 = vld [vmem:[%s46 + $0x48] sm:$0xff]
    %v1786 = vld [vmem:[%s46 + $0x50] sm:$0xff]
    %v1787 = vld [vmem:[%s46 + $0x58] sm:$0xff]
    %v1788 = vld [vmem:[%s46 + $0x60] sm:$0xff]
    %v1789 = vld [vmem:[%s46 + $0x68] sm:$0xff]
    %v1790 = vld [vmem:[%s46 + $0x70] sm:$0xff]
    %v1791 = vld [vmem:[%s46 + $0x78] sm:$0xff]
    %v1792 = vld [vmem:[%s63] sm:$0xff]
    %v1793 = vld [vmem:[%s63 + $0x8] sm:$0xff]
    %v1794 = vld [vmem:[%s63 + $0x10] sm:$0xff]
    %v1795 = vld [vmem:[%s63 + $0x18] sm:$0xff]
    %v1796 = vld [vmem:[%s63 + $0x20] sm:$0xff]
    %v1797 = vld [vmem:[%s63 + $0x28] sm:$0xff]
    %v1798 = vld [vmem:[%s63 + $0x30] sm:$0xff]
    %v1799 = vld [vmem:[%s63 + $0x38] sm:$0xff]
    %v1800 = vld [vmem:[%s63 + $0x40] sm:$0xff]
    %v1801 = vld [vmem:[%s63 + $0x48] sm:$0xff]
    %v1802 = vld [vmem:[%s63 + $0x50] sm:$0xff]
    %v1803 = vld [vmem:[%s63 + $0x58] sm:$0xff]
    %v1804 = vld [vmem:[%s63 + $0x60] sm:$0xff]
    %v1805 = vld [vmem:[%s63 + $0x68] sm:$0xff]
    %v1806 = vld [vmem:[%s63 + $0x70] sm:$0xff]
    %v1807 = vld [vmem:[%s63 + $0x78] sm:$0xff]
    %v1808 = vld [vmem:[%s80] sm:$0xff]
    %v1809 = vld [vmem:[%s80 + $0x8] sm:$0xff]
    %v1810 = vld [vmem:[%s80 + $0x10] sm:$0xff]
    %v1811 = vld [vmem:[%s80 + $0x18] sm:$0xff]
    %v1812 = vld [vmem:[%s80 + $0x20] sm:$0xff]
    %v1813 = vld [vmem:[%s80 + $0x28] sm:$0xff]
    %v1814 = vld [vmem:[%s80 + $0x30] sm:$0xff]
    %v1815 = vld [vmem:[%s80 + $0x38] sm:$0xff]
    %v1816 = vld [vmem:[%s80 + $0x40] sm:$0xff]
    %v1817 = vld [vmem:[%s80 + $0x48] sm:$0xff]
    %v1818 = vld [vmem:[%s80 + $0x50] sm:$0xff]
    %v1819 = vld [vmem:[%s80 + $0x58] sm:$0xff]
    %v1820 = vld [vmem:[%s80 + $0x60] sm:$0xff]
    %v1821 = vld [vmem:[%s80 + $0x68] sm:$0xff]
    %v1822 = vld [vmem:[%s80 + $0x70] sm:$0xff]
    %v1823 = vld [vmem:[%s80 + $0x78] sm:$0xff]
    %s1824 = scalar_lea.vmem %s0, 7
    %v1825 = vld [vmem:[%s1824] ss:$8 sm:$0xf]
    %s1826 = scalar_lea.vmem %s98, 7
    %v1827 = vld [vmem:[%s1826] ss:$8 sm:$0xf]
    %v1829 = vperm.slane %v1825, 0
    %v1830 = vperm.slane %v1825, 1
    %v1831 = vperm.slane %v1825, 2
    %v1832 = vperm.slane %v1825, 3
    %v1837 = vmul.f32 %v1760, %v1829
    %v1838 = vmul.f32 %v1761, %v1830
    %v1839 = vmul.f32 %v1762, %v1831
    %v1840 = vmul.f32 %v1763, %v1832
    %v1841 = vmul.f32 %v1764, %v1829
    %v1842 = vmul.f32 %v1765, %v1830
    %v1843 = vmul.f32 %v1766, %v1831
    %v1844 = vmul.f32 %v1767, %v1832
    %v1845 = vmul.f32 %v1768, %v1829
    %v1846 = vmul.f32 %v1769, %v1830
    %v1847 = vmul.f32 %v1770, %v1831
    %v1848 = vmul.f32 %v1771, %v1832
    %v1849 = vmul.f32 %v1772, %v1829
    %v1850 = vmul.f32 %v1773, %v1830
    %v1851 = vmul.f32 %v1774, %v1831
    %v1852 = vmul.f32 %v1775, %v1832
    %v1854 = vperm.slane %v1827, 0
    %v1855 = vperm.slane %v1827, 1
    %v1856 = vperm.slane %v1827, 2
    %v1857 = vperm.slane %v1827, 3
    %v1862 = vmul.f32 %v1776, %v1854
    %v1863 = vmul.f32 %v1777, %v1855
    %v1864 = vmul.f32 %v1778, %v1856
    %v1865 = vmul.f32 %v1779, %v1857
    %v1866 = vmul.f32 %v1780, %v1854
    %v1867 = vmul.f32 %v1781, %v1855
    %v1868 = vmul.f32 %v1782, %v1856
    %v1869 = vmul.f32 %v1783, %v1857
    %v1870 = vmul.f32 %v1784, %v1854
    %v1871 = vmul.f32 %v1785, %v1855
    %v1872 = vmul.f32 %v1786, %v1856
    %v1873 = vmul.f32 %v1787, %v1857
    %v1874 = vmul.f32 %v1788, %v1854
    %v1875 = vmul.f32 %v1789, %v1855
    %v1876 = vmul.f32 %v1790, %v1856
    %v1877 = vmul.f32 %v1791, %v1857
    %v1878 = vadd.f32 %v1837, %v1862
    %v1879 = vadd.f32 %v1838, %v1863
    %v1880 = vadd.f32 %v1839, %v1864
    %v1881 = vadd.f32 %v1840, %v1865
    %v1882 = vadd.f32 %v1841, %v1866
    %v1883 = vadd.f32 %v1842, %v1867
    %v1884 = vadd.f32 %v1843, %v1868
    %v1885 = vadd.f32 %v1844, %v1869
    %v1886 = vadd.f32 %v1845, %v1870
    %v1887 = vadd.f32 %v1846, %v1871
    %v1888 = vadd.f32 %v1847, %v1872
    %v1889 = vadd.f32 %v1848, %v1873
    %v1890 = vadd.f32 %v1849, %v1874
    %v1891 = vadd.f32 %v1850, %v1875
    %v1892 = vadd.f32 %v1851, %v1876
    %v1893 = vadd.f32 %v1852, %v1877
    %v1894 = vadd.f32 %v1878, %v1792
    %v1895 = vadd.f32 %v1879, %v1793
    %v1896 = vadd.f32 %v1880, %v1794
    %v1897 = vadd.f32 %v1881, %v1795
    %v1898 = vadd.f32 %v1882, %v1796
    %v1899 = vadd.f32 %v1883, %v1797
    %v1900 = vadd.f32 %v1884, %v1798
    %v1901 = vadd.f32 %v1885, %v1799
    %v1902 = vadd.f32 %v1886, %v1800
    %v1903 = vadd.f32 %v1887, %v1801
    %v1904 = vadd.f32 %v1888, %v1802
    %v1905 = vadd.f32 %v1889, %v1803
    %v1906 = vadd.f32 %v1890, %v1804
    %v1907 = vadd.f32 %v1891, %v1805
    %v1908 = vadd.f32 %v1892, %v1806
    %v1909 = vadd.f32 %v1893, %v1807
    %v1910 = vtanh.pop %v1894
    %v1911 = vtanh.pop %v1895
    %v1912 = vtanh.pop %v1896
    %v1913 = vtanh.pop %v1897
    %v1914 = vtanh.pop %v1898
    %v1915 = vtanh.pop %v1899
    %v1916 = vtanh.pop %v1900
    %v1917 = vtanh.pop %v1901
    %v1918 = vtanh.pop %v1902
    %v1919 = vtanh.pop %v1903
    %v1920 = vtanh.pop %v1904
    %v1921 = vtanh.pop %v1905
    %v1922 = vtanh.pop %v1906
    %v1923 = vtanh.pop %v1907
    %v1924 = vtanh.pop %v1908
    %v1925 = vtanh.pop %v1909
    %v1926 = vmul.f32 %v1910, %v1808
    %v1927 = vmul.f32 %v1911, %v1809
    %v1928 = vmul.f32 %v1912, %v1810
    %v1929 = vmul.f32 %v1913, %v1811
    %v1930 = vmul.f32 %v1914, %v1812
    %v1931 = vmul.f32 %v1915, %v1813
    %v1932 = vmul.f32 %v1916, %v1814
    %v1933 = vmul.f32 %v1917, %v1815
    %v1934 = vmul.f32 %v1918, %v1816
    %v1935 = vmul.f32 %v1919, %v1817
    %v1936 = vmul.f32 %v1920, %v1818
    %v1937 = vmul.f32 %v1921, %v1819
    %v1938 = vmul.f32 %v1922, %v1820
    %v1939 = vmul.f32 %v1923, %v1821
    %v1940 = vmul.f32 %v1924, %v1822
    %v1941 = vmul.f32 %v1925, %v1823
    %v1942 = vadd.f32 %v1926, %v1930
    %v1943 = vadd.f32 %v1942, %v1934
    %v1944 = vadd.f32 %v1943, %v1938
    %v1945 = vrot.slane %v1944, 4
    %v1946 = vadd.f32 %v1944, %v1945
    %v1947 = vrot.slane %v1946, 2
    %v1948 = vadd.f32 %v1946, %v1947
    %v1949 = vrot.slane %v1948, 1
    %v1950 = vadd.f32 %v1948, %v1949
    %v1951 = vadd.f32 %v1927, %v1931
    %v1952 = vadd.f32 %v1951, %v1935
    %v1953 = vadd.f32 %v1952, %v1939
    %v1954 = vrot.slane %v1953, 4
    %v1955 = vadd.f32 %v1953, %v1954
    %v1956 = vrot.slane %v1955, 2
    %v1957 = vadd.f32 %v1955, %v1956
    %v1958 = vrot.slane %v1957, 1
    %v1959 = vadd.f32 %v1957, %v1958
    %v1960 = vadd.f32 %v1928, %v1932
    %v1961 = vadd.f32 %v1960, %v1936
    %v1962 = vadd.f32 %v1961, %v1940
    %v1963 = vrot.slane %v1962, 4
    %v1964 = vadd.f32 %v1962, %v1963
    %v1965 = vrot.slane %v1964, 2
    %v1966 = vadd.f32 %v1964, %v1965
    %v1967 = vrot.slane %v1966, 1
    %v1968 = vadd.f32 %v1966, %v1967
    %v1969 = vadd.f32 %v1929, %v1933
    %v1970 = vadd.f32 %v1969, %v1937
    %v1971 = vadd.f32 %v1970, %v1941
    %v1972 = vrot.slane %v1971, 4
    %v1973 = vadd.f32 %v1971, %v1972
    %v1974 = vrot.slane %v1973, 2
    %v1975 = vadd.f32 %v1973, %v1974
    %v1976 = vrot.slane %v1975, 1
    %v1977 = vadd.f32 %v1975, %v1976
    %v1978 = vld [vmem:[%s2] sm:$0xf]
    %v1980 = vperm.slane %v1978, 0
    %v1981 = vperm.slane %v1978, 1
    %v1982 = vperm.slane %v1978, 2
    %v1983 = vperm.slane %v1978, 3
    %v1988 = vadd.f32 %v1950, %v1980
    %v1989 = vadd.f32 %v1959, %v1981
    %v1990 = vadd.f32 %v1968, %v1982
    %v1991 = vadd.f32 %v1977, %v1983
    %v1996 = vrot.slane %v1989, 7
    %v1997 = vrot.slane %v1990, 6
    %v1998 = vrot.slane %v1991, 5
    %v1999 = vsel %vm271, %v1988, %v1996
    %v2000 = vsel %vm273, %v1997, %v1998
    %v2001 = vsel %vm275, %v1999, %v2000
    %s2003 = scalar_lea.vmem %s3, 7
    %2004 = vst.msk [vmem:[%s2003] ss:$8 sm:$0xf] %vm281, %v2001
    %2005 = vst.msk [vmem:[%s2003] ss:$8 sm:$0x0] %vm281, %v2001
    %v2006 = vld [vmem:[#allocation2] sm:$0xff]
    %v2007 = vld [vmem:[#allocation2 + $0x8] sm:$0xff]
    %v2008 = vld [vmem:[#allocation2 + $0x10] sm:$0xff]
    %v2009 = vld [vmem:[#allocation2 + $0x18] sm:$0xff]
    %v2010 = vld [vmem:[#allocation2 + $0x20] sm:$0xff]
    %v2011 = vld [vmem:[#allocation2 + $0x28] sm:$0xff]
    %v2012 = vld [vmem:[#allocation2 + $0x30] sm:$0xff]
    %v2013 = vld [vmem:[#allocation2 + $0x38] sm:$0xff]
    %v2014 = vld [vmem:[#allocation2 + $0x40] sm:$0xff]
    %v2015 = vld [vmem:[#allocation2 + $0x48] sm:$0xff]
    %v2016 = vld [vmem:[#allocation2 + $0x50] sm:$0xff]
    %v2017 = vld [vmem:[#allocation2 + $0x58] sm:$0xff]
    %v2018 = vld [vmem:[#allocation2 + $0x60] sm:$0xff]
    %v2019 = vld [vmem:[#allocation2 + $0x68] sm:$0xff]
    %v2020 = vld [vmem:[#allocation2 + $0x70] sm:$0xff]
    %v2021 = vld [vmem:[#allocation2 + $0x78] sm:$0xff]
    %v2022 = vld [vmem:[%s46] sm:$0xff]
    %v2023 = vld [vmem:[%s46 + $0x8] sm:$0xff]
    %v2024 = vld [vmem:[%s46 + $0x10] sm:$0xff]
    %v2025 = vld [vmem:[%s46 + $0x18] sm:$0xff]
    %v2026 = vld [vmem:[%s46 + $0x20] sm:$0xff]
    %v2027 = vld [vmem:[%s46 + $0x28] sm:$0xff]
    %v2028 = vld [vmem:[%s46 + $0x30] sm:$0xff]
    %v2029 = vld [vmem:[%s46 + $0x38] sm:$0xff]
    %v2030 = vld [vmem:[%s46 + $0x40] sm:$0xff]
    %v2031 = vld [vmem:[%s46 + $0x48] sm:$0xff]
    %v2032 = vld [vmem:[%s46 + $0x50] sm:$0xff]
    %v2033 = vld [vmem:[%s46 + $0x58] sm:$0xff]
    %v2034 = vld [vmem:[%s46 + $0x60] sm:$0xff]
    %v2035 = vld [vmem:[%s46 + $0x68] sm:$0xff]
    %v2036 = vld [vmem:[%s46 + $0x70] sm:$0xff]
    %v2037 = vld [vmem:[%s46 + $0x78] sm:$0xff]
    %v2038 = vld [vmem:[%s63] sm:$0xff]
    %v2039 = vld [vmem:[%s63 + $0x8] sm:$0xff]
    %v2040 = vld [vmem:[%s63 + $0x10] sm:$0xff]
    %v2041 = vld [vmem:[%s63 + $0x18] sm:$0xff]
    %v2042 = vld [vmem:[%s63 + $0x20] sm:$0xff]
    %v2043 = vld [vmem:[%s63 + $0x28] sm:$0xff]
    %v2044 = vld [vmem:[%s63 + $0x30] sm:$0xff]
    %v2045 = vld [vmem:[%s63 + $0x38] sm:$0xff]
    %v2046 = vld [vmem:[%s63 + $0x40] sm:$0xff]
    %v2047 = vld [vmem:[%s63 + $0x48] sm:$0xff]
    %v2048 = vld [vmem:[%s63 + $0x50] sm:$0xff]
    %v2049 = vld [vmem:[%s63 + $0x58] sm:$0xff]
    %v2050 = vld [vmem:[%s63 + $0x60] sm:$0xff]
    %v2051 = vld [vmem:[%s63 + $0x68] sm:$0xff]
    %v2052 = vld [vmem:[%s63 + $0x70] sm:$0xff]
    %v2053 = vld [vmem:[%s63 + $0x78] sm:$0xff]
    %v2054 = vld [vmem:[%s80] sm:$0xff]
    %v2055 = vld [vmem:[%s80 + $0x8] sm:$0xff]
    %v2056 = vld [vmem:[%s80 + $0x10] sm:$0xff]
    %v2057 = vld [vmem:[%s80 + $0x18] sm:$0xff]
    %v2058 = vld [vmem:[%s80 + $0x20] sm:$0xff]
    %v2059 = vld [vmem:[%s80 + $0x28] sm:$0xff]
    %v2060 = vld [vmem:[%s80 + $0x30] sm:$0xff]
    %v2061 = vld [vmem:[%s80 + $0x38] sm:$0xff]
    %v2062 = vld [vmem:[%s80 + $0x40] sm:$0xff]
    %v2063 = vld [vmem:[%s80 + $0x48] sm:$0xff]
    %v2064 = vld [vmem:[%s80 + $0x50] sm:$0xff]
    %v2065 = vld [vmem:[%s80 + $0x58] sm:$0xff]
    %v2066 = vld [vmem:[%s80 + $0x60] sm:$0xff]
    %v2067 = vld [vmem:[%s80 + $0x68] sm:$0xff]
    %v2068 = vld [vmem:[%s80 + $0x70] sm:$0xff]
    %v2069 = vld [vmem:[%s80 + $0x78] sm:$0xff]
    %s2070 = scalar_lea.vmem %s0, 32
    %v2071 = vld [vmem:[%s2070] ss:$8 sm:$0xf]
    %s2072 = scalar_lea.vmem %s98, 32
    %v2073 = vld [vmem:[%s2072] ss:$8 sm:$0xf]
    %v2075 = vperm.slane %v2071, 0
    %v2076 = vperm.slane %v2071, 1
    %v2077 = vperm.slane %v2071, 2
    %v2078 = vperm.slane %v2071, 3
    %v2083 = vmul.f32 %v2006, %v2075
    %v2084 = vmul.f32 %v2007, %v2076
    %v2085 = vmul.f32 %v2008, %v2077
    %v2086 = vmul.f32 %v2009, %v2078
    %v2087 = vmul.f32 %v2010, %v2075
    %v2088 = vmul.f32 %v2011, %v2076
    %v2089 = vmul.f32 %v2012, %v2077
    %v2090 = vmul.f32 %v2013, %v2078
    %v2091 = vmul.f32 %v2014, %v2075
    %v2092 = vmul.f32 %v2015, %v2076
    %v2093 = vmul.f32 %v2016, %v2077
    %v2094 = vmul.f32 %v2017, %v2078
    %v2095 = vmul.f32 %v2018, %v2075
    %v2096 = vmul.f32 %v2019, %v2076
    %v2097 = vmul.f32 %v2020, %v2077
    %v2098 = vmul.f32 %v2021, %v2078
    %v2100 = vperm.slane %v2073, 0
    %v2101 = vperm.slane %v2073, 1
    %v2102 = vperm.slane %v2073, 2
    %v2103 = vperm.slane %v2073, 3
    %v2108 = vmul.f32 %v2022, %v2100
    %v2109 = vmul.f32 %v2023, %v2101
    %v2110 = vmul.f32 %v2024, %v2102
    %v2111 = vmul.f32 %v2025, %v2103
    %v2112 = vmul.f32 %v2026, %v2100
    %v2113 = vmul.f32 %v2027, %v2101
    %v2114 = vmul.f32 %v2028, %v2102
    %v2115 = vmul.f32 %v2029, %v2103
    %v2116 = vmul.f32 %v2030, %v2100
    %v2117 = vmul.f32 %v2031, %v2101
    %v2118 = vmul.f32 %v2032, %v2102
    %v2119 = vmul.f32 %v2033, %v2103
    %v2120 = vmul.f32 %v2034, %v2100
    %v2121 = vmul.f32 %v2035, %v2101
    %v2122 = vmul.f32 %v2036, %v2102
    %v2123 = vmul.f32 %v2037, %v2103
    %v2124 = vadd.f32 %v2083, %v2108
    %v2125 = vadd.f32 %v2084, %v2109
    %v2126 = vadd.f32 %v2085, %v2110
    %v2127 = vadd.f32 %v2086, %v2111
    %v2128 = vadd.f32 %v2087, %v2112
    %v2129 = vadd.f32 %v2088, %v2113
    %v2130 = vadd.f32 %v2089, %v2114
    %v2131 = vadd.f32 %v2090, %v2115
    %v2132 = vadd.f32 %v2091, %v2116
    %v2133 = vadd.f32 %v2092, %v2117
    %v2134 = vadd.f32 %v2093, %v2118
    %v2135 = vadd.f32 %v2094, %v2119
    %v2136 = vadd.f32 %v2095, %v2120
    %v2137 = vadd.f32 %v2096, %v2121
    %v2138 = vadd.f32 %v2097, %v2122
    %v2139 = vadd.f32 %v2098, %v2123
    %v2140 = vadd.f32 %v2124, %v2038
    %v2141 = vadd.f32 %v2125, %v2039
    %v2142 = vadd.f32 %v2126, %v2040
    %v2143 = vadd.f32 %v2127, %v2041
    %v2144 = vadd.f32 %v2128, %v2042
    %v2145 = vadd.f32 %v2129, %v2043
    %v2146 = vadd.f32 %v2130, %v2044
    %v2147 = vadd.f32 %v2131, %v2045
    %v2148 = vadd.f32 %v2132, %v2046
    %v2149 = vadd.f32 %v2133, %v2047
    %v2150 = vadd.f32 %v2134, %v2048
    %v2151 = vadd.f32 %v2135, %v2049
    %v2152 = vadd.f32 %v2136, %v2050
    %v2153 = vadd.f32 %v2137, %v2051
    %v2154 = vadd.f32 %v2138, %v2052
    %v2155 = vadd.f32 %v2139, %v2053
    %v2156 = vtanh.pop %v2140
    %v2157 = vtanh.pop %v2141
    %v2158 = vtanh.pop %v2142
    %v2159 = vtanh.pop %v2143
    %v2160 = vtanh.pop %v2144
    %v2161 = vtanh.pop %v2145
    %v2162 = vtanh.pop %v2146
    %v2163 = vtanh.pop %v2147
    %v2164 = vtanh.pop %v2148
    %v2165 = vtanh.pop %v2149
    %v2166 = vtanh.pop %v2150
    %v2167 = vtanh.pop %v2151
    %v2168 = vtanh.pop %v2152
    %v2169 = vtanh.pop %v2153
    %v2170 = vtanh.pop %v2154
    %v2171 = vtanh.pop %v2155
    %v2172 = vmul.f32 %v2156, %v2054
    %v2173 = vmul.f32 %v2157, %v2055
    %v2174 = vmul.f32 %v2158, %v2056
    %v2175 = vmul.f32 %v2159, %v2057
    %v2176 = vmul.f32 %v2160, %v2058
    %v2177 = vmul.f32 %v2161, %v2059
    %v2178 = vmul.f32 %v2162, %v2060
    %v2179 = vmul.f32 %v2163, %v2061
    %v2180 = vmul.f32 %v2164, %v2062
    %v2181 = vmul.f32 %v2165, %v2063
    %v2182 = vmul.f32 %v2166, %v2064
    %v2183 = vmul.f32 %v2167, %v2065
    %v2184 = vmul.f32 %v2168, %v2066
    %v2185 = vmul.f32 %v2169, %v2067
    %v2186 = vmul.f32 %v2170, %v2068
    %v2187 = vmul.f32 %v2171, %v2069
    %v2188 = vadd.f32 %v2172, %v2176
    %v2189 = vadd.f32 %v2188, %v2180
    %v2190 = vadd.f32 %v2189, %v2184
    %v2191 = vrot.slane %v2190, 4
    %v2192 = vadd.f32 %v2190, %v2191
    %v2193 = vrot.slane %v2192, 2
    %v2194 = vadd.f32 %v2192, %v2193
    %v2195 = vrot.slane %v2194, 1
    %v2196 = vadd.f32 %v2194, %v2195
    %v2197 = vadd.f32 %v2173, %v2177
    %v2198 = vadd.f32 %v2197, %v2181
    %v2199 = vadd.f32 %v2198, %v2185
    %v2200 = vrot.slane %v2199, 4
    %v2201 = vadd.f32 %v2199, %v2200
    %v2202 = vrot.slane %v2201, 2
    %v2203 = vadd.f32 %v2201, %v2202
    %v2204 = vrot.slane %v2203, 1
    %v2205 = vadd.f32 %v2203, %v2204
    %v2206 = vadd.f32 %v2174, %v2178
    %v2207 = vadd.f32 %v2206, %v2182
    %v2208 = vadd.f32 %v2207, %v2186
    %v2209 = vrot.slane %v2208, 4
    %v2210 = vadd.f32 %v2208, %v2209
    %v2211 = vrot.slane %v2210, 2
    %v2212 = vadd.f32 %v2210, %v2211
    %v2213 = vrot.slane %v2212, 1
    %v2214 = vadd.f32 %v2212, %v2213
    %v2215 = vadd.f32 %v2175, %v2179
    %v2216 = vadd.f32 %v2215, %v2183
    %v2217 = vadd.f32 %v2216, %v2187
    %v2218 = vrot.slane %v2217, 4
    %v2219 = vadd.f32 %v2217, %v2218
    %v2220 = vrot.slane %v2219, 2
    %v2221 = vadd.f32 %v2219, %v2220
    %v2222 = vrot.slane %v2221, 1
    %v2223 = vadd.f32 %v2221, %v2222
    %v2224 = vld [vmem:[%s2] sm:$0xf]
    %v2226 = vperm.slane %v2224, 0
    %v2227 = vperm.slane %v2224, 1
    %v2228 = vperm.slane %v2224, 2
    %v2229 = vperm.slane %v2224, 3
    %v2234 = vadd.f32 %v2196, %v2226
    %v2235 = vadd.f32 %v2205, %v2227
    %v2236 = vadd.f32 %v2214, %v2228
    %v2237 = vadd.f32 %v2223, %v2229
    %v2242 = vrot.slane %v2235, 7
    %v2243 = vrot.slane %v2236, 6
    %v2244 = vrot.slane %v2237, 5
    %v2245 = vsel %vm271, %v2234, %v2242
    %v2246 = vsel %vm273, %v2243, %v2244
    %v2247 = vsel %vm275, %v2245, %v2246
    %s2249 = scalar_lea.vmem %s3, 32
    %2250 = vst.msk [vmem:[%s2249] ss:$8 sm:$0xf] %vm281, %v2247
    %2251 = vst.msk [vmem:[%s2249] ss:$8 sm:$0x0] %vm281, %v2247
    %v2252 = vld [vmem:[#allocation2] sm:$0xff]
    %v2253 = vld [vmem:[#allocation2 + $0x8] sm:$0xff]
    %v2254 = vld [vmem:[#allocation2 + $0x10] sm:$0xff]
    %v2255 = vld [vmem:[#allocation2 + $0x18] sm:$0xff]
    %v2256 = vld [vmem:[#allocation2 + $0x20] sm:$0xff]
    %v2257 = vld [vmem:[#allocation2 + $0x28] sm:$0xff]
    %v2258 = vld [vmem:[#allocation2 + $0x30] sm:$0xff]
    %v2259 = vld [vmem:[#allocation2 + $0x38] sm:$0xff]
    %v2260 = vld [vmem:[#allocation2 + $0x40] sm:$0xff]
    %v2261 = vld [vmem:[#allocation2 + $0x48] sm:$0xff]
    %v2262 = vld [vmem:[#allocation2 + $0x50] sm:$0xff]
    %v2263 = vld [vmem:[#allocation2 + $0x58] sm:$0xff]
    %v2264 = vld [vmem:[#allocation2 + $0x60] sm:$0xff]
    %v2265 = vld [vmem:[#allocation2 + $0x68] sm:$0xff]
    %v2266 = vld [vmem:[#allocation2 + $0x70] sm:$0xff]
    %v2267 = vld [vmem:[#allocation2 + $0x78] sm:$0xff]
    %v2268 = vld [vmem:[%s46] sm:$0xff]
    %v2269 = vld [vmem:[%s46 + $0x8] sm:$0xff]
    %v2270 = vld [vmem:[%s46 + $0x10] sm:$0xff]
    %v2271 = vld [vmem:[%s46 + $0x18] sm:$0xff]
    %v2272 = vld [vmem:[%s46 + $0x20] sm:$0xff]
    %v2273 = vld [vmem:[%s46 + $0x28] sm:$0xff]
    %v2274 = vld [vmem:[%s46 + $0x30] sm:$0xff]
    %v2275 = vld [vmem:[%s46 + $0x38] sm:$0xff]
    %v2276 = vld [vmem:[%s46 + $0x40] sm:$0xff]
    %v2277 = vld [vmem:[%s46 + $0x48] sm:$0xff]
    %v2278 = vld [vmem:[%s46 + $0x50] sm:$0xff]
    %v2279 = vld [vmem:[%s46 + $0x58] sm:$0xff]
    %v2280 = vld [vmem:[%s46 + $0x60] sm:$0xff]
    %v2281 = vld [vmem:[%s46 + $0x68] sm:$0xff]
    %v2282 = vld [vmem:[%s46 + $0x70] sm:$0xff]
    %v2283 = vld [vmem:[%s46 + $0x78] sm:$0xff]
    %v2284 = vld [vmem:[%s63] sm:$0xff]
    %v2285 = vld [vmem:[%s63 + $0x8] sm:$0xff]
    %v2286 = vld [vmem:[%s63 + $0x10] sm:$0xff]
    %v2287 = vld [vmem:[%s63 + $0x18] sm:$0xff]
    %v2288 = vld [vmem:[%s63 + $0x20] sm:$0xff]
    %v2289 = vld [vmem:[%s63 + $0x28] sm:$0xff]
    %v2290 = vld [vmem:[%s63 + $0x30] sm:$0xff]
    %v2291 = vld [vmem:[%s63 + $0x38] sm:$0xff]
    %v2292 = vld [vmem:[%s63 + $0x40] sm:$0xff]
    %v2293 = vld [vmem:[%s63 + $0x48] sm:$0xff]
    %v2294 = vld [vmem:[%s63 + $0x50] sm:$0xff]
    %v2295 = vld [vmem:[%s63 + $0x58] sm:$0xff]
    %v2296 = vld [vmem:[%s63 + $0x60] sm:$0xff]
    %v2297 = vld [vmem:[%s63 + $0x68] sm:$0xff]
    %v2298 = vld [vmem:[%s63 + $0x70] sm:$0xff]
    %v2299 = vld [vmem:[%s63 + $0x78] sm:$0xff]
    %v2300 = vld [vmem:[%s80] sm:$0xff]
    %v2301 = vld [vmem:[%s80 + $0x8] sm:$0xff]
    %v2302 = vld [vmem:[%s80 + $0x10] sm:$0xff]
    %v2303 = vld [vmem:[%s80 + $0x18] sm:$0xff]
    %v2304 = vld [vmem:[%s80 + $0x20] sm:$0xff]
    %v2305 = vld [vmem:[%s80 + $0x28] sm:$0xff]
    %v2306 = vld [vmem:[%s80 + $0x30] sm:$0xff]
    %v2307 = vld [vmem:[%s80 + $0x38] sm:$0xff]
    %v2308 = vld [vmem:[%s80 + $0x40] sm:$0xff]
    %v2309 = vld [vmem:[%s80 + $0x48] sm:$0xff]
    %v2310 = vld [vmem:[%s80 + $0x50] sm:$0xff]
    %v2311 = vld [vmem:[%s80 + $0x58] sm:$0xff]
    %v2312 = vld [vmem:[%s80 + $0x60] sm:$0xff]
    %v2313 = vld [vmem:[%s80 + $0x68] sm:$0xff]
    %v2314 = vld [vmem:[%s80 + $0x70] sm:$0xff]
    %v2315 = vld [vmem:[%s80 + $0x78] sm:$0xff]
    %s2316 = scalar_lea.vmem %s0, 33
    %v2317 = vld [vmem:[%s2316] ss:$8 sm:$0xf]
    %s2318 = scalar_lea.vmem %s98, 33
    %v2319 = vld [vmem:[%s2318] ss:$8 sm:$0xf]
    %v2321 = vperm.slane %v2317, 0
    %v2322 = vperm.slane %v2317, 1
    %v2323 = vperm.slane %v2317, 2
    %v2324 = vperm.slane %v2317, 3
    %v2329 = vmul.f32 %v2252, %v2321
    %v2330 = vmul.f32 %v2253, %v2322
    %v2331 = vmul.f32 %v2254, %v2323
    %v2332 = vmul.f32 %v2255, %v2324
    %v2333 = vmul.f32 %v2256, %v2321
    %v2334 = vmul.f32 %v2257, %v2322
    %v2335 = vmul.f32 %v2258, %v2323
    %v2336 = vmul.f32 %v2259, %v2324
    %v2337 = vmul.f32 %v2260, %v2321
    %v2338 = vmul.f32 %v2261, %v2322
    %v2339 = vmul.f32 %v2262, %v2323
    %v2340 = vmul.f32 %v2263, %v2324
    %v2341 = vmul.f32 %v2264, %v2321
    %v2342 = vmul.f32 %v2265, %v2322
    %v2343 = vmul.f32 %v2266, %v2323
    %v2344 = vmul.f32 %v2267, %v2324
    %v2346 = vperm.slane %v2319, 0
    %v2347 = vperm.slane %v2319, 1
    %v2348 = vperm.slane %v2319, 2
    %v2349 = vperm.slane %v2319, 3
    %v2354 = vmul.f32 %v2268, %v2346
    %v2355 = vmul.f32 %v2269, %v2347
    %v2356 = vmul.f32 %v2270, %v2348
    %v2357 = vmul.f32 %v2271, %v2349
    %v2358 = vmul.f32 %v2272, %v2346
    %v2359 = vmul.f32 %v2273, %v2347
    %v2360 = vmul.f32 %v2274, %v2348
    %v2361 = vmul.f32 %v2275, %v2349
    %v2362 = vmul.f32 %v2276, %v2346
    %v2363 = vmul.f32 %v2277, %v2347
    %v2364 = vmul.f32 %v2278, %v2348
    %v2365 = vmul.f32 %v2279, %v2349
    %v2366 = vmul.f32 %v2280, %v2346
    %v2367 = vmul.f32 %v2281, %v2347
    %v2368 = vmul.f32 %v2282, %v2348
    %v2369 = vmul.f32 %v2283, %v2349
    %v2370 = vadd.f32 %v2329, %v2354
    %v2371 = vadd.f32 %v2330, %v2355
    %v2372 = vadd.f32 %v2331, %v2356
    %v2373 = vadd.f32 %v2332, %v2357
    %v2374 = vadd.f32 %v2333, %v2358
    %v2375 = vadd.f32 %v2334, %v2359
    %v2376 = vadd.f32 %v2335, %v2360
    %v2377 = vadd.f32 %v2336, %v2361
    %v2378 = vadd.f32 %v2337, %v2362
    %v2379 = vadd.f32 %v2338, %v2363
    %v2380 = vadd.f32 %v2339, %v2364
    %v2381 = vadd.f32 %v2340, %v2365
    %v2382 = vadd.f32 %v2341, %v2366
    %v2383 = vadd.f32 %v2342, %v2367
    %v2384 = vadd.f32 %v2343, %v2368
    %v2385 = vadd.f32 %v2344, %v2369
    %v2386 = vadd.f32 %v2370, %v2284
    %v2387 = vadd.f32 %v2371, %v2285
    %v2388 = vadd.f32 %v2372, %v2286
    %v2389 = vadd.f32 %v2373, %v2287
    %v2390 = vadd.f32 %v2374, %v2288
    %v2391 = vadd.f32 %v2375, %v2289
    %v2392 = vadd.f32 %v2376, %v2290
    %v2393 = vadd.f32 %v2377, %v2291
    %v2394 = vadd.f32 %v2378, %v2292
    %v2395 = vadd.f32 %v2379, %v2293
    %v2396 = vadd.f32 %v2380, %v2294
    %v2397 = vadd.f32 %v2381, %v2295
    %v2398 = vadd.f32 %v2382, %v2296
    %v2399 = vadd.f32 %v2383, %v2297
    %v2400 = vadd.f32 %v2384, %v2298
    %v2401 = vadd.f32 %v2385, %v2299
    %v2402 = vtanh.pop %v2386
    %v2403 = vtanh.pop %v2387
    %v2404 = vtanh.pop %v2388
    %v2405 = vtanh.pop %v2389
    %v2406 = vtanh.pop %v2390
    %v2407 = vtanh.pop %v2391
    %v2408 = vtanh.pop %v2392
    %v2409 = vtanh.pop %v2393
    %v2410 = vtanh.pop %v2394
    %v2411 = vtanh.pop %v2395
    %v2412 = vtanh.pop %v2396
    %v2413 = vtanh.pop %v2397
    %v2414 = vtanh.pop %v2398
    %v2415 = vtanh.pop %v2399
    %v2416 = vtanh.pop %v2400
    %v2417 = vtanh.pop %v2401
    %v2418 = vmul.f32 %v2402, %v2300
    %v2419 = vmul.f32 %v2403, %v2301
    %v2420 = vmul.f32 %v2404, %v2302
    %v2421 = vmul.f32 %v2405, %v2303
    %v2422 = vmul.f32 %v2406, %v2304
    %v2423 = vmul.f32 %v2407, %v2305
    %v2424 = vmul.f32 %v2408, %v2306
    %v2425 = vmul.f32 %v2409, %v2307
    %v2426 = vmul.f32 %v2410, %v2308
    %v2427 = vmul.f32 %v2411, %v2309
    %v2428 = vmul.f32 %v2412, %v2310
    %v2429 = vmul.f32 %v2413, %v2311
    %v2430 = vmul.f32 %v2414, %v2312
    %v2431 = vmul.f32 %v2415, %v2313
    %v2432 = vmul.f32 %v2416, %v2314
    %v2433 = vmul.f32 %v2417, %v2315
    %v2434 = vadd.f32 %v2418, %v2422
    %v2435 = vadd.f32 %v2434, %v2426
    %v2436 = vadd.f32 %v2435, %v2430
    %v2437 = vrot.slane %v2436, 4
    %v2438 = vadd.f32 %v2436, %v2437
    %v2439 = vrot.slane %v2438, 2
    %v2440 = vadd.f32 %v2438, %v2439
    %v2441 = vrot.slane %v2440, 1
    %v2442 = vadd.f32 %v2440, %v2441
    %v2443 = vadd.f32 %v2419, %v2423
    %v2444 = vadd.f32 %v2443, %v2427
    %v2445 = vadd.f32 %v2444, %v2431
    %v2446 = vrot.slane %v2445, 4
    %v2447 = vadd.f32 %v2445, %v2446
    %v2448 = vrot.slane %v2447, 2
    %v2449 = vadd.f32 %v2447, %v2448
    %v2450 = vrot.slane %v2449, 1
    %v2451 = vadd.f32 %v2449, %v2450
    %v2452 = vadd.f32 %v2420, %v2424
    %v2453 = vadd.f32 %v2452, %v2428
    %v2454 = vadd.f32 %v2453, %v2432
    %v2455 = vrot.slane %v2454, 4
    %v2456 = vadd.f32 %v2454, %v2455
    %v2457 = vrot.slane %v2456, 2
    %v2458 = vadd.f32 %v2456, %v2457
    %v2459 = vrot.slane %v2458, 1
    %v2460 = vadd.f32 %v2458, %v2459
    %v2461 = vadd.f32 %v2421, %v2425
    %v2462 = vadd.f32 %v2461, %v2429
    %v2463 = vadd.f32 %v2462, %v2433
    %v2464 = vrot.slane %v2463, 4
    %v2465 = vadd.f32 %v2463, %v2464
    %v2466 = vrot.slane %v2465, 2
    %v2467 = vadd.f32 %v2465, %v2466
    %v2468 = vrot.slane %v2467, 1
    %v2469 = vadd.f32 %v2467, %v2468
    %v2470 = vld [vmem:[%s2] sm:$0xf]
    %v2472 = vperm.slane %v2470, 0
    %v2473 = vperm.slane %v2470, 1
    %v2474 = vperm.slane %v2470, 2
    %v2475 = vperm.slane %v2470, 3
    %v2480 = vadd.f32 %v2442, %v2472
    %v2481 = vadd.f32 %v2451, %v2473
    %v2482 = vadd.f32 %v2460, %v2474
    %v2483 = vadd.f32 %v2469, %v2475
    %v2488 = vrot.slane %v2481, 7
    %v2489 = vrot.slane %v2482, 6
    %v2490 = vrot.slane %v2483, 5
    %v2491 = vsel %vm271, %v2480, %v2488
    %v2492 = vsel %vm273, %v2489, %v2490
    %v2493 = vsel %vm275, %v2491, %v2492
    %s2495 = scalar_lea.vmem %s3, 33
    %2496 = vst.msk [vmem:[%s2495] ss:$8 sm:$0xf] %vm281, %v2493
    %2497 = vst.msk [vmem:[%s2495] ss:$8 sm:$0x0] %vm281, %v2493
    %v2498 = vld [vmem:[#allocation2] sm:$0xff]
    %v2499 = vld [vmem:[#allocation2 + $0x8] sm:$0xff]
    %v2500 = vld [vmem:[#allocation2 + $0x10] sm:$0xff]
    %v2501 = vld [vmem:[#allocation2 + $0x18] sm:$0xff]
    %v2502 = vld [vmem:[#allocation2 + $0x20] sm:$0xff]
    %v2503 = vld [vmem:[#allocation2 + $0x28] sm:$0xff]
    %v2504 = vld [vmem:[#allocation2 + $0x30] sm:$0xff]
    %v2505 = vld [vmem:[#allocation2 + $0x38] sm:$0xff]
    %v2506 = vld [vmem:[#allocation2 + $0x40] sm:$0xff]
    %v2507 = vld [vmem:[#allocation2 + $0x48] sm:$0xff]
    %v2508 = vld [vmem:[#allocation2 + $0x50] sm:$0xff]
    %v2509 = vld [vmem:[#allocation2 + $0x58] sm:$0xff]
    %v2510 = vld [vmem:[#allocation2 + $0x60] sm:$0xff]
    %v2511 = vld [vmem:[#allocation2 + $0x68] sm:$0xff]
    %v2512 = vld [vmem:[#allocation2 + $0x70] sm:$0xff]
    %v2513 = vld [vmem:[#allocation2 + $0x78] sm:$0xff]
    %v2514 = vld [vmem:[%s46] sm:$0xff]
    %v2515 = vld [vmem:[%s46 + $0x8] sm:$0xff]
    %v2516 = vld [vmem:[%s46 + $0x10] sm:$0xff]
    %v2517 = vld [vmem:[%s46 + $0x18] sm:$0xff]
    %v2518 = vld [vmem:[%s46 + $0x20] sm:$0xff]
    %v2519 = vld [vmem:[%s46 + $0x28] sm:$0xff]
    %v2520 = vld [vmem:[%s46 + $0x30] sm:$0xff]
    %v2521 = vld [vmem:[%s46 + $0x38] sm:$0xff]
    %v2522 = vld [vmem:[%s46 + $0x40] sm:$0xff]
    %v2523 = vld [vmem:[%s46 + $0x48] sm:$0xff]
    %v2524 = vld [vmem:[%s46 + $0x50] sm:$0xff]
    %v2525 = vld [vmem:[%s46 + $0x58] sm:$0xff]
    %v2526 = vld [vmem:[%s46 + $0x60] sm:$0xff]
    %v2527 = vld [vmem:[%s46 + $0x68] sm:$0xff]
    %v2528 = vld [vmem:[%s46 + $0x70] sm:$0xff]
    %v2529 = vld [vmem:[%s46 + $0x78] sm:$0xff]
    %v2530 = vld [vmem:[%s63] sm:$0xff]
    %v2531 = vld [vmem:[%s63 + $0x8] sm:$0xff]
    %v2532 = vld [vmem:[%s63 + $0x10] sm:$0xff]
    %v2533 = vld [vmem:[%s63 + $0x18] sm:$0xff]
    %v2534 = vld [vmem:[%s63 + $0x20] sm:$0xff]
    %v2535 = vld [vmem:[%s63 + $0x28] sm:$0xff]
    %v2536 = vld [vmem:[%s63 + $0x30] sm:$0xff]
    %v2537 = vld [vmem:[%s63 + $0x38] sm:$0xff]
    %v2538 = vld [vmem:[%s63 + $0x40] sm:$0xff]
    %v2539 = vld [vmem:[%s63 + $0x48] sm:$0xff]
    %v2540 = vld [vmem:[%s63 + $0x50] sm:$0xff]
    %v2541 = vld [vmem:[%s63 + $0x58] sm:$0xff]
    %v2542 = vld [vmem:[%s63 + $0x60] sm:$0xff]
    %v2543 = vld [vmem:[%s63 + $0x68] sm:$0xff]
    %v2544 = vld [vmem:[%s63 + $0x70] sm:$0xff]
    %v2545 = vld [vmem:[%s63 + $0x78] sm:$0xff]
    %v2546 = vld [vmem:[%s80] sm:$0xff]
    %v2547 = vld [vmem:[%s80 + $0x8] sm:$0xff]
    %v2548 = vld [vmem:[%s80 + $0x10] sm:$0xff]
    %v2549 = vld [vmem:[%s80 + $0x18] sm:$0xff]
    %v2550 = vld [vmem:[%s80 + $0x20] sm:$0xff]
    %v2551 = vld [vmem:[%s80 + $0x28] sm:$0xff]
    %v2552 = vld [vmem:[%s80 + $0x30] sm:$0xff]
    %v2553 = vld [vmem:[%s80 + $0x38] sm:$0xff]
    %v2554 = vld [vmem:[%s80 + $0x40] sm:$0xff]
    %v2555 = vld [vmem:[%s80 + $0x48] sm:$0xff]
    %v2556 = vld [vmem:[%s80 + $0x50] sm:$0xff]
    %v2557 = vld [vmem:[%s80 + $0x58] sm:$0xff]
    %v2558 = vld [vmem:[%s80 + $0x60] sm:$0xff]
    %v2559 = vld [vmem:[%s80 + $0x68] sm:$0xff]
    %v2560 = vld [vmem:[%s80 + $0x70] sm:$0xff]
    %v2561 = vld [vmem:[%s80 + $0x78] sm:$0xff]
    %s2562 = scalar_lea.vmem %s0, 34
    %v2563 = vld [vmem:[%s2562] ss:$8 sm:$0xf]
    %s2564 = scalar_lea.vmem %s98, 34
    %v2565 = vld [vmem:[%s2564] ss:$8 sm:$0xf]
    %v2567 = vperm.slane %v2563, 0
    %v2568 = vperm.slane %v2563, 1
    %v2569 = vperm.slane %v2563, 2
    %v2570 = vperm.slane %v2563, 3
    %v2575 = vmul.f32 %v2498, %v2567
    %v2576 = vmul.f32 %v2499, %v2568
    %v2577 = vmul.f32 %v2500, %v2569
    %v2578 = vmul.f32 %v2501, %v2570
    %v2579 = vmul.f32 %v2502, %v2567
    %v2580 = vmul.f32 %v2503, %v2568
    %v2581 = vmul.f32 %v2504, %v2569
    %v2582 = vmul.f32 %v2505, %v2570
    %v2583 = vmul.f32 %v2506, %v2567
    %v2584 = vmul.f32 %v2507, %v2568
    %v2585 = vmul.f32 %v2508, %v2569
    %v2586 = vmul.f32 %v2509, %v2570
    %v2587 = vmul.f32 %v2510, %v2567
    %v2588 = vmul.f32 %v2511, %v2568
    %v2589 = vmul.f32 %v2512, %v2569
    %v2590 = vmul.f32 %v2513, %v2570
    %v2592 = vperm.slane %v2565, 0
    %v2593 = vperm.slane %v2565, 1
    %v2594 = vperm.slane %v2565, 2
    %v2595 = vperm.slane %v2565, 3
    %v2600 = vmul.f32 %v2514, %v2592
    %v2601 = vmul.f32 %v2515, %v2593
    %v2602 = vmul.f32 %v2516, %v2594
    %v2603 = vmul.f32 %v2517, %v2595
    %v2604 = vmul.f32 %v2518, %v2592
    %v2605 = vmul.f32 %v2519, %v2593
    %v2606 = vmul.f32 %v2520, %v2594
    %v2607 = vmul.f32 %v2521, %v2595
    %v2608 = vmul.f32 %v2522, %v2592
    %v2609 = vmul.f32 %v2523, %v2593
    %v2610 = vmul.f32 %v2524, %v2594
    %v2611 = vmul.f32 %v2525, %v2595
    %v2612 = vmul.f32 %v2526, %v2592
    %v2613 = vmul.f32 %v2527, %v2593
    %v2614 = vmul.f32 %v2528, %v2594
    %v2615 = vmul.f32 %v2529, %v2595
    %v2616 = vadd.f32 %v2575, %v2600
    %v2617 = vadd.f32 %v2576, %v2601
    %v2618 = vadd.f32 %v2577, %v2602
    %v2619 = vadd.f32 %v2578, %v2603
    %v2620 = vadd.f32 %v2579, %v2604
    %v2621 = vadd.f32 %v2580, %v2605
    %v2622 = vadd.f32 %v2581, %v2606
    %v2623 = vadd.f32 %v2582, %v2607
    %v2624 = vadd.f32 %v2583, %v2608
    %v2625 = vadd.f32 %v2584, %v2609
    %v2626 = vadd.f32 %v2585, %v2610
    %v2627 = vadd.f32 %v2586, %v2611
    %v2628 = vadd.f32 %v2587, %v2612
    %v2629 = vadd.f32 %v2588, %v2613
    %v2630 = vadd.f32 %v2589, %v2614
    %v2631 = vadd.f32 %v2590, %v2615
    %v2632 = vadd.f32 %v2616, %v2530
    %v2633 = vadd.f32 %v2617, %v2531
    %v2634 = vadd.f32 %v2618, %v2532
    %v2635 = vadd.f32 %v2619, %v2533
    %v2636 = vadd.f32 %v2620, %v2534
    %v2637 = vadd.f32 %v2621, %v2535
    %v2638 = vadd.f32 %v2622, %v2536
    %v2639 = vadd.f32 %v2623, %v2537
    %v2640 = vadd.f32 %v2624, %v2538
    %v2641 = vadd.f32 %v2625, %v2539
    %v2642 = vadd.f32 %v2626, %v2540
    %v2643 = vadd.f32 %v2627, %v2541
    %v2644 = vadd.f32 %v2628, %v2542
    %v2645 = vadd.f32 %v2629, %v2543
    %v2646 = vadd.f32 %v2630, %v2544
    %v2647 = vadd.f32 %v2631, %v2545
    %v2648 = vtanh.pop %v2632
    %v2649 = vtanh.pop %v2633
    %v2650 = vtanh.pop %v2634
    %v2651 = vtanh.pop %v2635
    %v2652 = vtanh.pop %v2636
    %v2653 = vtanh.pop %v2637
    %v2654 = vtanh.pop %v2638
    %v2655 = vtanh.pop %v2639
    %v2656 = vtanh.pop %v2640
    %v2657 = vtanh.pop %v2641
    %v2658 = vtanh.pop %v2642
    %v2659 = vtanh.pop %v2643
    %v2660 = vtanh.pop %v2644
    %v2661 = vtanh.pop %v2645
    %v2662 = vtanh.pop %v2646
    %v2663 = vtanh.pop %v2647
    %v2664 = vmul.f32 %v2648, %v2546
    %v2665 = vmul.f32 %v2649, %v2547
    %v2666 = vmul.f32 %v2650, %v2548
    %v2667 = vmul.f32 %v2651, %v2549
    %v2668 = vmul.f32 %v2652, %v2550
    %v2669 = vmul.f32 %v2653, %v2551
    %v2670 = vmul.f32 %v2654, %v2552
    %v2671 = vmul.f32 %v2655, %v2553
    %v2672 = vmul.f32 %v2656, %v2554
    %v2673 = vmul.f32 %v2657, %v2555
    %v2674 = vmul.f32 %v2658, %v2556
    %v2675 = vmul.f32 %v2659, %v2557
    %v2676 = vmul.f32 %v2660, %v2558
    %v2677 = vmul.f32 %v2661, %v2559
    %v2678 = vmul.f32 %v2662, %v2560
    %v2679 = vmul.f32 %v2663, %v2561
    %v2680 = vadd.f32 %v2664, %v2668
    %v2681 = vadd.f32 %v2680, %v2672
    %v2682 = vadd.f32 %v2681, %v2676
    %v2683 = vrot.slane %v2682, 4
    %v2684 = vadd.f32 %v2682, %v2683
    %v2685 = vrot.slane %v2684, 2
    %v2686 = vadd.f32 %v2684, %v2685
    %v2687 = vrot.slane %v2686, 1
    %v2688 = vadd.f32 %v2686, %v2687
    %v2689 = vadd.f32 %v2665, %v2669
    %v2690 = vadd.f32 %v2689, %v2673
    %v2691 = vadd.f32 %v2690, %v2677
    %v2692 = vrot.slane %v2691, 4
    %v2693 = vadd.f32 %v2691, %v2692
    %v2694 = vrot.slane %v2693, 2
    %v2695 = vadd.f32 %v2693, %v2694
    %v2696 = vrot.slane %v2695, 1
    %v2697 = vadd.f32 %v2695, %v2696
    %v2698 = vadd.f32 %v2666, %v2670
    %v2699 = vadd.f32 %v2698, %v2674
    %v2700 = vadd.f32 %v2699, %v2678
    %v2701 = vrot.slane %v2700, 4
    %v2702 = vadd.f32 %v2700, %v2701
    %v2703 = vrot.slane %v2702, 2
    %v2704 = vadd.f32 %v2702, %v2703
    %v2705 = vrot.slane %v2704, 1
    %v2706 = vadd.f32 %v2704, %v2705
    %v2707 = vadd.f32 %v2667, %v2671
    %v2708 = vadd.f32 %v2707, %v2675
    %v2709 = vadd.f32 %v2708, %v2679
    %v2710 = vrot.slane %v2709, 4
    %v2711 = vadd.f32 %v2709, %v2710
    %v2712 = vrot.slane %v2711, 2
    %v2713 = vadd.f32 %v2711, %v2712
    %v2714 = vrot.slane %v2713, 1
    %v2715 = vadd.f32 %v2713, %v2714
    %v2716 = vld [vmem:[%s2] sm:$0xf]
    %v2718 = vperm.slane %v2716, 0
    %v2719 = vperm.slane %v2716, 1
    %v2720 = vperm.slane %v2716, 2
    %v2721 = vperm.slane %v2716, 3
    %v2726 = vadd.f32 %v2688, %v2718
    %v2727 = vadd.f32 %v2697, %v2719
    %v2728 = vadd.f32 %v2706, %v2720
    %v2729 = vadd.f32 %v2715, %v2721
    %v2734 = vrot.slane %v2727, 7
    %v2735 = vrot.slane %v2728, 6
    %v2736 = vrot.slane %v2729, 5
    %v2737 = vsel %vm271, %v2726, %v2734
    %v2738 = vsel %vm273, %v2735, %v2736
    %v2739 = vsel %vm275, %v2737, %v2738
    %s2741 = scalar_lea.vmem %s3, 34
    %2742 = vst.msk [vmem:[%s2741] ss:$8 sm:$0xf] %vm281, %v2739
    %2743 = vst.msk [vmem:[%s2741] ss:$8 sm:$0x0] %vm281, %v2739
    %v2744 = vld [vmem:[#allocation2] sm:$0xff]
    %v2745 = vld [vmem:[#allocation2 + $0x8] sm:$0xff]
    %v2746 = vld [vmem:[#allocation2 + $0x10] sm:$0xff]
    %v2747 = vld [vmem:[#allocation2 + $0x18] sm:$0xff]
    %v2748 = vld [vmem:[#allocation2 + $0x20] sm:$0xff]
    %v2749 = vld [vmem:[#allocation2 + $0x28] sm:$0xff]
    %v2750 = vld [vmem:[#allocation2 + $0x30] sm:$0xff]
    %v2751 = vld [vmem:[#allocation2 + $0x38] sm:$0xff]
    %v2752 = vld [vmem:[#allocation2 + $0x40] sm:$0xff]
    %v2753 = vld [vmem:[#allocation2 + $0x48] sm:$0xff]
    %v2754 = vld [vmem:[#allocation2 + $0x50] sm:$0xff]
    %v2755 = vld [vmem:[#allocation2 + $0x58] sm:$0xff]
    %v2756 = vld [vmem:[#allocation2 + $0x60] sm:$0xff]
    %v2757 = vld [vmem:[#allocation2 + $0x68] sm:$0xff]
    %v2758 = vld [vmem:[#allocation2 + $0x70] sm:$0xff]
    %v2759 = vld [vmem:[#allocation2 + $0x78] sm:$0xff]
    %v2760 = vld [vmem:[%s46] sm:$0xff]
    %v2761 = vld [vmem:[%s46 + $0x8] sm:$0xff]
    %v2762 = vld [vmem:[%s46 + $0x10] sm:$0xff]
    %v2763 = vld [vmem:[%s46 + $0x18] sm:$0xff]
    %v2764 = vld [vmem:[%s46 + $0x20] sm:$0xff]
    %v2765 = vld [vmem:[%s46 + $0x28] sm:$0xff]
    %v2766 = vld [vmem:[%s46 + $0x30] sm:$0xff]
    %v2767 = vld [vmem:[%s46 + $0x38] sm:$0xff]
    %v2768 = vld [vmem:[%s46 + $0x40] sm:$0xff]
    %v2769 = vld [vmem:[%s46 + $0x48] sm:$0xff]
    %v2770 = vld [vmem:[%s46 + $0x50] sm:$0xff]
    %v2771 = vld [vmem:[%s46 + $0x58] sm:$0xff]
    %v2772 = vld [vmem:[%s46 + $0x60] sm:$0xff]
    %v2773 = vld [vmem:[%s46 + $0x68] sm:$0xff]
    %v2774 = vld [vmem:[%s46 + $0x70] sm:$0xff]
    %v2775 = vld [vmem:[%s46 + $0x78] sm:$0xff]
    %v2776 = vld [vmem:[%s63] sm:$0xff]
    %v2777 = vld [vmem:[%s63 + $0x8] sm:$0xff]
    %v2778 = vld [vmem:[%s63 + $0x10] sm:$0xff]
    %v2779 = vld [vmem:[%s63 + $0x18] sm:$0xff]
    %v2780 = vld [vmem:[%s63 + $0x20] sm:$0xff]
    %v2781 = vld [vmem:[%s63 + $0x28] sm:$0xff]
    %v2782 = vld [vmem:[%s63 + $0x30] sm:$0xff]
    %v2783 = vld [vmem:[%s63 + $0x38] sm:$0xff]
    %v2784 = vld [vmem:[%s63 + $0x40] sm:$0xff]
    %v2785 = vld [vmem:[%s63 + $0x48] sm:$0xff]
    %v2786 = vld [vmem:[%s63 + $0x50] sm:$0xff]
    %v2787 = vld [vmem:[%s63 + $0x58] sm:$0xff]
    %v2788 = vld [vmem:[%s63 + $0x60] sm:$0xff]
    %v2789 = vld [vmem:[%s63 + $0x68] sm:$0xff]
    %v2790 = vld [vmem:[%s63 + $0x70] sm:$0xff]
    %v2791 = vld [vmem:[%s63 + $0x78] sm:$0xff]
    %v2792 = vld [vmem:[%s80] sm:$0xff]
    %v2793 = vld [vmem:[%s80 + $0x8] sm:$0xff]
    %v2794 = vld [vmem:[%s80 + $0x10] sm:$0xff]
    %v2795 = vld [vmem:[%s80 + $0x18] sm:$0xff]
    %v2796 = vld [vmem:[%s80 + $0x20] sm:$0xff]
    %v2797 = vld [vmem:[%s80 + $0x28] sm:$0xff]
    %v2798 = vld [vmem:[%s80 + $0x30] sm:$0xff]
    %v2799 = vld [vmem:[%s80 + $0x38] sm:$0xff]
    %v2800 = vld [vmem:[%s80 + $0x40] sm:$0xff]
    %v2801 = vld [vmem:[%s80 + $0x48] sm:$0xff]
    %v2802 = vld [vmem:[%s80 + $0x50] sm:$0xff]
    %v2803 = vld [vmem:[%s80 + $0x58] sm:$0xff]
    %v2804 = vld [vmem:[%s80 + $0x60] sm:$0xff]
    %v2805 = vld [vmem:[%s80 + $0x68] sm:$0xff]
    %v2806 = vld [vmem:[%s80 + $0x70] sm:$0xff]
    %v2807 = vld [vmem:[%s80 + $0x78] sm:$0xff]
    %s2808 = scalar_lea.vmem %s0, 35
    %v2809 = vld [vmem:[%s2808] ss:$8 sm:$0xf]
    %s2810 = scalar_lea.vmem %s98, 35
    %v2811 = vld [vmem:[%s2810] ss:$8 sm:$0xf]
    %v2813 = vperm.slane %v2809, 0
    %v2814 = vperm.slane %v2809, 1
    %v2815 = vperm.slane %v2809, 2
    %v2816 = vperm.slane %v2809, 3
    %v2821 = vmul.f32 %v2744, %v2813
    %v2822 = vmul.f32 %v2745, %v2814
    %v2823 = vmul.f32 %v2746, %v2815
    %v2824 = vmul.f32 %v2747, %v2816
    %v2825 = vmul.f32 %v2748, %v2813
    %v2826 = vmul.f32 %v2749, %v2814
    %v2827 = vmul.f32 %v2750, %v2815
    %v2828 = vmul.f32 %v2751, %v2816
    %v2829 = vmul.f32 %v2752, %v2813
    %v2830 = vmul.f32 %v2753, %v2814
    %v2831 = vmul.f32 %v2754, %v2815
    %v2832 = vmul.f32 %v2755, %v2816
    %v2833 = vmul.f32 %v2756, %v2813
    %v2834 = vmul.f32 %v2757, %v2814
    %v2835 = vmul.f32 %v2758, %v2815
    %v2836 = vmul.f32 %v2759, %v2816
    %v2838 = vperm.slane %v2811, 0
    %v2839 = vperm.slane %v2811, 1
    %v2840 = vperm.slane %v2811, 2
    %v2841 = vperm.slane %v2811, 3
    %v2846 = vmul.f32 %v2760, %v2838
    %v2847 = vmul.f32 %v2761, %v2839
    %v2848 = vmul.f32 %v2762, %v2840
    %v2849 = vmul.f32 %v2763, %v2841
    %v2850 = vmul.f32 %v2764, %v2838
    %v2851 = vmul.f32 %v2765, %v2839
    %v2852 = vmul.f32 %v2766, %v2840
    %v2853 = vmul.f32 %v2767, %v2841
    %v2854 = vmul.f32 %v2768, %v2838
    %v2855 = vmul.f32 %v2769, %v2839
    %v2856 = vmul.f32 %v2770, %v2840
    %v2857 = vmul.f32 %v2771, %v2841
    %v2858 = vmul.f32 %v2772, %v2838
    %v2859 = vmul.f32 %v2773, %v2839
    %v2860 = vmul.f32 %v2774, %v2840
    %v2861 = vmul.f32 %v2775, %v2841
    %v2862 = vadd.f32 %v2821, %v2846
    %v2863 = vadd.f32 %v2822, %v2847
    %v2864 = vadd.f32 %v2823, %v2848
    %v2865 = vadd.f32 %v2824, %v2849
    %v2866 = vadd.f32 %v2825, %v2850
    %v2867 = vadd.f32 %v2826, %v2851
    %v2868 = vadd.f32 %v2827, %v2852
    %v2869 = vadd.f32 %v2828, %v2853
    %v2870 = vadd.f32 %v2829, %v2854
    %v2871 = vadd.f32 %v2830, %v2855
    %v2872 = vadd.f32 %v2831, %v2856
    %v2873 = vadd.f32 %v2832, %v2857
    %v2874 = vadd.f32 %v2833, %v2858
    %v2875 = vadd.f32 %v2834, %v2859
    %v2876 = vadd.f32 %v2835, %v2860
    %v2877 = vadd.f32 %v2836, %v2861
    %v2878 = vadd.f32 %v2862, %v2776
    %v2879 = vadd.f32 %v2863, %v2777
    %v2880 = vadd.f32 %v2864, %v2778
    %v2881 = vadd.f32 %v2865, %v2779
    %v2882 = vadd.f32 %v2866, %v2780
    %v2883 = vadd.f32 %v2867, %v2781
    %v2884 = vadd.f32 %v2868, %v2782
    %v2885 = vadd.f32 %v2869, %v2783
    %v2886 = vadd.f32 %v2870, %v2784
    %v2887 = vadd.f32 %v2871, %v2785
    %v2888 = vadd.f32 %v2872, %v2786
    %v2889 = vadd.f32 %v2873, %v2787
    %v2890 = vadd.f32 %v2874, %v2788
    %v2891 = vadd.f32 %v2875, %v2789
    %v2892 = vadd.f32 %v2876, %v2790
    %v2893 = vadd.f32 %v2877, %v2791
    %v2894 = vtanh.pop %v2878
    %v2895 = vtanh.pop %v2879
    %v2896 = vtanh.pop %v2880
    %v2897 = vtanh.pop %v2881
    %v2898 = vtanh.pop %v2882
    %v2899 = vtanh.pop %v2883
    %v2900 = vtanh.pop %v2884
    %v2901 = vtanh.pop %v2885
    %v2902 = vtanh.pop %v2886
    %v2903 = vtanh.pop %v2887
    %v2904 = vtanh.pop %v2888
    %v2905 = vtanh.pop %v2889
    %v2906 = vtanh.pop %v2890
    %v2907 = vtanh.pop %v2891
    %v2908 = vtanh.pop %v2892
    %v2909 = vtanh.pop %v2893
    %v2910 = vmul.f32 %v2894, %v2792
    %v2911 = vmul.f32 %v2895, %v2793
    %v2912 = vmul.f32 %v2896, %v2794
    %v2913 = vmul.f32 %v2897, %v2795
    %v2914 = vmul.f32 %v2898, %v2796
    %v2915 = vmul.f32 %v2899, %v2797
    %v2916 = vmul.f32 %v2900, %v2798
    %v2917 = vmul.f32 %v2901, %v2799
    %v2918 = vmul.f32 %v2902, %v2800
    %v2919 = vmul.f32 %v2903, %v2801
    %v2920 = vmul.f32 %v2904, %v2802
    %v2921 = vmul.f32 %v2905, %v2803
    %v2922 = vmul.f32 %v2906, %v2804
    %v2923 = vmul.f32 %v2907, %v2805
    %v2924 = vmul.f32 %v2908, %v2806
    %v2925 = vmul.f32 %v2909, %v2807
    %v2926 = vadd.f32 %v2910, %v2914
    %v2927 = vadd.f32 %v2926, %v2918
    %v2928 = vadd.f32 %v2927, %v2922
    %v2929 = vrot.slane %v2928, 4
    %v2930 = vadd.f32 %v2928, %v2929
    %v2931 = vrot.slane %v2930, 2
    %v2932 = vadd.f32 %v2930, %v2931
    %v2933 = vrot.slane %v2932, 1
    %v2934 = vadd.f32 %v2932, %v2933
    %v2935 = vadd.f32 %v2911, %v2915
    %v2936 = vadd.f32 %v2935, %v2919
    %v2937 = vadd.f32 %v2936, %v2923
    %v2938 = vrot.slane %v2937, 4
    %v2939 = vadd.f32 %v2937, %v2938
    %v2940 = vrot.slane %v2939, 2
    %v2941 = vadd.f32 %v2939, %v2940
    %v2942 = vrot.slane %v2941, 1
    %v2943 = vadd.f32 %v2941, %v2942
    %v2944 = vadd.f32 %v2912, %v2916
    %v2945 = vadd.f32 %v2944, %v2920
    %v2946 = vadd.f32 %v2945, %v2924
    %v2947 = vrot.slane %v2946, 4
    %v2948 = vadd.f32 %v2946, %v2947
    %v2949 = vrot.slane %v2948, 2
    %v2950 = vadd.f32 %v2948, %v2949
    %v2951 = vrot.slane %v2950, 1
    %v2952 = vadd.f32 %v2950, %v2951
    %v2953 = vadd.f32 %v2913, %v2917
    %v2954 = vadd.f32 %v2953, %v2921
    %v2955 = vadd.f32 %v2954, %v2925
    %v2956 = vrot.slane %v2955, 4
    %v2957 = vadd.f32 %v2955, %v2956
    %v2958 = vrot.slane %v2957, 2
    %v2959 = vadd.f32 %v2957, %v2958
    %v2960 = vrot.slane %v2959, 1
    %v2961 = vadd.f32 %v2959, %v2960
    %v2962 = vld [vmem:[%s2] sm:$0xf]
    %v2964 = vperm.slane %v2962, 0
    %v2965 = vperm.slane %v2962, 1
    %v2966 = vperm.slane %v2962, 2
    %v2967 = vperm.slane %v2962, 3
    %v2972 = vadd.f32 %v2934, %v2964
    %v2973 = vadd.f32 %v2943, %v2965
    %v2974 = vadd.f32 %v2952, %v2966
    %v2975 = vadd.f32 %v2961, %v2967
    %v2980 = vrot.slane %v2973, 7
    %v2981 = vrot.slane %v2974, 6
    %v2982 = vrot.slane %v2975, 5
    %v2983 = vsel %vm271, %v2972, %v2980
    %v2984 = vsel %vm273, %v2981, %v2982
    %v2985 = vsel %vm275, %v2983, %v2984
    %s2987 = scalar_lea.vmem %s3, 35
    %2988 = vst.msk [vmem:[%s2987] ss:$8 sm:$0xf] %vm281, %v2985
    %2989 = vst.msk [vmem:[%s2987] ss:$8 sm:$0x0] %vm281, %v2985
    %v2990 = vld [vmem:[#allocation2] sm:$0xff]
    %v2991 = vld [vmem:[#allocation2 + $0x8] sm:$0xff]
    %v2992 = vld [vmem:[#allocation2 + $0x10] sm:$0xff]
    %v2993 = vld [vmem:[#allocation2 + $0x18] sm:$0xff]
    %v2994 = vld [vmem:[#allocation2 + $0x20] sm:$0xff]
    %v2995 = vld [vmem:[#allocation2 + $0x28] sm:$0xff]
    %v2996 = vld [vmem:[#allocation2 + $0x30] sm:$0xff]
    %v2997 = vld [vmem:[#allocation2 + $0x38] sm:$0xff]
    %v2998 = vld [vmem:[#allocation2 + $0x40] sm:$0xff]
    %v2999 = vld [vmem:[#allocation2 + $0x48] sm:$0xff]
    %v3000 = vld [vmem:[#allocation2 + $0x50] sm:$0xff]
    %v3001 = vld [vmem:[#allocation2 + $0x58] sm:$0xff]
    %v3002 = vld [vmem:[#allocation2 + $0x60] sm:$0xff]
    %v3003 = vld [vmem:[#allocation2 + $0x68] sm:$0xff]
    %v3004 = vld [vmem:[#allocation2 + $0x70] sm:$0xff]
    %v3005 = vld [vmem:[#allocation2 + $0x78] sm:$0xff]
    %v3006 = vld [vmem:[%s46] sm:$0xff]
    %v3007 = vld [vmem:[%s46 + $0x8] sm:$0xff]
    %v3008 = vld [vmem:[%s46 + $0x10] sm:$0xff]
    %v3009 = vld [vmem:[%s46 + $0x18] sm:$0xff]
    %v3010 = vld [vmem:[%s46 + $0x20] sm:$0xff]
    %v3011 = vld [vmem:[%s46 + $0x28] sm:$0xff]
    %v3012 = vld [vmem:[%s46 + $0x30] sm:$0xff]
    %v3013 = vld [vmem:[%s46 + $0x38] sm:$0xff]
    %v3014 = vld [vmem:[%s46 + $0x40] sm:$0xff]
    %v3015 = vld [vmem:[%s46 + $0x48] sm:$0xff]
    %v3016 = vld [vmem:[%s46 + $0x50] sm:$0xff]
    %v3017 = vld [vmem:[%s46 + $0x58] sm:$0xff]
    %v3018 = vld [vmem:[%s46 + $0x60] sm:$0xff]
    %v3019 = vld [vmem:[%s46 + $0x68] sm:$0xff]
    %v3020 = vld [vmem:[%s46 + $0x70] sm:$0xff]
    %v3021 = vld [vmem:[%s46 + $0x78] sm:$0xff]
    %v3022 = vld [vmem:[%s63] sm:$0xff]
    %v3023 = vld [vmem:[%s63 + $0x8] sm:$0xff]
    %v3024 = vld [vmem:[%s63 + $0x10] sm:$0xff]
    %v3025 = vld [vmem:[%s63 + $0x18] sm:$0xff]
    %v3026 = vld [vmem:[%s63 + $0x20] sm:$0xff]
    %v3027 = vld [vmem:[%s63 + $0x28] sm:$0xff]
    %v3028 = vld [vmem:[%s63 + $0x30] sm:$0xff]
    %v3029 = vld [vmem:[%s63 + $0x38] sm:$0xff]
    %v3030 = vld [vmem:[%s63 + $0x40] sm:$0xff]
    %v3031 = vld [vmem:[%s63 + $0x48] sm:$0xff]
    %v3032 = vld [vmem:[%s63 + $0x50] sm:$0xff]
    %v3033 = vld [vmem:[%s63 + $0x58] sm:$0xff]
    %v3034 = vld [vmem:[%s63 + $0x60] sm:$0xff]
    %v3035 = vld [vmem:[%s63 + $0x68] sm:$0xff]
    %v3036 = vld [vmem:[%s63 + $0x70] sm:$0xff]
    %v3037 = vld [vmem:[%s63 + $0x78] sm:$0xff]
    %v3038 = vld [vmem:[%s80] sm:$0xff]
    %v3039 = vld [vmem:[%s80 + $0x8] sm:$0xff]
    %v3040 = vld [vmem:[%s80 + $0x10] sm:$0xff]
    %v3041 = vld [vmem:[%s80 + $0x18] sm:$0xff]
    %v3042 = vld [vmem:[%s80 + $0x20] sm:$0xff]
    %v3043 = vld [vmem:[%s80 + $0x28] sm:$0xff]
    %v3044 = vld [vmem:[%s80 + $0x30] sm:$0xff]
    %v3045 = vld [vmem:[%s80 + $0x38] sm:$0xff]
    %v3046 = vld [vmem:[%s80 + $0x40] sm:$0xff]
    %v3047 = vld [vmem:[%s80 + $0x48] sm:$0xff]
    %v3048 = vld [vmem:[%s80 + $0x50] sm:$0xff]
    %v3049 = vld [vmem:[%s80 + $0x58] sm:$0xff]
    %v3050 = vld [vmem:[%s80 + $0x60] sm:$0xff]
    %v3051 = vld [vmem:[%s80 + $0x68] sm:$0xff]
    %v3052 = vld [vmem:[%s80 + $0x70] sm:$0xff]
    %v3053 = vld [vmem:[%s80 + $0x78] sm:$0xff]
    %s3054 = scalar_lea.vmem %s0, 36
    %v3055 = vld [vmem:[%s3054] ss:$8 sm:$0xf]
    %s3056 = scalar_lea.vmem %s98, 36
    %v3057 = vld [vmem:[%s3056] ss:$8 sm:$0xf]
    %v3059 = vperm.slane %v3055, 0
    %v3060 = vperm.slane %v3055, 1
    %v3061 = vperm.slane %v3055, 2
    %v3062 = vperm.slane %v3055, 3
    %v3067 = vmul.f32 %v2990, %v3059
    %v3068 = vmul.f32 %v2991, %v3060
    %v3069 = vmul.f32 %v2992, %v3061
    %v3070 = vmul.f32 %v2993, %v3062
    %v3071 = vmul.f32 %v2994, %v3059
    %v3072 = vmul.f32 %v2995, %v3060
    %v3073 = vmul.f32 %v2996, %v3061
    %v3074 = vmul.f32 %v2997, %v3062
    %v3075 = vmul.f32 %v2998, %v3059
    %v3076 = vmul.f32 %v2999, %v3060
    %v3077 = vmul.f32 %v3000, %v3061
    %v3078 = vmul.f32 %v3001, %v3062
    %v3079 = vmul.f32 %v3002, %v3059
    %v3080 = vmul.f32 %v3003, %v3060
    %v3081 = vmul.f32 %v3004, %v3061
    %v3082 = vmul.f32 %v3005, %v3062
    %v3084 = vperm.slane %v3057, 0
    %v3085 = vperm.slane %v3057, 1
    %v3086 = vperm.slane %v3057, 2
    %v3087 = vperm.slane %v3057, 3
    %v3092 = vmul.f32 %v3006, %v3084
    %v3093 = vmul.f32 %v3007, %v3085
    %v3094 = vmul.f32 %v3008, %v3086
    %v3095 = vmul.f32 %v3009, %v3087
    %v3096 = vmul.f32 %v3010, %v3084
    %v3097 = vmul.f32 %v3011, %v3085
    %v3098 = vmul.f32 %v3012, %v3086
    %v3099 = vmul.f32 %v3013, %v3087
    %v3100 = vmul.f32 %v3014, %v3084
    %v3101 = vmul.f32 %v3015, %v3085
    %v3102 = vmul.f32 %v3016, %v3086
    %v3103 = vmul.f32 %v3017, %v3087
    %v3104 = vmul.f32 %v3018, %v3084
    %v3105 = vmul.f32 %v3019, %v3085
    %v3106 = vmul.f32 %v3020, %v3086
    %v3107 = vmul.f32 %v3021, %v3087
    %v3108 = vadd.f32 %v3067, %v3092
    %v3109 = vadd.f32 %v3068, %v3093
    %v3110 = vadd.f32 %v3069, %v3094
    %v3111 = vadd.f32 %v3070, %v3095
    %v3112 = vadd.f32 %v3071, %v3096
    %v3113 = vadd.f32 %v3072, %v3097
    %v3114 = vadd.f32 %v3073, %v3098
    %v3115 = vadd.f32 %v3074, %v3099
    %v3116 = vadd.f32 %v3075, %v3100
    %v3117 = vadd.f32 %v3076, %v3101
    %v3118 = vadd.f32 %v3077, %v3102
    %v3119 = vadd.f32 %v3078, %v3103
    %v3120 = vadd.f32 %v3079, %v3104
    %v3121 = vadd.f32 %v3080, %v3105
    %v3122 = vadd.f32 %v3081, %v3106
    %v3123 = vadd.f32 %v3082, %v3107
    %v3124 = vadd.f32 %v3108, %v3022
    %v3125 = vadd.f32 %v3109, %v3023
    %v3126 = vadd.f32 %v3110, %v3024
    %v3127 = vadd.f32 %v3111, %v3025
    %v3128 = vadd.f32 %v3112, %v3026
    %v3129 = vadd.f32 %v3113, %v3027
    %v3130 = vadd.f32 %v3114, %v3028
    %v3131 = vadd.f32 %v3115, %v3029
    %v3132 = vadd.f32 %v3116, %v3030
    %v3133 = vadd.f32 %v3117, %v3031
    %v3134 = vadd.f32 %v3118, %v3032
    %v3135 = vadd.f32 %v3119, %v3033
    %v3136 = vadd.f32 %v3120, %v3034
    %v3137 = vadd.f32 %v3121, %v3035
    %v3138 = vadd.f32 %v3122, %v3036
    %v3139 = vadd.f32 %v3123, %v3037
    %v3140 = vtanh.pop %v3124
    %v3141 = vtanh.pop %v3125
    %v3142 = vtanh.pop %v3126
    %v3143 = vtanh.pop %v3127
    %v3144 = vtanh.pop %v3128
    %v3145 = vtanh.pop %v3129
    %v3146 = vtanh.pop %v3130
    %v3147 = vtanh.pop %v3131
    %v3148 = vtanh.pop %v3132
    %v3149 = vtanh.pop %v3133
    %v3150 = vtanh.pop %v3134
    %v3151 = vtanh.pop %v3135
    %v3152 = vtanh.pop %v3136
    %v3153 = vtanh.pop %v3137
    %v3154 = vtanh.pop %v3138
    %v3155 = vtanh.pop %v3139
    %v3156 = vmul.f32 %v3140, %v3038
    %v3157 = vmul.f32 %v3141, %v3039
    %v3158 = vmul.f32 %v3142, %v3040
    %v3159 = vmul.f32 %v3143, %v3041
    %v3160 = vmul.f32 %v3144, %v3042
    %v3161 = vmul.f32 %v3145, %v3043
    %v3162 = vmul.f32 %v3146, %v3044
    %v3163 = vmul.f32 %v3147, %v3045
    %v3164 = vmul.f32 %v3148, %v3046
    %v3165 = vmul.f32 %v3149, %v3047
    %v3166 = vmul.f32 %v3150, %v3048
    %v3167 = vmul.f32 %v3151, %v3049
    %v3168 = vmul.f32 %v3152, %v3050
    %v3169 = vmul.f32 %v3153, %v3051
    %v3170 = vmul.f32 %v3154, %v3052
    %v3171 = vmul.f32 %v3155, %v3053
    %v3172 = vadd.f32 %v3156, %v3160
    %v3173 = vadd.f32 %v3172, %v3164
    %v3174 = vadd.f32 %v3173, %v3168
    %v3175 = vrot.slane %v3174, 4
    %v3176 = vadd.f32 %v3174, %v3175
    %v3177 = vrot.slane %v3176, 2
    %v3178 = vadd.f32 %v3176, %v3177
    %v3179 = vrot.slane %v3178, 1
    %v3180 = vadd.f32 %v3178, %v3179
    %v3181 = vadd.f32 %v3157, %v3161
    %v3182 = vadd.f32 %v3181, %v3165
    %v3183 = vadd.f32 %v3182, %v3169
    %v3184 = vrot.slane %v3183, 4
    %v3185 = vadd.f32 %v3183, %v3184
    %v3186 = vrot.slane %v3185, 2
    %v3187 = vadd.f32 %v3185, %v3186
    %v3188 = vrot.slane %v3187, 1
    %v3189 = vadd.f32 %v3187, %v3188
    %v3190 = vadd.f32 %v3158, %v3162
    %v3191 = vadd.f32 %v3190, %v3166
    %v3192 = vadd.f32 %v3191, %v3170
    %v3193 = vrot.slane %v3192, 4
    %v3194 = vadd.f32 %v3192, %v3193
    %v3195 = vrot.slane %v3194, 2
    %v3196 = vadd.f32 %v3194, %v3195
    %v3197 = vrot.slane %v3196, 1
    %v3198 = vadd.f32 %v3196, %v3197
    %v3199 = vadd.f32 %v3159, %v3163
    %v3200 = vadd.f32 %v3199, %v3167
    %v3201 = vadd.f32 %v3200, %v3171
    %v3202 = vrot.slane %v3201, 4
    %v3203 = vadd.f32 %v3201, %v3202
    %v3204 = vrot.slane %v3203, 2
    %v3205 = vadd.f32 %v3203, %v3204
    %v3206 = vrot.slane %v3205, 1
    %v3207 = vadd.f32 %v3205, %v3206
    %v3208 = vld [vmem:[%s2] sm:$0xf]
    %v3210 = vperm.slane %v3208, 0
    %v3211 = vperm.slane %v3208, 1
    %v3212 = vperm.slane %v3208, 2
    %v3213 = vperm.slane %v3208, 3
    %v3218 = vadd.f32 %v3180, %v3210
    %v3219 = vadd.f32 %v3189, %v3211
    %v3220 = vadd.f32 %v3198, %v3212
    %v3221 = vadd.f32 %v3207, %v3213
    %v3226 = vrot.slane %v3219, 7
    %v3227 = vrot.slane %v3220, 6
    %v3228 = vrot.slane %v3221, 5
    %v3229 = vsel %vm271, %v3218, %v3226
    %v3230 = vsel %vm273, %v3227, %v3228
    %v3231 = vsel %vm275, %v3229, %v3230
    %s3233 = scalar_lea.vmem %s3, 36
    %3234 = vst.msk [vmem:[%s3233] ss:$8 sm:$0xf] %vm281, %v3231
    %3235 = vst.msk [vmem:[%s3233] ss:$8 sm:$0x0] %vm281, %v3231
    %v3236 = vld [vmem:[#allocation2] sm:$0xff]
    %v3237 = vld [vmem:[#allocation2 + $0x8] sm:$0xff]
    %v3238 = vld [vmem:[#allocation2 + $0x10] sm:$0xff]
    %v3239 = vld [vmem:[#allocation2 + $0x18] sm:$0xff]
    %v3240 = vld [vmem:[#allocation2 + $0x20] sm:$0xff]
    %v3241 = vld [vmem:[#allocation2 + $0x28] sm:$0xff]
    %v3242 = vld [vmem:[#allocation2 + $0x30] sm:$0xff]
    %v3243 = vld [vmem:[#allocation2 + $0x38] sm:$0xff]
    %v3244 = vld [vmem:[#allocation2 + $0x40] sm:$0xff]
    %v3245 = vld [vmem:[#allocation2 + $0x48] sm:$0xff]
    %v3246 = vld [vmem:[#allocation2 + $0x50] sm:$0xff]
    %v3247 = vld [vmem:[#allocation2 + $0x58] sm:$0xff]
    %v3248 = vld [vmem:[#allocation2 + $0x60] sm:$0xff]
    %v3249 = vld [vmem:[#allocation2 + $0x68] sm:$0xff]
    %v3250 = vld [vmem:[#allocation2 + $0x70] sm:$0xff]
    %v3251 = vld [vmem:[#allocation2 + $0x78] sm:$0xff]
    %v3252 = vld [vmem:[%s46] sm:$0xff]
    %v3253 = vld [vmem:[%s46 + $0x8] sm:$0xff]
    %v3254 = vld [vmem:[%s46 + $0x10] sm:$0xff]
    %v3255 = vld [vmem:[%s46 + $0x18] sm:$0xff]
    %v3256 = vld [vmem:[%s46 + $0x20] sm:$0xff]
    %v3257 = vld [vmem:[%s46 + $0x28] sm:$0xff]
    %v3258 = vld [vmem:[%s46 + $0x30] sm:$0xff]
    %v3259 = vld [vmem:[%s46 + $0x38] sm:$0xff]
    %v3260 = vld [vmem:[%s46 + $0x40] sm:$0xff]
    %v3261 = vld [vmem:[%s46 + $0x48] sm:$0xff]
    %v3262 = vld [vmem:[%s46 + $0x50] sm:$0xff]
    %v3263 = vld [vmem:[%s46 + $0x58] sm:$0xff]
    %v3264 = vld [vmem:[%s46 + $0x60] sm:$0xff]
    %v3265 = vld [vmem:[%s46 + $0x68] sm:$0xff]
    %v3266 = vld [vmem:[%s46 + $0x70] sm:$0xff]
    %v3267 = vld [vmem:[%s46 + $0x78] sm:$0xff]
    %v3268 = vld [vmem:[%s63] sm:$0xff]
    %v3269 = vld [vmem:[%s63 + $0x8] sm:$0xff]
    %v3270 = vld [vmem:[%s63 + $0x10] sm:$0xff]
    %v3271 = vld [vmem:[%s63 + $0x18] sm:$0xff]
    %v3272 = vld [vmem:[%s63 + $0x20] sm:$0xff]
    %v3273 = vld [vmem:[%s63 + $0x28] sm:$0xff]
    %v3274 = vld [vmem:[%s63 + $0x30] sm:$0xff]
    %v3275 = vld [vmem:[%s63 + $0x38] sm:$0xff]
    %v3276 = vld [vmem:[%s63 + $0x40] sm:$0xff]
    %v3277 = vld [vmem:[%s63 + $0x48] sm:$0xff]
    %v3278 = vld [vmem:[%s63 + $0x50] sm:$0xff]
    %v3279 = vld [vmem:[%s63 + $0x58] sm:$0xff]
    %v3280 = vld [vmem:[%s63 + $0x60] sm:$0xff]
    %v3281 = vld [vmem:[%s63 + $0x68] sm:$0xff]
    %v3282 = vld [vmem:[%s63 + $0x70] sm:$0xff]
    %v3283 = vld [vmem:[%s63 + $0x78] sm:$0xff]
    %v3284 = vld [vmem:[%s80] sm:$0xff]
    %v3285 = vld [vmem:[%s80 + $0x8] sm:$0xff]
    %v3286 = vld [vmem:[%s80 + $0x10] sm:$0xff]
    %v3287 = vld [vmem:[%s80 + $0x18] sm:$0xff]
    %v3288 = vld [vmem:[%s80 + $0x20] sm:$0xff]
    %v3289 = vld [vmem:[%s80 + $0x28] sm:$0xff]
    %v3290 = vld [vmem:[%s80 + $0x30] sm:$0xff]
    %v3291 = vld [vmem:[%s80 + $0x38] sm:$0xff]
    %v3292 = vld [vmem:[%s80 + $0x40] sm:$0xff]
    %v3293 = vld [vmem:[%s80 + $0x48] sm:$0xff]
    %v3294 = vld [vmem:[%s80 + $0x50] sm:$0xff]
    %v3295 = vld [vmem:[%s80 + $0x58] sm:$0xff]
    %v3296 = vld [vmem:[%s80 + $0x60] sm:$0xff]
    %v3297 = vld [vmem:[%s80 + $0x68] sm:$0xff]
    %v3298 = vld [vmem:[%s80 + $0x70] sm:$0xff]
    %v3299 = vld [vmem:[%s80 + $0x78] sm:$0xff]
    %s3300 = scalar_lea.vmem %s0, 37
    %v3301 = vld [vmem:[%s3300] ss:$8 sm:$0xf]
    %s3302 = scalar_lea.vmem %s98, 37
    %v3303 = vld [vmem:[%s3302] ss:$8 sm:$0xf]
    %v3305 = vperm.slane %v3301, 0
    %v3306 = vperm.slane %v3301, 1
    %v3307 = vperm.slane %v3301, 2
    %v3308 = vperm.slane %v3301, 3
    %v3313 = vmul.f32 %v3236, %v3305
    %v3314 = vmul.f32 %v3237, %v3306
    %v3315 = vmul.f32 %v3238, %v3307
    %v3316 = vmul.f32 %v3239, %v3308
    %v3317 = vmul.f32 %v3240, %v3305
    %v3318 = vmul.f32 %v3241, %v3306
    %v3319 = vmul.f32 %v3242, %v3307
    %v3320 = vmul.f32 %v3243, %v3308
    %v3321 = vmul.f32 %v3244, %v3305
    %v3322 = vmul.f32 %v3245, %v3306
    %v3323 = vmul.f32 %v3246, %v3307
    %v3324 = vmul.f32 %v3247, %v3308
    %v3325 = vmul.f32 %v3248, %v3305
    %v3326 = vmul.f32 %v3249, %v3306
    %v3327 = vmul.f32 %v3250, %v3307
    %v3328 = vmul.f32 %v3251, %v3308
    %v3330 = vperm.slane %v3303, 0
    %v3331 = vperm.slane %v3303, 1
    %v3332 = vperm.slane %v3303, 2
    %v3333 = vperm.slane %v3303, 3
    %v3338 = vmul.f32 %v3252, %v3330
    %v3339 = vmul.f32 %v3253, %v3331
    %v3340 = vmul.f32 %v3254, %v3332
    %v3341 = vmul.f32 %v3255, %v3333
    %v3342 = vmul.f32 %v3256, %v3330
    %v3343 = vmul.f32 %v3257, %v3331
    %v3344 = vmul.f32 %v3258, %v3332
    %v3345 = vmul.f32 %v3259, %v3333
    %v3346 = vmul.f32 %v3260, %v3330
    %v3347 = vmul.f32 %v3261, %v3331
    %v3348 = vmul.f32 %v3262, %v3332
    %v3349 = vmul.f32 %v3263, %v3333
    %v3350 = vmul.f32 %v3264, %v3330
    %v3351 = vmul.f32 %v3265, %v3331
    %v3352 = vmul.f32 %v3266, %v3332
    %v3353 = vmul.f32 %v3267, %v3333
    %v3354 = vadd.f32 %v3313, %v3338
    %v3355 = vadd.f32 %v3314, %v3339
    %v3356 = vadd.f32 %v3315, %v3340
    %v3357 = vadd.f32 %v3316, %v3341
    %v3358 = vadd.f32 %v3317, %v3342
    %v3359 = vadd.f32 %v3318, %v3343
    %v3360 = vadd.f32 %v3319, %v3344
    %v3361 = vadd.f32 %v3320, %v3345
    %v3362 = vadd.f32 %v3321, %v3346
    %v3363 = vadd.f32 %v3322, %v3347
    %v3364 = vadd.f32 %v3323, %v3348
    %v3365 = vadd.f32 %v3324, %v3349
    %v3366 = vadd.f32 %v3325, %v3350
    %v3367 = vadd.f32 %v3326, %v3351
    %v3368 = vadd.f32 %v3327, %v3352
    %v3369 = vadd.f32 %v3328, %v3353
    %v3370 = vadd.f32 %v3354, %v3268
    %v3371 = vadd.f32 %v3355, %v3269
    %v3372 = vadd.f32 %v3356, %v3270
    %v3373 = vadd.f32 %v3357, %v3271
    %v3374 = vadd.f32 %v3358, %v3272
    %v3375 = vadd.f32 %v3359, %v3273
    %v3376 = vadd.f32 %v3360, %v3274
    %v3377 = vadd.f32 %v3361, %v3275
    %v3378 = vadd.f32 %v3362, %v3276
    %v3379 = vadd.f32 %v3363, %v3277
    %v3380 = vadd.f32 %v3364, %v3278
    %v3381 = vadd.f32 %v3365, %v3279
    %v3382 = vadd.f32 %v3366, %v3280
    %v3383 = vadd.f32 %v3367, %v3281
    %v3384 = vadd.f32 %v3368, %v3282
    %v3385 = vadd.f32 %v3369, %v3283
    %v3386 = vtanh.pop %v3370
    %v3387 = vtanh.pop %v3371
    %v3388 = vtanh.pop %v3372
    %v3389 = vtanh.pop %v3373
    %v3390 = vtanh.pop %v3374
    %v3391 = vtanh.pop %v3375
    %v3392 = vtanh.pop %v3376
    %v3393 = vtanh.pop %v3377
    %v3394 = vtanh.pop %v3378
    %v3395 = vtanh.pop %v3379
    %v3396 = vtanh.pop %v3380
    %v3397 = vtanh.pop %v3381
    %v3398 = vtanh.pop %v3382
    %v3399 = vtanh.pop %v3383
    %v3400 = vtanh.pop %v3384
    %v3401 = vtanh.pop %v3385
    %v3402 = vmul.f32 %v3386, %v3284
    %v3403 = vmul.f32 %v3387, %v3285
    %v3404 = vmul.f32 %v3388, %v3286
    %v3405 = vmul.f32 %v3389, %v3287
    %v3406 = vmul.f32 %v3390, %v3288
    %v3407 = vmul.f32 %v3391, %v3289
    %v3408 = vmul.f32 %v3392, %v3290
    %v3409 = vmul.f32 %v3393, %v3291
    %v3410 = vmul.f32 %v3394, %v3292
    %v3411 = vmul.f32 %v3395, %v3293
    %v3412 = vmul.f32 %v3396, %v3294
    %v3413 = vmul.f32 %v3397, %v3295
    %v3414 = vmul.f32 %v3398, %v3296
    %v3415 = vmul.f32 %v3399, %v3297
    %v3416 = vmul.f32 %v3400, %v3298
    %v3417 = vmul.f32 %v3401, %v3299
    %v3418 = vadd.f32 %v3402, %v3406
    %v3419 = vadd.f32 %v3418, %v3410
    %v3420 = vadd.f32 %v3419, %v3414
    %v3421 = vrot.slane %v3420, 4
    %v3422 = vadd.f32 %v3420, %v3421
    %v3423 = vrot.slane %v3422, 2
    %v3424 = vadd.f32 %v3422, %v3423
    %v3425 = vrot.slane %v3424, 1
    %v3426 = vadd.f32 %v3424, %v3425
    %v3427 = vadd.f32 %v3403, %v3407
    %v3428 = vadd.f32 %v3427, %v3411
    %v3429 = vadd.f32 %v3428, %v3415
    %v3430 = vrot.slane %v3429, 4
    %v3431 = vadd.f32 %v3429, %v3430
    %v3432 = vrot.slane %v3431, 2
    %v3433 = vadd.f32 %v3431, %v3432
    %v3434 = vrot.slane %v3433, 1
    %v3435 = vadd.f32 %v3433, %v3434
    %v3436 = vadd.f32 %v3404, %v3408
    %v3437 = vadd.f32 %v3436, %v3412
    %v3438 = vadd.f32 %v3437, %v3416
    %v3439 = vrot.slane %v3438, 4
    %v3440 = vadd.f32 %v3438, %v3439
    %v3441 = vrot.slane %v3440, 2
    %v3442 = vadd.f32 %v3440, %v3441
    %v3443 = vrot.slane %v3442, 1
    %v3444 = vadd.f32 %v3442, %v3443
    %v3445 = vadd.f32 %v3405, %v3409
    %v3446 = vadd.f32 %v3445, %v3413
    %v3447 = vadd.f32 %v3446, %v3417
    %v3448 = vrot.slane %v3447, 4
    %v3449 = vadd.f32 %v3447, %v3448
    %v3450 = vrot.slane %v3449, 2
    %v3451 = vadd.f32 %v3449, %v3450
    %v3452 = vrot.slane %v3451, 1
    %v3453 = vadd.f32 %v3451, %v3452
    %v3454 = vld [vmem:[%s2] sm:$0xf]
    %v3456 = vperm.slane %v3454, 0
    %v3457 = vperm.slane %v3454, 1
    %v3458 = vperm.slane %v3454, 2
    %v3459 = vperm.slane %v3454, 3
    %v3464 = vadd.f32 %v3426, %v3456
    %v3465 = vadd.f32 %v3435, %v3457
    %v3466 = vadd.f32 %v3444, %v3458
    %v3467 = vadd.f32 %v3453, %v3459
    %v3472 = vrot.slane %v3465, 7
    %v3473 = vrot.slane %v3466, 6
    %v3474 = vrot.slane %v3467, 5
    %v3475 = vsel %vm271, %v3464, %v3472
    %v3476 = vsel %vm273, %v3473, %v3474
    %v3477 = vsel %vm275, %v3475, %v3476
    %s3479 = scalar_lea.vmem %s3, 37
    %3480 = vst.msk [vmem:[%s3479] ss:$8 sm:$0xf] %vm281, %v3477
    %3481 = vst.msk [vmem:[%s3479] ss:$8 sm:$0x0] %vm281, %v3477
    %v3482 = vld [vmem:[#allocation2] sm:$0xff]
    %v3483 = vld [vmem:[#allocation2 + $0x8] sm:$0xff]
    %v3484 = vld [vmem:[#allocation2 + $0x10] sm:$0xff]
    %v3485 = vld [vmem:[#allocation2 + $0x18] sm:$0xff]
    %v3486 = vld [vmem:[#allocation2 + $0x20] sm:$0xff]
    %v3487 = vld [vmem:[#allocation2 + $0x28] sm:$0xff]
    %v3488 = vld [vmem:[#allocation2 + $0x30] sm:$0xff]
    %v3489 = vld [vmem:[#allocation2 + $0x38] sm:$0xff]
    %v3490 = vld [vmem:[#allocation2 + $0x40] sm:$0xff]
    %v3491 = vld [vmem:[#allocation2 + $0x48] sm:$0xff]
    %v3492 = vld [vmem:[#allocation2 + $0x50] sm:$0xff]
    %v3493 = vld [vmem:[#allocation2 + $0x58] sm:$0xff]
    %v3494 = vld [vmem:[#allocation2 + $0x60] sm:$0xff]
    %v3495 = vld [vmem:[#allocation2 + $0x68] sm:$0xff]
    %v3496 = vld [vmem:[#allocation2 + $0x70] sm:$0xff]
    %v3497 = vld [vmem:[#allocation2 + $0x78] sm:$0xff]
    %v3498 = vld [vmem:[%s46] sm:$0xff]
    %v3499 = vld [vmem:[%s46 + $0x8] sm:$0xff]
    %v3500 = vld [vmem:[%s46 + $0x10] sm:$0xff]
    %v3501 = vld [vmem:[%s46 + $0x18] sm:$0xff]
    %v3502 = vld [vmem:[%s46 + $0x20] sm:$0xff]
    %v3503 = vld [vmem:[%s46 + $0x28] sm:$0xff]
    %v3504 = vld [vmem:[%s46 + $0x30] sm:$0xff]
    %v3505 = vld [vmem:[%s46 + $0x38] sm:$0xff]
    %v3506 = vld [vmem:[%s46 + $0x40] sm:$0xff]
    %v3507 = vld [vmem:[%s46 + $0x48] sm:$0xff]
    %v3508 = vld [vmem:[%s46 + $0x50] sm:$0xff]
    %v3509 = vld [vmem:[%s46 + $0x58] sm:$0xff]
    %v3510 = vld [vmem:[%s46 + $0x60] sm:$0xff]
    %v3511 = vld [vmem:[%s46 + $0x68] sm:$0xff]
    %v3512 = vld [vmem:[%s46 + $0x70] sm:$0xff]
    %v3513 = vld [vmem:[%s46 + $0x78] sm:$0xff]
    %v3514 = vld [vmem:[%s63] sm:$0xff]
    %v3515 = vld [vmem:[%s63 + $0x8] sm:$0xff]
    %v3516 = vld [vmem:[%s63 + $0x10] sm:$0xff]
    %v3517 = vld [vmem:[%s63 + $0x18] sm:$0xff]
    %v3518 = vld [vmem:[%s63 + $0x20] sm:$0xff]
    %v3519 = vld [vmem:[%s63 + $0x28] sm:$0xff]
    %v3520 = vld [vmem:[%s63 + $0x30] sm:$0xff]
    %v3521 = vld [vmem:[%s63 + $0x38] sm:$0xff]
    %v3522 = vld [vmem:[%s63 + $0x40] sm:$0xff]
    %v3523 = vld [vmem:[%s63 + $0x48] sm:$0xff]
    %v3524 = vld [vmem:[%s63 + $0x50] sm:$0xff]
    %v3525 = vld [vmem:[%s63 + $0x58] sm:$0xff]
    %v3526 = vld [vmem:[%s63 + $0x60] sm:$0xff]
    %v3527 = vld [vmem:[%s63 + $0x68] sm:$0xff]
    %v3528 = vld [vmem:[%s63 + $0x70] sm:$0xff]
    %v3529 = vld [vmem:[%s63 + $0x78] sm:$0xff]
    %v3530 = vld [vmem:[%s80] sm:$0xff]
    %v3531 = vld [vmem:[%s80 + $0x8] sm:$0xff]
    %v3532 = vld [vmem:[%s80 + $0x10] sm:$0xff]
    %v3533 = vld [vmem:[%s80 + $0x18] sm:$0xff]
    %v3534 = vld [vmem:[%s80 + $0x20] sm:$0xff]
    %v3535 = vld [vmem:[%s80 + $0x28] sm:$0xff]
    %v3536 = vld [vmem:[%s80 + $0x30] sm:$0xff]
    %v3537 = vld [vmem:[%s80 + $0x38] sm:$0xff]
    %v3538 = vld [vmem:[%s80 + $0x40] sm:$0xff]
    %v3539 = vld [vmem:[%s80 + $0x48] sm:$0xff]
    %v3540 = vld [vmem:[%s80 + $0x50] sm:$0xff]
    %v3541 = vld [vmem:[%s80 + $0x58] sm:$0xff]
    %v3542 = vld [vmem:[%s80 + $0x60] sm:$0xff]
    %v3543 = vld [vmem:[%s80 + $0x68] sm:$0xff]
    %v3544 = vld [vmem:[%s80 + $0x70] sm:$0xff]
    %v3545 = vld [vmem:[%s80 + $0x78] sm:$0xff]
    %s3546 = scalar_lea.vmem %s0, 38
    %v3547 = vld [vmem:[%s3546] ss:$8 sm:$0xf]
    %s3548 = scalar_lea.vmem %s98, 38
    %v3549 = vld [vmem:[%s3548] ss:$8 sm:$0xf]
    %v3551 = vperm.slane %v3547, 0
    %v3552 = vperm.slane %v3547, 1
    %v3553 = vperm.slane %v3547, 2
    %v3554 = vperm.slane %v3547, 3
    %v3559 = vmul.f32 %v3482, %v3551
    %v3560 = vmul.f32 %v3483, %v3552
    %v3561 = vmul.f32 %v3484, %v3553
    %v3562 = vmul.f32 %v3485, %v3554
    %v3563 = vmul.f32 %v3486, %v3551
    %v3564 = vmul.f32 %v3487, %v3552
    %v3565 = vmul.f32 %v3488, %v3553
    %v3566 = vmul.f32 %v3489, %v3554
    %v3567 = vmul.f32 %v3490, %v3551
    %v3568 = vmul.f32 %v3491, %v3552
    %v3569 = vmul.f32 %v3492, %v3553
    %v3570 = vmul.f32 %v3493, %v3554
    %v3571 = vmul.f32 %v3494, %v3551
    %v3572 = vmul.f32 %v3495, %v3552
    %v3573 = vmul.f32 %v3496, %v3553
    %v3574 = vmul.f32 %v3497, %v3554
    %v3576 = vperm.slane %v3549, 0
    %v3577 = vperm.slane %v3549, 1
    %v3578 = vperm.slane %v3549, 2
    %v3579 = vperm.slane %v3549, 3
    %v3584 = vmul.f32 %v3498, %v3576
    %v3585 = vmul.f32 %v3499, %v3577
    %v3586 = vmul.f32 %v3500, %v3578
    %v3587 = vmul.f32 %v3501, %v3579
    %v3588 = vmul.f32 %v3502, %v3576
    %v3589 = vmul.f32 %v3503, %v3577
    %v3590 = vmul.f32 %v3504, %v3578
    %v3591 = vmul.f32 %v3505, %v3579
    %v3592 = vmul.f32 %v3506, %v3576
    %v3593 = vmul.f32 %v3507, %v3577
    %v3594 = vmul.f32 %v3508, %v3578
    %v3595 = vmul.f32 %v3509, %v3579
    %v3596 = vmul.f32 %v3510, %v3576
    %v3597 = vmul.f32 %v3511, %v3577
    %v3598 = vmul.f32 %v3512, %v3578
    %v3599 = vmul.f32 %v3513, %v3579
    %v3600 = vadd.f32 %v3559, %v3584
    %v3601 = vadd.f32 %v3560, %v3585
    %v3602 = vadd.f32 %v3561, %v3586
    %v3603 = vadd.f32 %v3562, %v3587
    %v3604 = vadd.f32 %v3563, %v3588
    %v3605 = vadd.f32 %v3564, %v3589
    %v3606 = vadd.f32 %v3565, %v3590
    %v3607 = vadd.f32 %v3566, %v3591
    %v3608 = vadd.f32 %v3567, %v3592
    %v3609 = vadd.f32 %v3568, %v3593
    %v3610 = vadd.f32 %v3569, %v3594
    %v3611 = vadd.f32 %v3570, %v3595
    %v3612 = vadd.f32 %v3571, %v3596
    %v3613 = vadd.f32 %v3572, %v3597
    %v3614 = vadd.f32 %v3573, %v3598
    %v3615 = vadd.f32 %v3574, %v3599
    %v3616 = vadd.f32 %v3600, %v3514
    %v3617 = vadd.f32 %v3601, %v3515
    %v3618 = vadd.f32 %v3602, %v3516
    %v3619 = vadd.f32 %v3603, %v3517
    %v3620 = vadd.f32 %v3604, %v3518
    %v3621 = vadd.f32 %v3605, %v3519
    %v3622 = vadd.f32 %v3606, %v3520
    %v3623 = vadd.f32 %v3607, %v3521
    %v3624 = vadd.f32 %v3608, %v3522
    %v3625 = vadd.f32 %v3609, %v3523
    %v3626 = vadd.f32 %v3610, %v3524
    %v3627 = vadd.f32 %v3611, %v3525
    %v3628 = vadd.f32 %v3612, %v3526
    %v3629 = vadd.f32 %v3613, %v3527
    %v3630 = vadd.f32 %v3614, %v3528
    %v3631 = vadd.f32 %v3615, %v3529
    %v3632 = vtanh.pop %v3616
    %v3633 = vtanh.pop %v3617
    %v3634 = vtanh.pop %v3618
    %v3635 = vtanh.pop %v3619
    %v3636 = vtanh.pop %v3620
    %v3637 = vtanh.pop %v3621
    %v3638 = vtanh.pop %v3622
    %v3639 = vtanh.pop %v3623
    %v3640 = vtanh.pop %v3624
    %v3641 = vtanh.pop %v3625
    %v3642 = vtanh.pop %v3626
    %v3643 = vtanh.pop %v3627
    %v3644 = vtanh.pop %v3628
    %v3645 = vtanh.pop %v3629
    %v3646 = vtanh.pop %v3630
    %v3647 = vtanh.pop %v3631
    %v3648 = vmul.f32 %v3632, %v3530
    %v3649 = vmul.f32 %v3633, %v3531
    %v3650 = vmul.f32 %v3634, %v3532
    %v3651 = vmul.f32 %v3635, %v3533
    %v3652 = vmul.f32 %v3636, %v3534
    %v3653 = vmul.f32 %v3637, %v3535
    %v3654 = vmul.f32 %v3638, %v3536
    %v3655 = vmul.f32 %v3639, %v3537
    %v3656 = vmul.f32 %v3640, %v3538
    %v3657 = vmul.f32 %v3641, %v3539
    %v3658 = vmul.f32 %v3642, %v3540
    %v3659 = vmul.f32 %v3643, %v3541
    %v3660 = vmul.f32 %v3644, %v3542
    %v3661 = vmul.f32 %v3645, %v3543
    %v3662 = vmul.f32 %v3646, %v3544
    %v3663 = vmul.f32 %v3647, %v3545
    %v3664 = vadd.f32 %v3648, %v3652
    %v3665 = vadd.f32 %v3664, %v3656
    %v3666 = vadd.f32 %v3665, %v3660
    %v3667 = vrot.slane %v3666, 4
    %v3668 = vadd.f32 %v3666, %v3667
    %v3669 = vrot.slane %v3668, 2
    %v3670 = vadd.f32 %v3668, %v3669
    %v3671 = vrot.slane %v3670, 1
    %v3672 = vadd.f32 %v3670, %v3671
    %v3673 = vadd.f32 %v3649, %v3653
    %v3674 = vadd.f32 %v3673, %v3657
    %v3675 = vadd.f32 %v3674, %v3661
    %v3676 = vrot.slane %v3675, 4
    %v3677 = vadd.f32 %v3675, %v3676
    %v3678 = vrot.slane %v3677, 2
    %v3679 = vadd.f32 %v3677, %v3678
    %v3680 = vrot.slane %v3679, 1
    %v3681 = vadd.f32 %v3679, %v3680
    %v3682 = vadd.f32 %v3650, %v3654
    %v3683 = vadd.f32 %v3682, %v3658
    %v3684 = vadd.f32 %v3683, %v3662
    %v3685 = vrot.slane %v3684, 4
    %v3686 = vadd.f32 %v3684, %v3685
    %v3687 = vrot.slane %v3686, 2
    %v3688 = vadd.f32 %v3686, %v3687
    %v3689 = vrot.slane %v3688, 1
    %v3690 = vadd.f32 %v3688, %v3689
    %v3691 = vadd.f32 %v3651, %v3655
    %v3692 = vadd.f32 %v3691, %v3659
    %v3693 = vadd.f32 %v3692, %v3663
    %v3694 = vrot.slane %v3693, 4
    %v3695 = vadd.f32 %v3693, %v3694
    %v3696 = vrot.slane %v3695, 2
    %v3697 = vadd.f32 %v3695, %v3696
    %v3698 = vrot.slane %v3697, 1
    %v3699 = vadd.f32 %v3697, %v3698
    %v3700 = vld [vmem:[%s2] sm:$0xf]
    %v3702 = vperm.slane %v3700, 0
    %v3703 = vperm.slane %v3700, 1
    %v3704 = vperm.slane %v3700, 2
    %v3705 = vperm.slane %v3700, 3
    %v3710 = vadd.f32 %v3672, %v3702
    %v3711 = vadd.f32 %v3681, %v3703
    %v3712 = vadd.f32 %v3690, %v3704
    %v3713 = vadd.f32 %v3699, %v3705
    %v3718 = vrot.slane %v3711, 7
    %v3719 = vrot.slane %v3712, 6
    %v3720 = vrot.slane %v3713, 5
    %v3721 = vsel %vm271, %v3710, %v3718
    %v3722 = vsel %vm273, %v3719, %v3720
    %v3723 = vsel %vm275, %v3721, %v3722
    %s3725 = scalar_lea.vmem %s3, 38
    %3726 = vst.msk [vmem:[%s3725] ss:$8 sm:$0xf] %vm281, %v3723
    %3727 = vst.msk [vmem:[%s3725] ss:$8 sm:$0x0] %vm281, %v3723
    %v3728 = vld [vmem:[#allocation2] sm:$0xff]
    %v3729 = vld [vmem:[#allocation2 + $0x8] sm:$0xff]
    %v3730 = vld [vmem:[#allocation2 + $0x10] sm:$0xff]
    %v3731 = vld [vmem:[#allocation2 + $0x18] sm:$0xff]
    %v3732 = vld [vmem:[#allocation2 + $0x20] sm:$0xff]
    %v3733 = vld [vmem:[#allocation2 + $0x28] sm:$0xff]
    %v3734 = vld [vmem:[#allocation2 + $0x30] sm:$0xff]
    %v3735 = vld [vmem:[#allocation2 + $0x38] sm:$0xff]
    %v3736 = vld [vmem:[#allocation2 + $0x40] sm:$0xff]
    %v3737 = vld [vmem:[#allocation2 + $0x48] sm:$0xff]
    %v3738 = vld [vmem:[#allocation2 + $0x50] sm:$0xff]
    %v3739 = vld [vmem:[#allocation2 + $0x58] sm:$0xff]
    %v3740 = vld [vmem:[#allocation2 + $0x60] sm:$0xff]
    %v3741 = vld [vmem:[#allocation2 + $0x68] sm:$0xff]
    %v3742 = vld [vmem:[#allocation2 + $0x70] sm:$0xff]
    %v3743 = vld [vmem:[#allocation2 + $0x78] sm:$0xff]
    %v3744 = vld [vmem:[%s46] sm:$0xff]
    %v3745 = vld [vmem:[%s46 + $0x8] sm:$0xff]
    %v3746 = vld [vmem:[%s46 + $0x10] sm:$0xff]
    %v3747 = vld [vmem:[%s46 + $0x18] sm:$0xff]
    %v3748 = vld [vmem:[%s46 + $0x20] sm:$0xff]
    %v3749 = vld [vmem:[%s46 + $0x28] sm:$0xff]
    %v3750 = vld [vmem:[%s46 + $0x30] sm:$0xff]
    %v3751 = vld [vmem:[%s46 + $0x38] sm:$0xff]
    %v3752 = vld [vmem:[%s46 + $0x40] sm:$0xff]
    %v3753 = vld [vmem:[%s46 + $0x48] sm:$0xff]
    %v3754 = vld [vmem:[%s46 + $0x50] sm:$0xff]
    %v3755 = vld [vmem:[%s46 + $0x58] sm:$0xff]
    %v3756 = vld [vmem:[%s46 + $0x60] sm:$0xff]
    %v3757 = vld [vmem:[%s46 + $0x68] sm:$0xff]
    %v3758 = vld [vmem:[%s46 + $0x70] sm:$0xff]
    %v3759 = vld [vmem:[%s46 + $0x78] sm:$0xff]
    %v3760 = vld [vmem:[%s63] sm:$0xff]
    %v3761 = vld [vmem:[%s63 + $0x8] sm:$0xff]
    %v3762 = vld [vmem:[%s63 + $0x10] sm:$0xff]
    %v3763 = vld [vmem:[%s63 + $0x18] sm:$0xff]
    %v3764 = vld [vmem:[%s63 + $0x20] sm:$0xff]
    %v3765 = vld [vmem:[%s63 + $0x28] sm:$0xff]
    %v3766 = vld [vmem:[%s63 + $0x30] sm:$0xff]
    %v3767 = vld [vmem:[%s63 + $0x38] sm:$0xff]
    %v3768 = vld [vmem:[%s63 + $0x40] sm:$0xff]
    %v3769 = vld [vmem:[%s63 + $0x48] sm:$0xff]
    %v3770 = vld [vmem:[%s63 + $0x50] sm:$0xff]
    %v3771 = vld [vmem:[%s63 + $0x58] sm:$0xff]
    %v3772 = vld [vmem:[%s63 + $0x60] sm:$0xff]
    %v3773 = vld [vmem:[%s63 + $0x68] sm:$0xff]
    %v3774 = vld [vmem:[%s63 + $0x70] sm:$0xff]
    %v3775 = vld [vmem:[%s63 + $0x78] sm:$0xff]
    %v3776 = vld [vmem:[%s80] sm:$0xff]
    %v3777 = vld [vmem:[%s80 + $0x8] sm:$0xff]
    %v3778 = vld [vmem:[%s80 + $0x10] sm:$0xff]
    %v3779 = vld [vmem:[%s80 + $0x18] sm:$0xff]
    %v3780 = vld [vmem:[%s80 + $0x20] sm:$0xff]
    %v3781 = vld [vmem:[%s80 + $0x28] sm:$0xff]
    %v3782 = vld [vmem:[%s80 + $0x30] sm:$0xff]
    %v3783 = vld [vmem:[%s80 + $0x38] sm:$0xff]
    %v3784 = vld [vmem:[%s80 + $0x40] sm:$0xff]
    %v3785 = vld [vmem:[%s80 + $0x48] sm:$0xff]
    %v3786 = vld [vmem:[%s80 + $0x50] sm:$0xff]
    %v3787 = vld [vmem:[%s80 + $0x58] sm:$0xff]
    %v3788 = vld [vmem:[%s80 + $0x60] sm:$0xff]
    %v3789 = vld [vmem:[%s80 + $0x68] sm:$0xff]
    %v3790 = vld [vmem:[%s80 + $0x70] sm:$0xff]
    %v3791 = vld [vmem:[%s80 + $0x78] sm:$0xff]
    %s3792 = scalar_lea.vmem %s0, 39
    %v3793 = vld [vmem:[%s3792] ss:$8 sm:$0xf]
    %s3794 = scalar_lea.vmem %s98, 39
    %v3795 = vld [vmem:[%s3794] ss:$8 sm:$0xf]
    %v3797 = vperm.slane %v3793, 0
    %v3798 = vperm.slane %v3793, 1
    %v3799 = vperm.slane %v3793, 2
    %v3800 = vperm.slane %v3793, 3
    %v3805 = vmul.f32 %v3728, %v3797
    %v3806 = vmul.f32 %v3729, %v3798
    %v3807 = vmul.f32 %v3730, %v3799
    %v3808 = vmul.f32 %v3731, %v3800
    %v3809 = vmul.f32 %v3732, %v3797
    %v3810 = vmul.f32 %v3733, %v3798
    %v3811 = vmul.f32 %v3734, %v3799
    %v3812 = vmul.f32 %v3735, %v3800
    %v3813 = vmul.f32 %v3736, %v3797
    %v3814 = vmul.f32 %v3737, %v3798
    %v3815 = vmul.f32 %v3738, %v3799
    %v3816 = vmul.f32 %v3739, %v3800
    %v3817 = vmul.f32 %v3740, %v3797
    %v3818 = vmul.f32 %v3741, %v3798
    %v3819 = vmul.f32 %v3742, %v3799
    %v3820 = vmul.f32 %v3743, %v3800
    %v3822 = vperm.slane %v3795, 0
    %v3823 = vperm.slane %v3795, 1
    %v3824 = vperm.slane %v3795, 2
    %v3825 = vperm.slane %v3795, 3
    %v3830 = vmul.f32 %v3744, %v3822
    %v3831 = vmul.f32 %v3745, %v3823
    %v3832 = vmul.f32 %v3746, %v3824
    %v3833 = vmul.f32 %v3747, %v3825
    %v3834 = vmul.f32 %v3748, %v3822
    %v3835 = vmul.f32 %v3749, %v3823
    %v3836 = vmul.f32 %v3750, %v3824
    %v3837 = vmul.f32 %v3751, %v3825
    %v3838 = vmul.f32 %v3752, %v3822
    %v3839 = vmul.f32 %v3753, %v3823
    %v3840 = vmul.f32 %v3754, %v3824
    %v3841 = vmul.f32 %v3755, %v3825
    %v3842 = vmul.f32 %v3756, %v3822
    %v3843 = vmul.f32 %v3757, %v3823
    %v3844 = vmul.f32 %v3758, %v3824
    %v3845 = vmul.f32 %v3759, %v3825
    %v3846 = vadd.f32 %v3805, %v3830
    %v3847 = vadd.f32 %v3806, %v3831
    %v3848 = vadd.f32 %v3807, %v3832
    %v3849 = vadd.f32 %v3808, %v3833
    %v3850 = vadd.f32 %v3809, %v3834
    %v3851 = vadd.f32 %v3810, %v3835
    %v3852 = vadd.f32 %v3811, %v3836
    %v3853 = vadd.f32 %v3812, %v3837
    %v3854 = vadd.f32 %v3813, %v3838
    %v3855 = vadd.f32 %v3814, %v3839
    %v3856 = vadd.f32 %v3815, %v3840
    %v3857 = vadd.f32 %v3816, %v3841
    %v3858 = vadd.f32 %v3817, %v3842
    %v3859 = vadd.f32 %v3818, %v3843
    %v3860 = vadd.f32 %v3819, %v3844
    %v3861 = vadd.f32 %v3820, %v3845
    %v3862 = vadd.f32 %v3846, %v3760
    %v3863 = vadd.f32 %v3847, %v3761
    %v3864 = vadd.f32 %v3848, %v3762
    %v3865 = vadd.f32 %v3849, %v3763
    %v3866 = vadd.f32 %v3850, %v3764
    %v3867 = vadd.f32 %v3851, %v3765
    %v3868 = vadd.f32 %v3852, %v3766
    %v3869 = vadd.f32 %v3853, %v3767
    %v3870 = vadd.f32 %v3854, %v3768
    %v3871 = vadd.f32 %v3855, %v3769
    %v3872 = vadd.f32 %v3856, %v3770
    %v3873 = vadd.f32 %v3857, %v3771
    %v3874 = vadd.f32 %v3858, %v3772
    %v3875 = vadd.f32 %v3859, %v3773
    %v3876 = vadd.f32 %v3860, %v3774
    %v3877 = vadd.f32 %v3861, %v3775
    %v3878 = vtanh.pop %v3862
    %v3879 = vtanh.pop %v3863
    %v3880 = vtanh.pop %v3864
    %v3881 = vtanh.pop %v3865
    %v3882 = vtanh.pop %v3866
    %v3883 = vtanh.pop %v3867
    %v3884 = vtanh.pop %v3868
    %v3885 = vtanh.pop %v3869
    %v3886 = vtanh.pop %v3870
    %v3887 = vtanh.pop %v3871
    %v3888 = vtanh.pop %v3872
    %v3889 = vtanh.pop %v3873
    %v3890 = vtanh.pop %v3874
    %v3891 = vtanh.pop %v3875
    %v3892 = vtanh.pop %v3876
    %v3893 = vtanh.pop %v3877
    %v3894 = vmul.f32 %v3878, %v3776
    %v3895 = vmul.f32 %v3879, %v3777
    %v3896 = vmul.f32 %v3880, %v3778
    %v3897 = vmul.f32 %v3881, %v3779
    %v3898 = vmul.f32 %v3882, %v3780
    %v3899 = vmul.f32 %v3883, %v3781
    %v3900 = vmul.f32 %v3884, %v3782
    %v3901 = vmul.f32 %v3885, %v3783
    %v3902 = vmul.f32 %v3886, %v3784
    %v3903 = vmul.f32 %v3887, %v3785
    %v3904 = vmul.f32 %v3888, %v3786
    %v3905 = vmul.f32 %v3889, %v3787
    %v3906 = vmul.f32 %v3890, %v3788
    %v3907 = vmul.f32 %v3891, %v3789
    %v3908 = vmul.f32 %v3892, %v3790
    %v3909 = vmul.f32 %v3893, %v3791
    %v3910 = vadd.f32 %v3894, %v3898
    %v3911 = vadd.f32 %v3910, %v3902
    %v3912 = vadd.f32 %v3911, %v3906
    %v3913 = vrot.slane %v3912, 4
    %v3914 = vadd.f32 %v3912, %v3913
    %v3915 = vrot.slane %v3914, 2
    %v3916 = vadd.f32 %v3914, %v3915
    %v3917 = vrot.slane %v3916, 1
    %v3918 = vadd.f32 %v3916, %v3917
    %v3919 = vadd.f32 %v3895, %v3899
    %v3920 = vadd.f32 %v3919, %v3903
    %v3921 = vadd.f32 %v3920, %v3907
    %v3922 = vrot.slane %v3921, 4
    %v3923 = vadd.f32 %v3921, %v3922
    %v3924 = vrot.slane %v3923, 2
    %v3925 = vadd.f32 %v3923, %v3924
    %v3926 = vrot.slane %v3925, 1
    %v3927 = vadd.f32 %v3925, %v3926
    %v3928 = vadd.f32 %v3896, %v3900
    %v3929 = vadd.f32 %v3928, %v3904
    %v3930 = vadd.f32 %v3929, %v3908
    %v3931 = vrot.slane %v3930, 4
    %v3932 = vadd.f32 %v3930, %v3931
    %v3933 = vrot.slane %v3932, 2
    %v3934 = vadd.f32 %v3932, %v3933
    %v3935 = vrot.slane %v3934, 1
    %v3936 = vadd.f32 %v3934, %v3935
    %v3937 = vadd.f32 %v3897, %v3901
    %v3938 = vadd.f32 %v3937, %v3905
    %v3939 = vadd.f32 %v3938, %v3909
    %v3940 = vrot.slane %v3939, 4
    %v3941 = vadd.f32 %v3939, %v3940
    %v3942 = vrot.slane %v3941, 2
    %v3943 = vadd.f32 %v3941, %v3942
    %v3944 = vrot.slane %v3943, 1
    %v3945 = vadd.f32 %v3943, %v3944
    %v3946 = vld [vmem:[%s2] sm:$0xf]
    %v3948 = vperm.slane %v3946, 0
    %v3949 = vperm.slane %v3946, 1
    %v3950 = vperm.slane %v3946, 2
    %v3951 = vperm.slane %v3946, 3
    %v3956 = vadd.f32 %v3918, %v3948
    %v3957 = vadd.f32 %v3927, %v3949
    %v3958 = vadd.f32 %v3936, %v3950
    %v3959 = vadd.f32 %v3945, %v3951
    %v3964 = vrot.slane %v3957, 7
    %v3965 = vrot.slane %v3958, 6
    %v3966 = vrot.slane %v3959, 5
    %v3967 = vsel %vm271, %v3956, %v3964
    %v3968 = vsel %vm273, %v3965, %v3966
    %v3969 = vsel %vm275, %v3967, %v3968
    %s3971 = scalar_lea.vmem %s3, 39
    %3972 = vst.msk [vmem:[%s3971] ss:$8 sm:$0xf] %vm281, %v3969
    %3973 = vst.msk [vmem:[%s3971] ss:$8 sm:$0x0] %vm281, %v3969
    // Predicated region
    $region18: #{pressure_head_forward_t.1} parent=1 // pred_check
      _
    $region19: #{pressure_head_forward_t.1} parent=1 // pred_check_branch
      %3975 = sbr.rel (0) target = $region21
    $region20: #{pressure_head_forward_t.1} parent=1 // pred_region
      _
    $region21: #{pressure_head_forward_t.1} parent=1 // pred_fallthru
      _
    // Predicated region
    $region22: #{pressure_head_forward_t.1} parent=1 // pred_check
      _
    $region23: #{pressure_head_forward_t.1} parent=1 // pred_check_branch
      %3977 = sbr.rel (0) target = $region25
    $region24: #{pressure_head_forward_t.1} parent=1 // pred_region
      _
    $region25: #{pressure_head_forward_t.1} parent=1 // pred_fallthru
      _
    %3978 = vsyncpa [#allocation3], 1

</llo_original>
